<compile_context>
chip_gen: v5e
topology: v5e:2x2
jax: 0.10.0
libtpu: 0.0.40
codegen_flags: <defaults>
</compile_context>

<pallas_src>
import math
from functools import partial

import jax
import jax.numpy as jnp
from jax.experimental import pallas as pl
from jax.experimental.pallas import tpu as pltpu


# ----------------------------------------------------------------------------
# In-kernel helpers (pure jnp, traced inside the Pallas body)
# ----------------------------------------------------------------------------
def _layer_norm(x, g, b, eps=1e-5):
    mu = jnp.mean(x, axis=-1, keepdims=True)
    xc = x - mu
    var = jnp.mean(xc * xc, axis=-1, keepdims=True)
    return xc * jax.lax.rsqrt(var + eps) * g + b


def _gelu_tanh(x):
    # tanh-approx GELU: heavy op goes to the EUP slot instead of a long VALU
    # polynomial.  Matches torch.nn.GELU() to ~1e-3 (not bit-exact erf-GELU).
    c = math.sqrt(2.0 / math.pi)
    return 0.5 * x * (1.0 + jnp.tanh(c * (x + 0.044715 * x * x * x)))


# ----------------------------------------------------------------------------
# Fused forward kernel: one grid step == one BLOCK of batch elements.
# ----------------------------------------------------------------------------
def vit_fused_kernel(patch_ref, pw_ref, pb_ref, pos_ref, pool_ref,
                     wqkv_ref, bqkv_ref, wo_ref, bo_ref,
                     ln1_g_ref, ln1_b_ref, w1_ref, b1_ref, w2_ref, b2_ref,
                     ln2_g_ref, ln2_b_ref,
                     lstm_w_ih_ref, lstm_w_hh_ref, lstm_b_ref,
                     out_ref, hn_ref, cn_ref,
                     *, num_layers, num_heads, Hp, Wp, hidden_size, block_b):
    Bb = block_b
    N = Hp * Wp
    D = pw_ref.shape[-1]
    H = num_heads
    dh = D // H
    scale = 1.0 / math.sqrt(dh)
    Hc = hidden_size
    T = Wp
    M = Bb * N                                    # folded (batch, token) rows

    # ---------------- patch embedding (Conv2d as GEMM) + positional ----------
    patch2 = patch_ref[...].reshape(M, patch_ref.shape[-1])          # (M, C*p*p)
    tokens = (jnp.dot(patch2, pw_ref[...], preferred_element_type=jnp.float32)
              + pb_ref[...] + pos_ref[...])                          # (M, D)

    # ---------------- transformer blocks (static unroll over layers) ---------
    for l in range(num_layers):
        x = tokens                                                   # (M, D)

        # Fused QKV projection: one lane-dense (M,D)x(D,3D) matmul.
        qkv = jnp.dot(x, wqkv_ref[l],
                      preferred_element_type=jnp.float32) + bqkv_ref[l]  # (M, 3D)

        # Per-head attention, batched over the folded batch dim (leading Bb).
        ctx_heads = []
        for h in range(H):
            q_h = qkv[:, h * dh:(h + 1) * dh].reshape(Bb, N, dh)
            k_h = qkv[:, D + h * dh:D + (h + 1) * dh].reshape(Bb, N, dh)
            v_h = qkv[:, 2 * D + h * dh:2 * D + (h + 1) * dh].reshape(Bb, N, dh)
            s = jnp.einsum('bqe,bke->bqk', q_h * scale, k_h,
                           preferred_element_type=jnp.float32)       # (Bb, N, N)
            s = s - jnp.max(s, axis=-1, keepdims=True)
            p = jnp.exp(s)
            p = p * pl.reciprocal(jnp.sum(p, axis=-1, keepdims=True), approx=True)
            ctx_heads.append(jnp.einsum('bqk,bke->bqe', p, v_h,
                                        preferred_element_type=jnp.float32))

        # Lane-concatenate heads once, then ONE (M,D)x(D,D) output projection.
        ctx = jnp.concatenate(ctx_heads, axis=-1).reshape(M, D)
        attn = jnp.dot(ctx, wo_ref[l],
                       preferred_element_type=jnp.float32) + bo_ref[l]

        # Residual + LN1
        x = _layer_norm(x + attn, ln1_g_ref[l], ln1_b_ref[l])

        # Feed-forward (lane-dense (M,D)x(D,4D) / (M,4D)x(4D,D))
        h1 = jnp.dot(x, w1_ref[l], preferred_element_type=jnp.float32) + b1_ref[l]
        h1 = _gelu_tanh(h1)
        ff = jnp.dot(h1, w2_ref[l], preferred_element_type=jnp.float32) + b2_ref[l]

        # Residual + LN2
        tokens = _layer_norm(x + ff, ln2_g_ref[l], ln2_b_ref[l])

    # ---------------- mean over Hp (== x.view(B,Hp,Wp,D).mean(dim=1)) --------
    # Constant block-diagonal pooling matrix (Bb*Wp, Bb*N): single MXU push.
    pooled2 = jnp.dot(pool_ref[...], tokens,
                      preferred_element_type=jnp.float32)            # (Bb*Wp, D)
    layer_in = pooled2.reshape(Bb, T, D)                             # (Bb, T, D)

    # ---------------- 2-layer bidirectional LSTM -----------------------------
    # Both directions + the whole batch block run in ONE recurrence:
    #   h/c      : (Bb, 2Hc)   = [h_fwd | h_bwd]
    #   w_hh_blk : (2Hc, 8Hc)  block-diagonal over directions
    #   gate cols: [i_f,i_b, f_f,f_b, g_f,g_b, o_f,o_b]  (each Hc wide)
    # Backward direction consumes the time-reversed input, realigned at the end.
    hn_rows, cn_rows = [], []
    for l in range(2):
        w_ih = lstm_w_ih_ref[l]                                      # (2D, 8Hc)
        w_hh = lstm_w_hh_ref[l]                                      # (2Hc, 8Hc)
        bias = lstm_b_ref[l]                                         # (1, 8Hc)

        # time-reversed copy of the layer input for the backward direction
        rev = jnp.concatenate(
            [layer_in[:, T - 1 - t:T - t, :] for t in range(T)], axis=1)
        xcomb = jnp.concatenate([layer_in, rev], axis=-1)            # (Bb, T, 2D)

        # input-to-hidden for BOTH directions / ALL timesteps: one matmul
        gx = (jnp.dot(xcomb.reshape(Bb * T, 2 * D), w_ih,
                      preferred_element_type=jnp.float32) + bias
              ).reshape(Bb, T, 8 * Hc)

        h = jnp.zeros((Bb, 2 * Hc), jnp.float32)
        c = jnp.zeros((Bb, 2 * Hc), jnp.float32)
        outs = []
        for s in range(T):                                           # serial tail
            g = gx[:, s, :] + jnp.dot(h, w_hh,
                                      preferred_element_type=jnp.float32)
            i_g = jax.nn.sigmoid(g[:, 0 * Hc:2 * Hc])                # (Bb, 2Hc)
            f_g = jax.nn.sigmoid(g[:, 2 * Hc:4 * Hc])
            g_g = jnp.tanh(g[:, 4 * Hc:6 * Hc])
            o_g = jax.nn.sigmoid(g[:, 6 * Hc:8 * Hc])
            c = f_g * c + i_g * g_g
            h = o_g * jnp.tanh(c)
            outs.append(h)

        # realign backward half to original time order for the next layer
        layer_in = jnp.stack(
            [jnp.concatenate([outs[t][:, :Hc], outs[T - 1 - t][:, Hc:]], axis=-1)
             for t in range(T)], axis=1)                             # (Bb, T, 2Hc)

        # final states: fwd part is t=T-1, bwd part is (orig) t=0 -> both in h/c
        hn_rows += [h[:, :Hc], h[:, Hc:]]
        cn_rows += [c[:, :Hc], c[:, Hc:]]

    out_ref[...] = layer_in                                          # (Bb, T, 2Hc)
    hn_ref[...] = jnp.stack(hn_rows, axis=1)                         # (Bb, 4, Hc)
    cn_ref[...] = jnp.stack(cn_rows, axis=1)                         # (Bb, 4, Hc)


# ----------------------------------------------------------------------------
# Wrapper: patch extraction in XLA glue, everything else in the fused kernel.
# ----------------------------------------------------------------------------
def vit_encoder_forward(params, x, *, input_size, patch_size, hidden_dim,
                        num_heads, num_layers, block_b=None):
    B = x.shape[0]
    H_img, W_img = input_size
    p = patch_size
    Hp, Wp = H_img // p, W_img // p
    N = Hp * Wp
    D = hidden_dim
    Hc = D // 2
    CPP = 3 * p * p

    # Batch folding: block_b batch items per grid step.  Default keeps >=2 grid
    # steps so v7x's two TensorCores both get work; on single-TC v5e/v6e pass
    # block_b=B to fold the whole batch into one step.
    if block_b is None:
        block_b = max(1, B // 2)
    assert B % block_b == 0, "batch must be divisible by block_b"
    grid = (B // block_b,)

    # Conv2d(kernel==stride==p) as a patch GEMM: rearrange NCHW into
    # non-overlapping patch rows (B, N, C*p*p); the GEMM runs in the kernel.
    xp = (x.reshape(B, 3, Hp, p, Wp, p)
            .transpose(0, 2, 4, 1, 3, 5)
            .reshape(B, N, CPP))

    # Positional embedding pre-tiled over the batch block (zero in-kernel bcast).
    pos_tiled = jnp.tile(params["pos"], (block_b, 1))                # (Bb*N, D)

    # Block-diagonal pooling matrix: row r=(b,wp) averages tokens (b,hp,wp) over hp.
    r = jnp.arange(block_b * Wp)[:, None]
    c = jnp.arange(block_b * N)[None, :]
    pool_mat = (((r // Wp) == (c // N)) &
                ((r % Wp) == ((c % N) % Wp))).astype(jnp.float32) / Hp

    kern = partial(vit_fused_kernel, num_layers=num_layers, num_heads=num_heads,
                   Hp=Hp, Wp=Wp, hidden_size=Hc, block_b=block_b)

    def full(a):
        # whole-array block, constant across the grid -> DMA'd once
        return pl.BlockSpec(a.shape, lambda g, nd=a.ndim: (0,) * nd)

    weight_args = (params["patch_w"], params["patch_b"], pos_tiled, pool_mat,
                   params["wqkv"], params["bqkv"], params["wo"], params["bo"],
                   params["ln1_g"], params["ln1_b"],
                   params["w1"], params["b1"], params["w2"], params["b2"],
                   params["ln2_g"], params["ln2_b"],
                   params["lstm_w_ih"], params["lstm_w_hh"], params["lstm_b"])

    out, h_n, c_n = pl.pallas_call(
        kern,
        grid=grid,
        in_specs=[pl.BlockSpec((block_b, N, CPP), lambda g: (g, 0, 0))]
                 + [full(w) for w in weight_args],
        out_specs=(
            pl.BlockSpec((block_b, Wp, 2 * Hc), lambda g: (g, 0, 0)),
            pl.BlockSpec((block_b, 4, Hc), lambda g: (g, 0, 0)),
            pl.BlockSpec((block_b, 4, Hc), lambda g: (g, 0, 0)),
        ),
        out_shape=(
            jax.ShapeDtypeStruct((B, Wp, 2 * Hc), jnp.float32),
            jax.ShapeDtypeStruct((B, 4, Hc), jnp.float32),
            jax.ShapeDtypeStruct((B, 4, Hc), jnp.float32),
        ),
        compiler_params=pltpu.CompilerParams(dimension_semantics=("parallel",)),
    )(xp, *weight_args)

    # PyTorch returns h_n / c_n as (num_layers*num_dirs, B, Hc).
    return out, (jnp.transpose(h_n, (1, 0, 2)), jnp.transpose(c_n, (1, 0, 2)))


# ----------------------------------------------------------------------------
# Parameter init: layouts pre-transposed / pre-fused (QKV concat, LSTM
# direction-block-diagonal with interleaved gate columns) so the forward does
# zero per-call weight reshaping.
# ----------------------------------------------------------------------------
def init_params(key, input_size, patch_size, hidden_dim, num_heads, num_layers):
    H_img, W_img = input_size
    N = (H_img * W_img) // (patch_size ** 2)
    D = hidden_dim
    Hc = D // 2
    L = num_layers
    keys = iter(jax.random.split(key, 256))

    def nrm(shape, scale=0.02):
        return scale * jax.random.normal(next(keys), shape, jnp.float32)

    # LSTM: both layers have input dim D (layer1 input = 2*Hc == D).
    # Build per layer:
    #   w_ih_blk (2D, 8Hc): rows [fwd input | time-reversed input],
    #   w_hh_blk (2Hc, 8Hc): block-diag over directions,
    #   columns per gate g in (i,f,g,o): [fwd chunk | bwd chunk] (each Hc wide).
    def lstm_layer():
        w_ih_f, w_ih_b = nrm((D, 4 * Hc)), nrm((D, 4 * Hc))
        w_hh_f, w_hh_b = nrm((Hc, 4 * Hc)), nrm((Hc, 4 * Hc))
        b_f = jnp.zeros((4 * Hc,), jnp.float32)   # b_ih + b_hh folded
        b_b = jnp.zeros((4 * Hc,), jnp.float32)
        zi = jnp.zeros((D, Hc), jnp.float32)
        zh = jnp.zeros((Hc, Hc), jnp.float32)
        ih_cols, hh_cols, b_cols = [], [], []
        for g in range(4):
            sl = slice(g * Hc, (g + 1) * Hc)
            ih_cols.append(jnp.concatenate([
                jnp.concatenate([w_ih_f[:, sl], zi], axis=1),
                jnp.concatenate([zi, w_ih_b[:, sl]], axis=1)], axis=0))
            hh_cols.append(jnp.concatenate([
                jnp.concatenate([w_hh_f[:, sl], zh], axis=1),
                jnp.concatenate([zh, w_hh_b[:, sl]], axis=1)], axis=0))
            b_cols.append(jnp.concatenate([b_f[sl], b_b[sl]]))
        return (jnp.concatenate(ih_cols, axis=1),        # (2D, 8Hc)
                jnp.concatenate(hh_cols, axis=1),        # (2Hc, 8Hc)
                jnp.concatenate(b_cols)[None, :])        # (1, 8Hc)

    lstm = [lstm_layer() for _ in range(2)]

    params = {
        # Conv2d(3, D, kernel=p, stride=p) weight flattened to (C*p*p, D)
        "patch_w": nrm((3 * patch_size * patch_size, D)),
        "patch_b": jnp.zeros((1, D), jnp.float32),
        # nn.Parameter(torch.randn(1, N, D)) stored as (N, D)
        "pos": nrm((N, D), scale=1.0),
        # Attention: fused QKV (columns [Q | K | V], per-head sub-slices of dh),
        # output projection stored transposed.
        "wqkv": nrm((L, D, 3 * D)),
        "bqkv": jnp.zeros((L, 1, 3 * D), jnp.float32),
        "wo": nrm((L, D, D)),
        "bo": jnp.zeros((L, 1, D), jnp.float32),
        "ln1_g": jnp.ones((L, 1, D), jnp.float32),
        "ln1_b": jnp.zeros((L, 1, D), jnp.float32),
        "w1": nrm((L, D, 4 * D)), "b1": jnp.zeros((L, 1, 4 * D), jnp.float32),
        "w2": nrm((L, 4 * D, D)), "b2": jnp.zeros((L, 1, D), jnp.float32),
        "ln2_g": jnp.ones((L, 1, D), jnp.float32),
        "ln2_b": jnp.zeros((L, 1, D), jnp.float32),
        # LSTM direction-batched weights (2 layers).
        "lstm_w_ih": jnp.stack([t[0] for t in lstm]),     # (2, 2D, 8Hc)
        "lstm_w_hh": jnp.stack([t[1] for t in lstm]),     # (2, 2Hc, 8Hc)
        "lstm_b": jnp.stack([t[2] for t in lstm]),        # (2, 1, 8Hc)
    }
    return params


if __name__ == "__main__":
    input_size = (16, 16)
    patch_size = 4
    hidden_dim = 32
    num_heads = 4
    num_layers = 2
    batch = 4            # grid=(2,) with 2 batch items folded per grid step

    key = jax.random.PRNGKey(0)
    k_param, k_x = jax.random.split(key)
    params = init_params(k_param, input_size, patch_size, hidden_dim,
                         num_heads, num_layers)
    x = jax.random.normal(k_x, (batch, 3, input_size[0], input_size[1]),
                          jnp.float32)

    fwd = jax.jit(partial(vit_encoder_forward, input_size=input_size,
                          patch_size=patch_size, hidden_dim=hidden_dim,
                          num_heads=num_heads, num_layers=num_layers))
    out, (h_n, c_n) = fwd(params, x)

    jax.block_until_ready((out, h_n, c_n))
    assert out.shape == (batch, input_size[1] // patch_size, hidden_dim)
    assert h_n.shape == (4, batch, hidden_dim // 2)
    assert c_n.shape == (4, batch, hidden_dim // 2)
    print("KERNEL_OK")
</pallas_src>

<mosaic_0001>
module attributes {stable_mosaic.version = 11 : i64} {
  func.func @vit_fused_kernel(%arg0: i32, %arg1: memref<2x16x48xf32, #tpu.memory_space<vmem>>, %arg2: memref<48x32xf32, #tpu.memory_space<vmem>>, %arg3: memref<1x32xf32, #tpu.memory_space<vmem>>, %arg4: memref<32x32xf32, #tpu.memory_space<vmem>>, %arg5: memref<8x32xf32, #tpu.memory_space<vmem>>, %arg6: memref<2x32x96xf32, #tpu.memory_space<vmem>>, %arg7: memref<2x1x96xf32, #tpu.memory_space<vmem>>, %arg8: memref<2x32x32xf32, #tpu.memory_space<vmem>>, %arg9: memref<2x1x32xf32, #tpu.memory_space<vmem>>, %arg10: memref<2x1x32xf32, #tpu.memory_space<vmem>>, %arg11: memref<2x1x32xf32, #tpu.memory_space<vmem>>, %arg12: memref<2x32x128xf32, #tpu.memory_space<vmem>>, %arg13: memref<2x1x128xf32, #tpu.memory_space<vmem>>, %arg14: memref<2x128x32xf32, #tpu.memory_space<vmem>>, %arg15: memref<2x1x32xf32, #tpu.memory_space<vmem>>, %arg16: memref<2x1x32xf32, #tpu.memory_space<vmem>>, %arg17: memref<2x1x32xf32, #tpu.memory_space<vmem>>, %arg18: memref<2x64x128xf32, #tpu.memory_space<vmem>>, %arg19: memref<2x32x128xf32, #tpu.memory_space<vmem>>, %arg20: memref<2x1x128xf32, #tpu.memory_space<vmem>>, %arg21: memref<2x4x32xf32, #tpu.memory_space<vmem>>, %arg22: memref<2x4x16xf32, #tpu.memory_space<vmem>>, %arg23: memref<2x4x16xf32, #tpu.memory_space<vmem>>) attributes {dimension_semantics = [#tpu.dimension_semantics<parallel>], iteration_bounds = array<i64: 2>, scalar_prefetch = 0 : i64, scratch_operands = 0 : i64, tpu.core_type = #tpu.core_type<tc>, window_params = [{transform_indices = @transform_0, window_bounds = array<i64: 2, 16, 48>}, {pipeline_mode = #tpu.pipeline_mode<synchronous>, transform_indices = @transform_1, window_bounds = array<i64: 48, 32>}, {pipeline_mode = #tpu.pipeline_mode<synchronous>, transform_indices = @transform_2, window_bounds = array<i64: 1, 32>}, {pipeline_mode = #tpu.pipeline_mode<synchronous>, transform_indices = @transform_3, window_bounds = array<i64: 32, 32>}, {pipeline_mode = #tpu.pipeline_mode<synchronous>, transform_indices = @transform_4, window_bounds = array<i64: 8, 32>}, {pipeline_mode = #tpu.pipeline_mode<synchronous>, transform_indices = @transform_5, window_bounds = array<i64: 2, 32, 96>}, {pipeline_mode = #tpu.pipeline_mode<synchronous>, transform_indices = @transform_6, window_bounds = array<i64: 2, 1, 96>}, {pipeline_mode = #tpu.pipeline_mode<synchronous>, transform_indices = @transform_7, window_bounds = array<i64: 2, 32, 32>}, {pipeline_mode = #tpu.pipeline_mode<synchronous>, transform_indices = @transform_8, window_bounds = array<i64: 2, 1, 32>}, {pipeline_mode = #tpu.pipeline_mode<synchronous>, transform_indices = @transform_9, window_bounds = array<i64: 2, 1, 32>}, {pipeline_mode = #tpu.pipeline_mode<synchronous>, transform_indices = @transform_10, window_bounds = array<i64: 2, 1, 32>}, {pipeline_mode = #tpu.pipeline_mode<synchronous>, transform_indices = @transform_11, window_bounds = array<i64: 2, 32, 128>}, {pipeline_mode = #tpu.pipeline_mode<synchronous>, transform_indices = @transform_12, window_bounds = array<i64: 2, 1, 128>}, {pipeline_mode = #tpu.pipeline_mode<synchronous>, transform_indices = @transform_13, window_bounds = array<i64: 2, 128, 32>}, {pipeline_mode = #tpu.pipeline_mode<synchronous>, transform_indices = @transform_14, window_bounds = array<i64: 2, 1, 32>}, {pipeline_mode = #tpu.pipeline_mode<synchronous>, transform_indices = @transform_15, window_bounds = array<i64: 2, 1, 32>}, {pipeline_mode = #tpu.pipeline_mode<synchronous>, transform_indices = @transform_16, window_bounds = array<i64: 2, 1, 32>}, {pipeline_mode = #tpu.pipeline_mode<synchronous>, transform_indices = @transform_17, window_bounds = array<i64: 2, 64, 128>}, {pipeline_mode = #tpu.pipeline_mode<synchronous>, transform_indices = @transform_18, window_bounds = array<i64: 2, 32, 128>}, {pipeline_mode = #tpu.pipeline_mode<synchronous>, transform_indices = @transform_19, window_bounds = array<i64: 2, 1, 128>}, {transform_indices = @transform_20, window_bounds = array<i64: 2, 4, 32>}, {transform_indices = @transform_21, window_bounds = array<i64: 2, 4, 16>}, {transform_indices = @transform_22, window_bounds = array<i64: 2, 4, 16>}]} {
    %c0 = arith.constant 0 : index
    %c0_0 = arith.constant 0 : index
    %c0_1 = arith.constant 0 : index
    %0 = vector.load %arg1[%c0, %c0_0, %c0_1] : memref<2x16x48xf32, #tpu.memory_space<vmem>>, vector<2x16x48xf32>
    %1 = vector.shape_cast %0 : vector<2x16x48xf32> to vector<32x48xf32>
    %c0_2 = arith.constant 0 : index
    %c0_3 = arith.constant 0 : index
    %2 = vector.load %arg2[%c0_2, %c0_3] : memref<48x32xf32, #tpu.memory_space<vmem>>, vector<48x32xf32>
    %cst = arith.constant dense<0.000000e+00> : vector<32x32xf32>
    %3 = tpu.matmul %1, %2, %cst {dimension_numbers = #tpu.dot_dimension_numbers<[1], [0], [0], [1], [0, 0, 1, 1], [], []>} : vector<32x48xf32>, vector<48x32xf32>, vector<32x32xf32> -> vector<32x32xf32>
    %c0_4 = arith.constant 0 : index
    %c0_5 = arith.constant 0 : index
    %4 = vector.load %arg3[%c0_4, %c0_5] : memref<1x32xf32, #tpu.memory_space<vmem>>, vector<1x32xf32>
    %5 = vector.broadcast %4 : vector<1x32xf32> to vector<32x32xf32>
    %6 = arith.addf %3, %5 : vector<32x32xf32>
    %c0_6 = arith.constant 0 : index
    %c0_7 = arith.constant 0 : index
    %7 = vector.load %arg4[%c0_6, %c0_7] : memref<32x32xf32, #tpu.memory_space<vmem>>, vector<32x32xf32>
    %8 = arith.addf %6, %7 : vector<32x32xf32>
    %c0_8 = arith.constant 0 : index
    %c0_9 = arith.constant 0 : index
    %c0_10 = arith.constant 0 : index
    %9 = vector.load %arg6[%c0_8, %c0_9, %c0_10] : memref<2x32x96xf32, #tpu.memory_space<vmem>>, vector<1x32x96xf32>
    %10 = vector.shape_cast %9 : vector<1x32x96xf32> to vector<32x96xf32>
    %cst_11 = arith.constant dense<0.000000e+00> : vector<32x96xf32>
    %11 = tpu.matmul %8, %10, %cst_11 {dimension_numbers = #tpu.dot_dimension_numbers<[1], [0], [0], [1], [0, 0, 1, 1], [], []>} : vector<32x32xf32>, vector<32x96xf32>, vector<32x96xf32> -> vector<32x96xf32>
    %c0_12 = arith.constant 0 : index
    %c0_13 = arith.constant 0 : index
    %c0_14 = arith.constant 0 : index
    %12 = vector.load %arg7[%c0_12, %c0_13, %c0_14] : memref<2x1x96xf32, #tpu.memory_space<vmem>>, vector<1x1x96xf32>
    %13 = vector.shape_cast %12 : vector<1x1x96xf32> to vector<1x96xf32>
    %14 = vector.broadcast %13 : vector<1x96xf32> to vector<32x96xf32>
    %15 = arith.addf %11, %14 : vector<32x96xf32>
    %16 = vector.extract_strided_slice %15 {offsets = [0, 0], sizes = [32, 8], strides = [1, 1]} : vector<32x96xf32> to vector<32x8xf32>
    %17 = vector.shape_cast %16 : vector<32x8xf32> to vector<2x16x8xf32>
    %18 = vector.extract_strided_slice %15 {offsets = [0, 32], sizes = [32, 8], strides = [1, 1]} : vector<32x96xf32> to vector<32x8xf32>
    %19 = vector.shape_cast %18 : vector<32x8xf32> to vector<2x16x8xf32>
    %20 = vector.extract_strided_slice %15 {offsets = [0, 64], sizes = [32, 8], strides = [1, 1]} : vector<32x96xf32> to vector<32x8xf32>
    %21 = vector.shape_cast %20 : vector<32x8xf32> to vector<2x16x8xf32>
    %cst_15 = arith.constant 0.353553385 : f32
    %22 = vector.broadcast %cst_15 : f32 to vector<2x16x8xf32>
    %23 = arith.mulf %17, %22 : vector<2x16x8xf32>
    "tpu.trace_start"() <{level = 10 : i32, message = "bqe,bke->bqk"}> : () -> ()
    %cst_16 = arith.constant dense<0.000000e+00> : vector<2x16x16xf32>
    %24 = tpu.matmul %23, %19, %cst_16 {dimension_numbers = #tpu.dot_dimension_numbers<[2], [2], [1], [1], [0, 0, 0, 1, 1, 1], [0], [0]>} : vector<2x16x8xf32>, vector<2x16x8xf32>, vector<2x16x16xf32> -> vector<2x16x16xf32>
    "tpu.trace_stop"() : () -> ()
    %cst_17 = arith.constant dense<0xFF800000> : vector<2x16xf32>
    %25 = vector.multi_reduction <maximumf>, %24, %cst_17 [2] : vector<2x16x16xf32> to vector<2x16xf32>
    %26 = vector.shape_cast %25 : vector<2x16xf32> to vector<2x16x1xf32>
    %27 = vector.broadcast %26 : vector<2x16x1xf32> to vector<2x16x16xf32>
    %28 = arith.subf %24, %27 : vector<2x16x16xf32>
    %29 = math.exp %28 : vector<2x16x16xf32>
    %cst_18 = arith.constant dense<0.000000e+00> : vector<2x16xf32>
    %30 = vector.multi_reduction <add>, %29, %cst_18 [2] : vector<2x16x16xf32> to vector<2x16xf32>
    %31 = vector.shape_cast %30 : vector<2x16xf32> to vector<2x16x1xf32>
    %32 = tpu.reciprocal %31 {approx = true} : vector<2x16x1xf32> -> vector<2x16x1xf32>
    %33 = vector.broadcast %32 : vector<2x16x1xf32> to vector<2x16x16xf32>
    %34 = arith.mulf %29, %33 : vector<2x16x16xf32>
    "tpu.trace_start"() <{level = 10 : i32, message = "bqk,bke->bqe"}> : () -> ()
    %cst_19 = arith.constant dense<0.000000e+00> : vector<2x16x8xf32>
    %35 = tpu.matmul %34, %21, %cst_19 {dimension_numbers = #tpu.dot_dimension_numbers<[2], [1], [1], [2], [0, 0, 0, 1, 1, 2], [0], [0]>} : vector<2x16x16xf32>, vector<2x16x8xf32>, vector<2x16x8xf32> -> vector<2x16x8xf32>
    "tpu.trace_stop"() : () -> ()
    %36 = vector.extract_strided_slice %15 {offsets = [0, 8], sizes = [32, 8], strides = [1, 1]} : vector<32x96xf32> to vector<32x8xf32>
    %37 = vector.shape_cast %36 : vector<32x8xf32> to vector<2x16x8xf32>
    %38 = vector.extract_strided_slice %15 {offsets = [0, 40], sizes = [32, 8], strides = [1, 1]} : vector<32x96xf32> to vector<32x8xf32>
    %39 = vector.shape_cast %38 : vector<32x8xf32> to vector<2x16x8xf32>
    %40 = vector.extract_strided_slice %15 {offsets = [0, 72], sizes = [32, 8], strides = [1, 1]} : vector<32x96xf32> to vector<32x8xf32>
    %41 = vector.shape_cast %40 : vector<32x8xf32> to vector<2x16x8xf32>
    %cst_20 = arith.constant 0.353553385 : f32
    %42 = vector.broadcast %cst_20 : f32 to vector<2x16x8xf32>
    %43 = arith.mulf %37, %42 : vector<2x16x8xf32>
    "tpu.trace_start"() <{level = 10 : i32, message = "bqe,bke->bqk"}> : () -> ()
    %cst_21 = arith.constant dense<0.000000e+00> : vector<2x16x16xf32>
    %44 = tpu.matmul %43, %39, %cst_21 {dimension_numbers = #tpu.dot_dimension_numbers<[2], [2], [1], [1], [0, 0, 0, 1, 1, 1], [0], [0]>} : vector<2x16x8xf32>, vector<2x16x8xf32>, vector<2x16x16xf32> -> vector<2x16x16xf32>
    "tpu.trace_stop"() : () -> ()
    %cst_22 = arith.constant dense<0xFF800000> : vector<2x16xf32>
    %45 = vector.multi_reduction <maximumf>, %44, %cst_22 [2] : vector<2x16x16xf32> to vector<2x16xf32>
    %46 = vector.shape_cast %45 : vector<2x16xf32> to vector<2x16x1xf32>
    %47 = vector.broadcast %46 : vector<2x16x1xf32> to vector<2x16x16xf32>
    %48 = arith.subf %44, %47 : vector<2x16x16xf32>
    %49 = math.exp %48 : vector<2x16x16xf32>
    %cst_23 = arith.constant dense<0.000000e+00> : vector<2x16xf32>
    %50 = vector.multi_reduction <add>, %49, %cst_23 [2] : vector<2x16x16xf32> to vector<2x16xf32>
    %51 = vector.shape_cast %50 : vector<2x16xf32> to vector<2x16x1xf32>
    %52 = tpu.reciprocal %51 {approx = true} : vector<2x16x1xf32> -> vector<2x16x1xf32>
    %53 = vector.broadcast %52 : vector<2x16x1xf32> to vector<2x16x16xf32>
    %54 = arith.mulf %49, %53 : vector<2x16x16xf32>
    "tpu.trace_start"() <{level = 10 : i32, message = "bqk,bke->bqe"}> : () -> ()
    %cst_24 = arith.constant dense<0.000000e+00> : vector<2x16x8xf32>
    %55 = tpu.matmul %54, %41, %cst_24 {dimension_numbers = #tpu.dot_dimension_numbers<[2], [1], [1], [2], [0, 0, 0, 1, 1, 2], [0], [0]>} : vector<2x16x16xf32>, vector<2x16x8xf32>, vector<2x16x8xf32> -> vector<2x16x8xf32>
    "tpu.trace_stop"() : () -> ()
    %56 = vector.extract_strided_slice %15 {offsets = [0, 16], sizes = [32, 8], strides = [1, 1]} : vector<32x96xf32> to vector<32x8xf32>
    %57 = vector.shape_cast %56 : vector<32x8xf32> to vector<2x16x8xf32>
    %58 = vector.extract_strided_slice %15 {offsets = [0, 48], sizes = [32, 8], strides = [1, 1]} : vector<32x96xf32> to vector<32x8xf32>
    %59 = vector.shape_cast %58 : vector<32x8xf32> to vector<2x16x8xf32>
    %60 = vector.extract_strided_slice %15 {offsets = [0, 80], sizes = [32, 8], strides = [1, 1]} : vector<32x96xf32> to vector<32x8xf32>
    %61 = vector.shape_cast %60 : vector<32x8xf32> to vector<2x16x8xf32>
    %cst_25 = arith.constant 0.353553385 : f32
    %62 = vector.broadcast %cst_25 : f32 to vector<2x16x8xf32>
    %63 = arith.mulf %57, %62 : vector<2x16x8xf32>
    "tpu.trace_start"() <{level = 10 : i32, message = "bqe,bke->bqk"}> : () -> ()
    %cst_26 = arith.constant dense<0.000000e+00> : vector<2x16x16xf32>
    %64 = tpu.matmul %63, %59, %cst_26 {dimension_numbers = #tpu.dot_dimension_numbers<[2], [2], [1], [1], [0, 0, 0, 1, 1, 1], [0], [0]>} : vector<2x16x8xf32>, vector<2x16x8xf32>, vector<2x16x16xf32> -> vector<2x16x16xf32>
    "tpu.trace_stop"() : () -> ()
    %cst_27 = arith.constant dense<0xFF800000> : vector<2x16xf32>
    %65 = vector.multi_reduction <maximumf>, %64, %cst_27 [2] : vector<2x16x16xf32> to vector<2x16xf32>
    %66 = vector.shape_cast %65 : vector<2x16xf32> to vector<2x16x1xf32>
    %67 = vector.broadcast %66 : vector<2x16x1xf32> to vector<2x16x16xf32>
    %68 = arith.subf %64, %67 : vector<2x16x16xf32>
    %69 = math.exp %68 : vector<2x16x16xf32>
    %cst_28 = arith.constant dense<0.000000e+00> : vector<2x16xf32>
    %70 = vector.multi_reduction <add>, %69, %cst_28 [2] : vector<2x16x16xf32> to vector<2x16xf32>
    %71 = vector.shape_cast %70 : vector<2x16xf32> to vector<2x16x1xf32>
    %72 = tpu.reciprocal %71 {approx = true} : vector<2x16x1xf32> -> vector<2x16x1xf32>
    %73 = vector.broadcast %72 : vector<2x16x1xf32> to vector<2x16x16xf32>
    %74 = arith.mulf %69, %73 : vector<2x16x16xf32>
    "tpu.trace_start"() <{level = 10 : i32, message = "bqk,bke->bqe"}> : () -> ()
    %cst_29 = arith.constant dense<0.000000e+00> : vector<2x16x8xf32>
    %75 = tpu.matmul %74, %61, %cst_29 {dimension_numbers = #tpu.dot_dimension_numbers<[2], [1], [1], [2], [0, 0, 0, 1, 1, 2], [0], [0]>} : vector<2x16x16xf32>, vector<2x16x8xf32>, vector<2x16x8xf32> -> vector<2x16x8xf32>
    "tpu.trace_stop"() : () -> ()
    %76 = vector.extract_strided_slice %15 {offsets = [0, 24], sizes = [32, 8], strides = [1, 1]} : vector<32x96xf32> to vector<32x8xf32>
    %77 = vector.shape_cast %76 : vector<32x8xf32> to vector<2x16x8xf32>
    %78 = vector.extract_strided_slice %15 {offsets = [0, 56], sizes = [32, 8], strides = [1, 1]} : vector<32x96xf32> to vector<32x8xf32>
    %79 = vector.shape_cast %78 : vector<32x8xf32> to vector<2x16x8xf32>
    %80 = vector.extract_strided_slice %15 {offsets = [0, 88], sizes = [32, 8], strides = [1, 1]} : vector<32x96xf32> to vector<32x8xf32>
    %81 = vector.shape_cast %80 : vector<32x8xf32> to vector<2x16x8xf32>
    %cst_30 = arith.constant 0.353553385 : f32
    %82 = vector.broadcast %cst_30 : f32 to vector<2x16x8xf32>
    %83 = arith.mulf %77, %82 : vector<2x16x8xf32>
    "tpu.trace_start"() <{level = 10 : i32, message = "bqe,bke->bqk"}> : () -> ()
    %cst_31 = arith.constant dense<0.000000e+00> : vector<2x16x16xf32>
    %84 = tpu.matmul %83, %79, %cst_31 {dimension_numbers = #tpu.dot_dimension_numbers<[2], [2], [1], [1], [0, 0, 0, 1, 1, 1], [0], [0]>} : vector<2x16x8xf32>, vector<2x16x8xf32>, vector<2x16x16xf32> -> vector<2x16x16xf32>
    "tpu.trace_stop"() : () -> ()
    %cst_32 = arith.constant dense<0xFF800000> : vector<2x16xf32>
    %85 = vector.multi_reduction <maximumf>, %84, %cst_32 [2] : vector<2x16x16xf32> to vector<2x16xf32>
    %86 = vector.shape_cast %85 : vector<2x16xf32> to vector<2x16x1xf32>
    %87 = vector.broadcast %86 : vector<2x16x1xf32> to vector<2x16x16xf32>
    %88 = arith.subf %84, %87 : vector<2x16x16xf32>
    %89 = math.exp %88 : vector<2x16x16xf32>
    %cst_33 = arith.constant dense<0.000000e+00> : vector<2x16xf32>
    %90 = vector.multi_reduction <add>, %89, %cst_33 [2] : vector<2x16x16xf32> to vector<2x16xf32>
    %91 = vector.shape_cast %90 : vector<2x16xf32> to vector<2x16x1xf32>
    %92 = tpu.reciprocal %91 {approx = true} : vector<2x16x1xf32> -> vector<2x16x1xf32>
    %93 = vector.broadcast %92 : vector<2x16x1xf32> to vector<2x16x16xf32>
    %94 = arith.mulf %89, %93 : vector<2x16x16xf32>
    "tpu.trace_start"() <{level = 10 : i32, message = "bqk,bke->bqe"}> : () -> ()
    %cst_34 = arith.constant dense<0.000000e+00> : vector<2x16x8xf32>
    %95 = tpu.matmul %94, %81, %cst_34 {dimension_numbers = #tpu.dot_dimension_numbers<[2], [1], [1], [2], [0, 0, 0, 1, 1, 2], [0], [0]>} : vector<2x16x16xf32>, vector<2x16x8xf32>, vector<2x16x8xf32> -> vector<2x16x8xf32>
    "tpu.trace_stop"() : () -> ()
    %96 = tpu.concatenate %35, %55, %75, %95 in 2 : vector<2x16x8xf32>, vector<2x16x8xf32>, vector<2x16x8xf32>, vector<2x16x8xf32> -> vector<2x16x32xf32>
    %97 = vector.shape_cast %96 : vector<2x16x32xf32> to vector<32x32xf32>
    %c0_35 = arith.constant 0 : index
    %c0_36 = arith.constant 0 : index
    %c0_37 = arith.constant 0 : index
    %98 = vector.load %arg8[%c0_35, %c0_36, %c0_37] : memref<2x32x32xf32, #tpu.memory_space<vmem>>, vector<1x32x32xf32>
    %99 = vector.shape_cast %98 : vector<1x32x32xf32> to vector<32x32xf32>
    %cst_38 = arith.constant dense<0.000000e+00> : vector<32x32xf32>
    %100 = tpu.matmul %97, %99, %cst_38 {dimension_numbers = #tpu.dot_dimension_numbers<[1], [0], [0], [1], [0, 0, 1, 1], [], []>} : vector<32x32xf32>, vector<32x32xf32>, vector<32x32xf32> -> vector<32x32xf32>
    %c0_39 = arith.constant 0 : index
    %c0_40 = arith.constant 0 : index
    %c0_41 = arith.constant 0 : index
    %101 = vector.load %arg9[%c0_39, %c0_40, %c0_41] : memref<2x1x32xf32, #tpu.memory_space<vmem>>, vector<1x1x32xf32>
    %102 = vector.shape_cast %101 : vector<1x1x32xf32> to vector<1x32xf32>
    %103 = vector.broadcast %102 : vector<1x32xf32> to vector<32x32xf32>
    %104 = arith.addf %100, %103 : vector<32x32xf32>
    %105 = arith.addf %8, %104 : vector<32x32xf32>
    %c0_42 = arith.constant 0 : index
    %c0_43 = arith.constant 0 : index
    %c0_44 = arith.constant 0 : index
    %106 = vector.load %arg10[%c0_42, %c0_43, %c0_44] : memref<2x1x32xf32, #tpu.memory_space<vmem>>, vector<1x1x32xf32>
    %107 = vector.shape_cast %106 : vector<1x1x32xf32> to vector<1x32xf32>
    %c0_45 = arith.constant 0 : index
    %c0_46 = arith.constant 0 : index
    %c0_47 = arith.constant 0 : index
    %108 = vector.load %arg11[%c0_45, %c0_46, %c0_47] : memref<2x1x32xf32, #tpu.memory_space<vmem>>, vector<1x1x32xf32>
    %109 = vector.shape_cast %108 : vector<1x1x32xf32> to vector<1x32xf32>
    %cst_48 = arith.constant dense<0.000000e+00> : vector<32xf32>
    %110 = vector.multi_reduction <add>, %105, %cst_48 [1] : vector<32x32xf32> to vector<32xf32>
    %111 = vector.shape_cast %110 : vector<32xf32> to vector<32x1xf32>
    %cst_49 = arith.constant 3.200000e+01 : f32
    %112 = vector.broadcast %cst_49 : f32 to vector<32x1xf32>
    %113 = arith.divf %111, %112 : vector<32x1xf32>
    %114 = vector.broadcast %113 : vector<32x1xf32> to vector<32x32xf32>
    %115 = arith.subf %105, %114 : vector<32x32xf32>
    %116 = arith.mulf %115, %115 : vector<32x32xf32>
    %cst_50 = arith.constant dense<0.000000e+00> : vector<32xf32>
    %117 = vector.multi_reduction <add>, %116, %cst_50 [1] : vector<32x32xf32> to vector<32xf32>
    %118 = vector.shape_cast %117 : vector<32xf32> to vector<32x1xf32>
    %cst_51 = arith.constant 3.200000e+01 : f32
    %119 = vector.broadcast %cst_51 : f32 to vector<32x1xf32>
    %120 = arith.divf %118, %119 : vector<32x1xf32>
    %cst_52 = arith.constant 9.99999974E-6 : f32
    %121 = vector.broadcast %cst_52 : f32 to vector<32x1xf32>
    %122 = arith.addf %120, %121 : vector<32x1xf32>
    %123 = math.rsqrt %122 : vector<32x1xf32>
    %124 = vector.broadcast %123 : vector<32x1xf32> to vector<32x32xf32>
    %125 = arith.mulf %115, %124 : vector<32x32xf32>
    %126 = vector.broadcast %107 : vector<1x32xf32> to vector<32x32xf32>
    %127 = arith.mulf %125, %126 : vector<32x32xf32>
    %128 = vector.broadcast %109 : vector<1x32xf32> to vector<32x32xf32>
    %129 = arith.addf %127, %128 : vector<32x32xf32>
    %c0_53 = arith.constant 0 : index
    %c0_54 = arith.constant 0 : index
    %c0_55 = arith.constant 0 : index
    %130 = vector.load %arg12[%c0_53, %c0_54, %c0_55] : memref<2x32x128xf32, #tpu.memory_space<vmem>>, vector<1x32x128xf32>
    %131 = vector.shape_cast %130 : vector<1x32x128xf32> to vector<32x128xf32>
    %cst_56 = arith.constant dense<0.000000e+00> : vector<32x128xf32>
    %132 = tpu.matmul %129, %131, %cst_56 {dimension_numbers = #tpu.dot_dimension_numbers<[1], [0], [0], [1], [0, 0, 1, 1], [], []>} : vector<32x32xf32>, vector<32x128xf32>, vector<32x128xf32> -> vector<32x128xf32>
    %c0_57 = arith.constant 0 : index
    %c0_58 = arith.constant 0 : index
    %c0_59 = arith.constant 0 : index
    %133 = vector.load %arg13[%c0_57, %c0_58, %c0_59] : memref<2x1x128xf32, #tpu.memory_space<vmem>>, vector<1x1x128xf32>
    %134 = vector.shape_cast %133 : vector<1x1x128xf32> to vector<1x128xf32>
    %135 = vector.broadcast %134 : vector<1x128xf32> to vector<32x128xf32>
    %136 = arith.addf %132, %135 : vector<32x128xf32>
    %cst_60 = arith.constant 5.000000e-01 : f32
    %137 = vector.broadcast %cst_60 : f32 to vector<32x128xf32>
    %138 = arith.mulf %137, %136 : vector<32x128xf32>
    %cst_61 = arith.constant 4.471500e-02 : f32
    %139 = vector.broadcast %cst_61 : f32 to vector<32x128xf32>
    %140 = arith.mulf %139, %136 : vector<32x128xf32>
    %141 = arith.mulf %140, %136 : vector<32x128xf32>
    %142 = arith.mulf %141, %136 : vector<32x128xf32>
    %143 = arith.addf %136, %142 : vector<32x128xf32>
    %cst_62 = arith.constant 0.797884583 : f32
    %144 = vector.broadcast %cst_62 : f32 to vector<32x128xf32>
    %145 = arith.mulf %144, %143 : vector<32x128xf32>
    %146 = math.tanh %145 : vector<32x128xf32>
    %cst_63 = arith.constant 1.000000e+00 : f32
    %147 = vector.broadcast %cst_63 : f32 to vector<32x128xf32>
    %148 = arith.addf %147, %146 : vector<32x128xf32>
    %149 = arith.mulf %138, %148 : vector<32x128xf32>
    %c0_64 = arith.constant 0 : index
    %c0_65 = arith.constant 0 : index
    %c0_66 = arith.constant 0 : index
    %150 = vector.load %arg14[%c0_64, %c0_65, %c0_66] : memref<2x128x32xf32, #tpu.memory_space<vmem>>, vector<1x128x32xf32>
    %151 = vector.shape_cast %150 : vector<1x128x32xf32> to vector<128x32xf32>
    %cst_67 = arith.constant dense<0.000000e+00> : vector<32x32xf32>
    %152 = tpu.matmul %149, %151, %cst_67 {dimension_numbers = #tpu.dot_dimension_numbers<[1], [0], [0], [1], [0, 0, 1, 1], [], []>} : vector<32x128xf32>, vector<128x32xf32>, vector<32x32xf32> -> vector<32x32xf32>
    %c0_68 = arith.constant 0 : index
    %c0_69 = arith.constant 0 : index
    %c0_70 = arith.constant 0 : index
    %153 = vector.load %arg15[%c0_68, %c0_69, %c0_70] : memref<2x1x32xf32, #tpu.memory_space<vmem>>, vector<1x1x32xf32>
    %154 = vector.shape_cast %153 : vector<1x1x32xf32> to vector<1x32xf32>
    %155 = vector.broadcast %154 : vector<1x32xf32> to vector<32x32xf32>
    %156 = arith.addf %152, %155 : vector<32x32xf32>
    %157 = arith.addf %129, %156 : vector<32x32xf32>
    %c0_71 = arith.constant 0 : index
    %c0_72 = arith.constant 0 : index
    %c0_73 = arith.constant 0 : index
    %158 = vector.load %arg16[%c0_71, %c0_72, %c0_73] : memref<2x1x32xf32, #tpu.memory_space<vmem>>, vector<1x1x32xf32>
    %159 = vector.shape_cast %158 : vector<1x1x32xf32> to vector<1x32xf32>
    %c0_74 = arith.constant 0 : index
    %c0_75 = arith.constant 0 : index
    %c0_76 = arith.constant 0 : index
    %160 = vector.load %arg17[%c0_74, %c0_75, %c0_76] : memref<2x1x32xf32, #tpu.memory_space<vmem>>, vector<1x1x32xf32>
    %161 = vector.shape_cast %160 : vector<1x1x32xf32> to vector<1x32xf32>
    %cst_77 = arith.constant dense<0.000000e+00> : vector<32xf32>
    %162 = vector.multi_reduction <add>, %157, %cst_77 [1] : vector<32x32xf32> to vector<32xf32>
    %163 = vector.shape_cast %162 : vector<32xf32> to vector<32x1xf32>
    %cst_78 = arith.constant 3.200000e+01 : f32
    %164 = vector.broadcast %cst_78 : f32 to vector<32x1xf32>
    %165 = arith.divf %163, %164 : vector<32x1xf32>
    %166 = vector.broadcast %165 : vector<32x1xf32> to vector<32x32xf32>
    %167 = arith.subf %157, %166 : vector<32x32xf32>
    %168 = arith.mulf %167, %167 : vector<32x32xf32>
    %cst_79 = arith.constant dense<0.000000e+00> : vector<32xf32>
    %169 = vector.multi_reduction <add>, %168, %cst_79 [1] : vector<32x32xf32> to vector<32xf32>
    %170 = vector.shape_cast %169 : vector<32xf32> to vector<32x1xf32>
    %cst_80 = arith.constant 3.200000e+01 : f32
    %171 = vector.broadcast %cst_80 : f32 to vector<32x1xf32>
    %172 = arith.divf %170, %171 : vector<32x1xf32>
    %cst_81 = arith.constant 9.99999974E-6 : f32
    %173 = vector.broadcast %cst_81 : f32 to vector<32x1xf32>
    %174 = arith.addf %172, %173 : vector<32x1xf32>
    %175 = math.rsqrt %174 : vector<32x1xf32>
    %176 = vector.broadcast %175 : vector<32x1xf32> to vector<32x32xf32>
    %177 = arith.mulf %167, %176 : vector<32x32xf32>
    %178 = vector.broadcast %159 : vector<1x32xf32> to vector<32x32xf32>
    %179 = arith.mulf %177, %178 : vector<32x32xf32>
    %180 = vector.broadcast %161 : vector<1x32xf32> to vector<32x32xf32>
    %181 = arith.addf %179, %180 : vector<32x32xf32>
    %c1 = arith.constant 1 : index
    %c0_82 = arith.constant 0 : index
    %c0_83 = arith.constant 0 : index
    %182 = vector.load %arg6[%c1, %c0_82, %c0_83] : memref<2x32x96xf32, #tpu.memory_space<vmem>>, vector<1x32x96xf32>
    %183 = vector.shape_cast %182 : vector<1x32x96xf32> to vector<32x96xf32>
    %cst_84 = arith.constant dense<0.000000e+00> : vector<32x96xf32>
    %184 = tpu.matmul %181, %183, %cst_84 {dimension_numbers = #tpu.dot_dimension_numbers<[1], [0], [0], [1], [0, 0, 1, 1], [], []>} : vector<32x32xf32>, vector<32x96xf32>, vector<32x96xf32> -> vector<32x96xf32>
    %c1_85 = arith.constant 1 : index
    %c0_86 = arith.constant 0 : index
    %c0_87 = arith.constant 0 : index
    %185 = vector.load %arg7[%c1_85, %c0_86, %c0_87] : memref<2x1x96xf32, #tpu.memory_space<vmem>>, vector<1x1x96xf32>
    %186 = vector.shape_cast %185 : vector<1x1x96xf32> to vector<1x96xf32>
    %187 = vector.broadcast %186 : vector<1x96xf32> to vector<32x96xf32>
    %188 = arith.addf %184, %187 : vector<32x96xf32>
    %189 = vector.extract_strided_slice %188 {offsets = [0, 0], sizes = [32, 8], strides = [1, 1]} : vector<32x96xf32> to vector<32x8xf32>
    %190 = vector.shape_cast %189 : vector<32x8xf32> to vector<2x16x8xf32>
    %191 = vector.extract_strided_slice %188 {offsets = [0, 32], sizes = [32, 8], strides = [1, 1]} : vector<32x96xf32> to vector<32x8xf32>
    %192 = vector.shape_cast %191 : vector<32x8xf32> to vector<2x16x8xf32>
    %193 = vector.extract_strided_slice %188 {offsets = [0, 64], sizes = [32, 8], strides = [1, 1]} : vector<32x96xf32> to vector<32x8xf32>
    %194 = vector.shape_cast %193 : vector<32x8xf32> to vector<2x16x8xf32>
    %cst_88 = arith.constant 0.353553385 : f32
    %195 = vector.broadcast %cst_88 : f32 to vector<2x16x8xf32>
    %196 = arith.mulf %190, %195 : vector<2x16x8xf32>
    "tpu.trace_start"() <{level = 10 : i32, message = "bqe,bke->bqk"}> : () -> ()
    %cst_89 = arith.constant dense<0.000000e+00> : vector<2x16x16xf32>
    %197 = tpu.matmul %196, %192, %cst_89 {dimension_numbers = #tpu.dot_dimension_numbers<[2], [2], [1], [1], [0, 0, 0, 1, 1, 1], [0], [0]>} : vector<2x16x8xf32>, vector<2x16x8xf32>, vector<2x16x16xf32> -> vector<2x16x16xf32>
    "tpu.trace_stop"() : () -> ()
    %cst_90 = arith.constant dense<0xFF800000> : vector<2x16xf32>
    %198 = vector.multi_reduction <maximumf>, %197, %cst_90 [2] : vector<2x16x16xf32> to vector<2x16xf32>
    %199 = vector.shape_cast %198 : vector<2x16xf32> to vector<2x16x1xf32>
    %200 = vector.broadcast %199 : vector<2x16x1xf32> to vector<2x16x16xf32>
    %201 = arith.subf %197, %200 : vector<2x16x16xf32>
    %202 = math.exp %201 : vector<2x16x16xf32>
    %cst_91 = arith.constant dense<0.000000e+00> : vector<2x16xf32>
    %203 = vector.multi_reduction <add>, %202, %cst_91 [2] : vector<2x16x16xf32> to vector<2x16xf32>
    %204 = vector.shape_cast %203 : vector<2x16xf32> to vector<2x16x1xf32>
    %205 = tpu.reciprocal %204 {approx = true} : vector<2x16x1xf32> -> vector<2x16x1xf32>
    %206 = vector.broadcast %205 : vector<2x16x1xf32> to vector<2x16x16xf32>
    %207 = arith.mulf %202, %206 : vector<2x16x16xf32>
    "tpu.trace_start"() <{level = 10 : i32, message = "bqk,bke->bqe"}> : () -> ()
    %cst_92 = arith.constant dense<0.000000e+00> : vector<2x16x8xf32>
    %208 = tpu.matmul %207, %194, %cst_92 {dimension_numbers = #tpu.dot_dimension_numbers<[2], [1], [1], [2], [0, 0, 0, 1, 1, 2], [0], [0]>} : vector<2x16x16xf32>, vector<2x16x8xf32>, vector<2x16x8xf32> -> vector<2x16x8xf32>
    "tpu.trace_stop"() : () -> ()
    %209 = vector.extract_strided_slice %188 {offsets = [0, 8], sizes = [32, 8], strides = [1, 1]} : vector<32x96xf32> to vector<32x8xf32>
    %210 = vector.shape_cast %209 : vector<32x8xf32> to vector<2x16x8xf32>
    %211 = vector.extract_strided_slice %188 {offsets = [0, 40], sizes = [32, 8], strides = [1, 1]} : vector<32x96xf32> to vector<32x8xf32>
    %212 = vector.shape_cast %211 : vector<32x8xf32> to vector<2x16x8xf32>
    %213 = vector.extract_strided_slice %188 {offsets = [0, 72], sizes = [32, 8], strides = [1, 1]} : vector<32x96xf32> to vector<32x8xf32>
    %214 = vector.shape_cast %213 : vector<32x8xf32> to vector<2x16x8xf32>
    %cst_93 = arith.constant 0.353553385 : f32
    %215 = vector.broadcast %cst_93 : f32 to vector<2x16x8xf32>
    %216 = arith.mulf %210, %215 : vector<2x16x8xf32>
    "tpu.trace_start"() <{level = 10 : i32, message = "bqe,bke->bqk"}> : () -> ()
    %cst_94 = arith.constant dense<0.000000e+00> : vector<2x16x16xf32>
    %217 = tpu.matmul %216, %212, %cst_94 {dimension_numbers = #tpu.dot_dimension_numbers<[2], [2], [1], [1], [0, 0, 0, 1, 1, 1], [0], [0]>} : vector<2x16x8xf32>, vector<2x16x8xf32>, vector<2x16x16xf32> -> vector<2x16x16xf32>
    "tpu.trace_stop"() : () -> ()
    %cst_95 = arith.constant dense<0xFF800000> : vector<2x16xf32>
    %218 = vector.multi_reduction <maximumf>, %217, %cst_95 [2] : vector<2x16x16xf32> to vector<2x16xf32>
    %219 = vector.shape_cast %218 : vector<2x16xf32> to vector<2x16x1xf32>
    %220 = vector.broadcast %219 : vector<2x16x1xf32> to vector<2x16x16xf32>
    %221 = arith.subf %217, %220 : vector<2x16x16xf32>
    %222 = math.exp %221 : vector<2x16x16xf32>
    %cst_96 = arith.constant dense<0.000000e+00> : vector<2x16xf32>
    %223 = vector.multi_reduction <add>, %222, %cst_96 [2] : vector<2x16x16xf32> to vector<2x16xf32>
    %224 = vector.shape_cast %223 : vector<2x16xf32> to vector<2x16x1xf32>
    %225 = tpu.reciprocal %224 {approx = true} : vector<2x16x1xf32> -> vector<2x16x1xf32>
    %226 = vector.broadcast %225 : vector<2x16x1xf32> to vector<2x16x16xf32>
    %227 = arith.mulf %222, %226 : vector<2x16x16xf32>
    "tpu.trace_start"() <{level = 10 : i32, message = "bqk,bke->bqe"}> : () -> ()
    %cst_97 = arith.constant dense<0.000000e+00> : vector<2x16x8xf32>
    %228 = tpu.matmul %227, %214, %cst_97 {dimension_numbers = #tpu.dot_dimension_numbers<[2], [1], [1], [2], [0, 0, 0, 1, 1, 2], [0], [0]>} : vector<2x16x16xf32>, vector<2x16x8xf32>, vector<2x16x8xf32> -> vector<2x16x8xf32>
    "tpu.trace_stop"() : () -> ()
    %229 = vector.extract_strided_slice %188 {offsets = [0, 16], sizes = [32, 8], strides = [1, 1]} : vector<32x96xf32> to vector<32x8xf32>
    %230 = vector.shape_cast %229 : vector<32x8xf32> to vector<2x16x8xf32>
    %231 = vector.extract_strided_slice %188 {offsets = [0, 48], sizes = [32, 8], strides = [1, 1]} : vector<32x96xf32> to vector<32x8xf32>
    %232 = vector.shape_cast %231 : vector<32x8xf32> to vector<2x16x8xf32>
    %233 = vector.extract_strided_slice %188 {offsets = [0, 80], sizes = [32, 8], strides = [1, 1]} : vector<32x96xf32> to vector<32x8xf32>
    %234 = vector.shape_cast %233 : vector<32x8xf32> to vector<2x16x8xf32>
    %cst_98 = arith.constant 0.353553385 : f32
    %235 = vector.broadcast %cst_98 : f32 to vector<2x16x8xf32>
    %236 = arith.mulf %230, %235 : vector<2x16x8xf32>
    "tpu.trace_start"() <{level = 10 : i32, message = "bqe,bke->bqk"}> : () -> ()
    %cst_99 = arith.constant dense<0.000000e+00> : vector<2x16x16xf32>
    %237 = tpu.matmul %236, %232, %cst_99 {dimension_numbers = #tpu.dot_dimension_numbers<[2], [2], [1], [1], [0, 0, 0, 1, 1, 1], [0], [0]>} : vector<2x16x8xf32>, vector<2x16x8xf32>, vector<2x16x16xf32> -> vector<2x16x16xf32>
    "tpu.trace_stop"() : () -> ()
    %cst_100 = arith.constant dense<0xFF800000> : vector<2x16xf32>
    %238 = vector.multi_reduction <maximumf>, %237, %cst_100 [2] : vector<2x16x16xf32> to vector<2x16xf32>
    %239 = vector.shape_cast %238 : vector<2x16xf32> to vector<2x16x1xf32>
    %240 = vector.broadcast %239 : vector<2x16x1xf32> to vector<2x16x16xf32>
    %241 = arith.subf %237, %240 : vector<2x16x16xf32>
    %242 = math.exp %241 : vector<2x16x16xf32>
    %cst_101 = arith.constant dense<0.000000e+00> : vector<2x16xf32>
    %243 = vector.multi_reduction <add>, %242, %cst_101 [2] : vector<2x16x16xf32> to vector<2x16xf32>
    %244 = vector.shape_cast %243 : vector<2x16xf32> to vector<2x16x1xf32>
    %245 = tpu.reciprocal %244 {approx = true} : vector<2x16x1xf32> -> vector<2x16x1xf32>
    %246 = vector.broadcast %245 : vector<2x16x1xf32> to vector<2x16x16xf32>
    %247 = arith.mulf %242, %246 : vector<2x16x16xf32>
    "tpu.trace_start"() <{level = 10 : i32, message = "bqk,bke->bqe"}> : () -> ()
    %cst_102 = arith.constant dense<0.000000e+00> : vector<2x16x8xf32>
    %248 = tpu.matmul %247, %234, %cst_102 {dimension_numbers = #tpu.dot_dimension_numbers<[2], [1], [1], [2], [0, 0, 0, 1, 1, 2], [0], [0]>} : vector<2x16x16xf32>, vector<2x16x8xf32>, vector<2x16x8xf32> -> vector<2x16x8xf32>
    "tpu.trace_stop"() : () -> ()
    %249 = vector.extract_strided_slice %188 {offsets = [0, 24], sizes = [32, 8], strides = [1, 1]} : vector<32x96xf32> to vector<32x8xf32>
    %250 = vector.shape_cast %249 : vector<32x8xf32> to vector<2x16x8xf32>
    %251 = vector.extract_strided_slice %188 {offsets = [0, 56], sizes = [32, 8], strides = [1, 1]} : vector<32x96xf32> to vector<32x8xf32>
    %252 = vector.shape_cast %251 : vector<32x8xf32> to vector<2x16x8xf32>
    %253 = vector.extract_strided_slice %188 {offsets = [0, 88], sizes = [32, 8], strides = [1, 1]} : vector<32x96xf32> to vector<32x8xf32>
    %254 = vector.shape_cast %253 : vector<32x8xf32> to vector<2x16x8xf32>
    %cst_103 = arith.constant 0.353553385 : f32
    %255 = vector.broadcast %cst_103 : f32 to vector<2x16x8xf32>
    %256 = arith.mulf %250, %255 : vector<2x16x8xf32>
    "tpu.trace_start"() <{level = 10 : i32, message = "bqe,bke->bqk"}> : () -> ()
    %cst_104 = arith.constant dense<0.000000e+00> : vector<2x16x16xf32>
    %257 = tpu.matmul %256, %252, %cst_104 {dimension_numbers = #tpu.dot_dimension_numbers<[2], [2], [1], [1], [0, 0, 0, 1, 1, 1], [0], [0]>} : vector<2x16x8xf32>, vector<2x16x8xf32>, vector<2x16x16xf32> -> vector<2x16x16xf32>
    "tpu.trace_stop"() : () -> ()
    %cst_105 = arith.constant dense<0xFF800000> : vector<2x16xf32>
    %258 = vector.multi_reduction <maximumf>, %257, %cst_105 [2] : vector<2x16x16xf32> to vector<2x16xf32>
    %259 = vector.shape_cast %258 : vector<2x16xf32> to vector<2x16x1xf32>
    %260 = vector.broadcast %259 : vector<2x16x1xf32> to vector<2x16x16xf32>
    %261 = arith.subf %257, %260 : vector<2x16x16xf32>
    %262 = math.exp %261 : vector<2x16x16xf32>
    %cst_106 = arith.constant dense<0.000000e+00> : vector<2x16xf32>
    %263 = vector.multi_reduction <add>, %262, %cst_106 [2] : vector<2x16x16xf32> to vector<2x16xf32>
    %264 = vector.shape_cast %263 : vector<2x16xf32> to vector<2x16x1xf32>
    %265 = tpu.reciprocal %264 {approx = true} : vector<2x16x1xf32> -> vector<2x16x1xf32>
    %266 = vector.broadcast %265 : vector<2x16x1xf32> to vector<2x16x16xf32>
    %267 = arith.mulf %262, %266 : vector<2x16x16xf32>
    "tpu.trace_start"() <{level = 10 : i32, message = "bqk,bke->bqe"}> : () -> ()
    %cst_107 = arith.constant dense<0.000000e+00> : vector<2x16x8xf32>
    %268 = tpu.matmul %267, %254, %cst_107 {dimension_numbers = #tpu.dot_dimension_numbers<[2], [1], [1], [2], [0, 0, 0, 1, 1, 2], [0], [0]>} : vector<2x16x16xf32>, vector<2x16x8xf32>, vector<2x16x8xf32> -> vector<2x16x8xf32>
    "tpu.trace_stop"() : () -> ()
    %269 = tpu.concatenate %208, %228, %248, %268 in 2 : vector<2x16x8xf32>, vector<2x16x8xf32>, vector<2x16x8xf32>, vector<2x16x8xf32> -> vector<2x16x32xf32>
    %270 = vector.shape_cast %269 : vector<2x16x32xf32> to vector<32x32xf32>
    %c1_108 = arith.constant 1 : index
    %c0_109 = arith.constant 0 : index
    %c0_110 = arith.constant 0 : index
    %271 = vector.load %arg8[%c1_108, %c0_109, %c0_110] : memref<2x32x32xf32, #tpu.memory_space<vmem>>, vector<1x32x32xf32>
    %272 = vector.shape_cast %271 : vector<1x32x32xf32> to vector<32x32xf32>
    %cst_111 = arith.constant dense<0.000000e+00> : vector<32x32xf32>
    %273 = tpu.matmul %270, %272, %cst_111 {dimension_numbers = #tpu.dot_dimension_numbers<[1], [0], [0], [1], [0, 0, 1, 1], [], []>} : vector<32x32xf32>, vector<32x32xf32>, vector<32x32xf32> -> vector<32x32xf32>
    %c1_112 = arith.constant 1 : index
    %c0_113 = arith.constant 0 : index
    %c0_114 = arith.constant 0 : index
    %274 = vector.load %arg9[%c1_112, %c0_113, %c0_114] : memref<2x1x32xf32, #tpu.memory_space<vmem>>, vector<1x1x32xf32>
    %275 = vector.shape_cast %274 : vector<1x1x32xf32> to vector<1x32xf32>
    %276 = vector.broadcast %275 : vector<1x32xf32> to vector<32x32xf32>
    %277 = arith.addf %273, %276 : vector<32x32xf32>
    %278 = arith.addf %181, %277 : vector<32x32xf32>
    %c1_115 = arith.constant 1 : index
    %c0_116 = arith.constant 0 : index
    %c0_117 = arith.constant 0 : index
    %279 = vector.load %arg10[%c1_115, %c0_116, %c0_117] : memref<2x1x32xf32, #tpu.memory_space<vmem>>, vector<1x1x32xf32>
    %280 = vector.shape_cast %279 : vector<1x1x32xf32> to vector<1x32xf32>
    %c1_118 = arith.constant 1 : index
    %c0_119 = arith.constant 0 : index
    %c0_120 = arith.constant 0 : index
    %281 = vector.load %arg11[%c1_118, %c0_119, %c0_120] : memref<2x1x32xf32, #tpu.memory_space<vmem>>, vector<1x1x32xf32>
    %282 = vector.shape_cast %281 : vector<1x1x32xf32> to vector<1x32xf32>
    %cst_121 = arith.constant dense<0.000000e+00> : vector<32xf32>
    %283 = vector.multi_reduction <add>, %278, %cst_121 [1] : vector<32x32xf32> to vector<32xf32>
    %284 = vector.shape_cast %283 : vector<32xf32> to vector<32x1xf32>
    %cst_122 = arith.constant 3.200000e+01 : f32
    %285 = vector.broadcast %cst_122 : f32 to vector<32x1xf32>
    %286 = arith.divf %284, %285 : vector<32x1xf32>
    %287 = vector.broadcast %286 : vector<32x1xf32> to vector<32x32xf32>
    %288 = arith.subf %278, %287 : vector<32x32xf32>
    %289 = arith.mulf %288, %288 : vector<32x32xf32>
    %cst_123 = arith.constant dense<0.000000e+00> : vector<32xf32>
    %290 = vector.multi_reduction <add>, %289, %cst_123 [1] : vector<32x32xf32> to vector<32xf32>
    %291 = vector.shape_cast %290 : vector<32xf32> to vector<32x1xf32>
    %cst_124 = arith.constant 3.200000e+01 : f32
    %292 = vector.broadcast %cst_124 : f32 to vector<32x1xf32>
    %293 = arith.divf %291, %292 : vector<32x1xf32>
    %cst_125 = arith.constant 9.99999974E-6 : f32
    %294 = vector.broadcast %cst_125 : f32 to vector<32x1xf32>
    %295 = arith.addf %293, %294 : vector<32x1xf32>
    %296 = math.rsqrt %295 : vector<32x1xf32>
    %297 = vector.broadcast %296 : vector<32x1xf32> to vector<32x32xf32>
    %298 = arith.mulf %288, %297 : vector<32x32xf32>
    %299 = vector.broadcast %280 : vector<1x32xf32> to vector<32x32xf32>
    %300 = arith.mulf %298, %299 : vector<32x32xf32>
    %301 = vector.broadcast %282 : vector<1x32xf32> to vector<32x32xf32>
    %302 = arith.addf %300, %301 : vector<32x32xf32>
    %c1_126 = arith.constant 1 : index
    %c0_127 = arith.constant 0 : index
    %c0_128 = arith.constant 0 : index
    %303 = vector.load %arg12[%c1_126, %c0_127, %c0_128] : memref<2x32x128xf32, #tpu.memory_space<vmem>>, vector<1x32x128xf32>
    %304 = vector.shape_cast %303 : vector<1x32x128xf32> to vector<32x128xf32>
    %cst_129 = arith.constant dense<0.000000e+00> : vector<32x128xf32>
    %305 = tpu.matmul %302, %304, %cst_129 {dimension_numbers = #tpu.dot_dimension_numbers<[1], [0], [0], [1], [0, 0, 1, 1], [], []>} : vector<32x32xf32>, vector<32x128xf32>, vector<32x128xf32> -> vector<32x128xf32>
    %c1_130 = arith.constant 1 : index
    %c0_131 = arith.constant 0 : index
    %c0_132 = arith.constant 0 : index
    %306 = vector.load %arg13[%c1_130, %c0_131, %c0_132] : memref<2x1x128xf32, #tpu.memory_space<vmem>>, vector<1x1x128xf32>
    %307 = vector.shape_cast %306 : vector<1x1x128xf32> to vector<1x128xf32>
    %308 = vector.broadcast %307 : vector<1x128xf32> to vector<32x128xf32>
    %309 = arith.addf %305, %308 : vector<32x128xf32>
    %cst_133 = arith.constant 5.000000e-01 : f32
    %310 = vector.broadcast %cst_133 : f32 to vector<32x128xf32>
    %311 = arith.mulf %310, %309 : vector<32x128xf32>
    %cst_134 = arith.constant 4.471500e-02 : f32
    %312 = vector.broadcast %cst_134 : f32 to vector<32x128xf32>
    %313 = arith.mulf %312, %309 : vector<32x128xf32>
    %314 = arith.mulf %313, %309 : vector<32x128xf32>
    %315 = arith.mulf %314, %309 : vector<32x128xf32>
    %316 = arith.addf %309, %315 : vector<32x128xf32>
    %cst_135 = arith.constant 0.797884583 : f32
    %317 = vector.broadcast %cst_135 : f32 to vector<32x128xf32>
    %318 = arith.mulf %317, %316 : vector<32x128xf32>
    %319 = math.tanh %318 : vector<32x128xf32>
    %cst_136 = arith.constant 1.000000e+00 : f32
    %320 = vector.broadcast %cst_136 : f32 to vector<32x128xf32>
    %321 = arith.addf %320, %319 : vector<32x128xf32>
    %322 = arith.mulf %311, %321 : vector<32x128xf32>
    %c1_137 = arith.constant 1 : index
    %c0_138 = arith.constant 0 : index
    %c0_139 = arith.constant 0 : index
    %323 = vector.load %arg14[%c1_137, %c0_138, %c0_139] : memref<2x128x32xf32, #tpu.memory_space<vmem>>, vector<1x128x32xf32>
    %324 = vector.shape_cast %323 : vector<1x128x32xf32> to vector<128x32xf32>
    %cst_140 = arith.constant dense<0.000000e+00> : vector<32x32xf32>
    %325 = tpu.matmul %322, %324, %cst_140 {dimension_numbers = #tpu.dot_dimension_numbers<[1], [0], [0], [1], [0, 0, 1, 1], [], []>} : vector<32x128xf32>, vector<128x32xf32>, vector<32x32xf32> -> vector<32x32xf32>
    %c1_141 = arith.constant 1 : index
    %c0_142 = arith.constant 0 : index
    %c0_143 = arith.constant 0 : index
    %326 = vector.load %arg15[%c1_141, %c0_142, %c0_143] : memref<2x1x32xf32, #tpu.memory_space<vmem>>, vector<1x1x32xf32>
    %327 = vector.shape_cast %326 : vector<1x1x32xf32> to vector<1x32xf32>
    %328 = vector.broadcast %327 : vector<1x32xf32> to vector<32x32xf32>
    %329 = arith.addf %325, %328 : vector<32x32xf32>
    %330 = arith.addf %302, %329 : vector<32x32xf32>
    %c1_144 = arith.constant 1 : index
    %c0_145 = arith.constant 0 : index
    %c0_146 = arith.constant 0 : index
    %331 = vector.load %arg16[%c1_144, %c0_145, %c0_146] : memref<2x1x32xf32, #tpu.memory_space<vmem>>, vector<1x1x32xf32>
    %332 = vector.shape_cast %331 : vector<1x1x32xf32> to vector<1x32xf32>
    %c1_147 = arith.constant 1 : index
    %c0_148 = arith.constant 0 : index
    %c0_149 = arith.constant 0 : index
    %333 = vector.load %arg17[%c1_147, %c0_148, %c0_149] : memref<2x1x32xf32, #tpu.memory_space<vmem>>, vector<1x1x32xf32>
    %334 = vector.shape_cast %333 : vector<1x1x32xf32> to vector<1x32xf32>
    %cst_150 = arith.constant dense<0.000000e+00> : vector<32xf32>
    %335 = vector.multi_reduction <add>, %330, %cst_150 [1] : vector<32x32xf32> to vector<32xf32>
    %336 = vector.shape_cast %335 : vector<32xf32> to vector<32x1xf32>
    %cst_151 = arith.constant 3.200000e+01 : f32
    %337 = vector.broadcast %cst_151 : f32 to vector<32x1xf32>
    %338 = arith.divf %336, %337 : vector<32x1xf32>
    %339 = vector.broadcast %338 : vector<32x1xf32> to vector<32x32xf32>
    %340 = arith.subf %330, %339 : vector<32x32xf32>
    %341 = arith.mulf %340, %340 : vector<32x32xf32>
    %cst_152 = arith.constant dense<0.000000e+00> : vector<32xf32>
    %342 = vector.multi_reduction <add>, %341, %cst_152 [1] : vector<32x32xf32> to vector<32xf32>
    %343 = vector.shape_cast %342 : vector<32xf32> to vector<32x1xf32>
    %cst_153 = arith.constant 3.200000e+01 : f32
    %344 = vector.broadcast %cst_153 : f32 to vector<32x1xf32>
    %345 = arith.divf %343, %344 : vector<32x1xf32>
    %cst_154 = arith.constant 9.99999974E-6 : f32
    %346 = vector.broadcast %cst_154 : f32 to vector<32x1xf32>
    %347 = arith.addf %345, %346 : vector<32x1xf32>
    %348 = math.rsqrt %347 : vector<32x1xf32>
    %349 = vector.broadcast %348 : vector<32x1xf32> to vector<32x32xf32>
    %350 = arith.mulf %340, %349 : vector<32x32xf32>
    %351 = vector.broadcast %332 : vector<1x32xf32> to vector<32x32xf32>
    %352 = arith.mulf %350, %351 : vector<32x32xf32>
    %353 = vector.broadcast %334 : vector<1x32xf32> to vector<32x32xf32>
    %354 = arith.addf %352, %353 : vector<32x32xf32>
    %c0_155 = arith.constant 0 : index
    %c0_156 = arith.constant 0 : index
    %355 = vector.load %arg5[%c0_155, %c0_156] : memref<8x32xf32, #tpu.memory_space<vmem>>, vector<8x32xf32>
    %cst_157 = arith.constant dense<0.000000e+00> : vector<8x32xf32>
    %356 = tpu.matmul %355, %354, %cst_157 {dimension_numbers = #tpu.dot_dimension_numbers<[1], [0], [0], [1], [0, 0, 1, 1], [], []>} : vector<8x32xf32>, vector<32x32xf32>, vector<8x32xf32> -> vector<8x32xf32>
    %357 = vector.shape_cast %356 : vector<8x32xf32> to vector<2x4x32xf32>
    %c0_158 = arith.constant 0 : index
    %c0_159 = arith.constant 0 : index
    %c0_160 = arith.constant 0 : index
    %358 = vector.load %arg18[%c0_158, %c0_159, %c0_160] : memref<2x64x128xf32, #tpu.memory_space<vmem>>, vector<1x64x128xf32>
    %359 = vector.shape_cast %358 : vector<1x64x128xf32> to vector<64x128xf32>
    %c0_161 = arith.constant 0 : index
    %c0_162 = arith.constant 0 : index
    %c0_163 = arith.constant 0 : index
    %360 = vector.load %arg19[%c0_161, %c0_162, %c0_163] : memref<2x32x128xf32, #tpu.memory_space<vmem>>, vector<1x32x128xf32>
    %361 = vector.shape_cast %360 : vector<1x32x128xf32> to vector<32x128xf32>
    %c0_164 = arith.constant 0 : index
    %c0_165 = arith.constant 0 : index
    %c0_166 = arith.constant 0 : index
    %362 = vector.load %arg20[%c0_164, %c0_165, %c0_166] : memref<2x1x128xf32, #tpu.memory_space<vmem>>, vector<1x1x128xf32>
    %363 = vector.shape_cast %362 : vector<1x1x128xf32> to vector<1x128xf32>
    %364 = vector.extract_strided_slice %357 {offsets = [0, 3, 0], sizes = [2, 1, 32], strides = [1, 1, 1]} : vector<2x4x32xf32> to vector<2x1x32xf32>
    %365 = vector.extract_strided_slice %357 {offsets = [0, 2, 0], sizes = [2, 1, 32], strides = [1, 1, 1]} : vector<2x4x32xf32> to vector<2x1x32xf32>
    %366 = vector.extract_strided_slice %357 {offsets = [0, 1, 0], sizes = [2, 1, 32], strides = [1, 1, 1]} : vector<2x4x32xf32> to vector<2x1x32xf32>
    %367 = vector.extract_strided_slice %357 {offsets = [0, 0, 0], sizes = [2, 1, 32], strides = [1, 1, 1]} : vector<2x4x32xf32> to vector<2x1x32xf32>
    %368 = tpu.concatenate %364, %365, %366, %367 in 1 : vector<2x1x32xf32>, vector<2x1x32xf32>, vector<2x1x32xf32>, vector<2x1x32xf32> -> vector<2x4x32xf32>
    %369 = tpu.concatenate %357, %368 in 2 : vector<2x4x32xf32>, vector<2x4x32xf32> -> vector<2x4x64xf32>
    %370 = vector.shape_cast %369 : vector<2x4x64xf32> to vector<8x64xf32>
    %cst_167 = arith.constant dense<0.000000e+00> : vector<8x128xf32>
    %371 = tpu.matmul %370, %359, %cst_167 {dimension_numbers = #tpu.dot_dimension_numbers<[1], [0], [0], [1], [0, 0, 1, 1], [], []>} : vector<8x64xf32>, vector<64x128xf32>, vector<8x128xf32> -> vector<8x128xf32>
    %372 = vector.broadcast %363 : vector<1x128xf32> to vector<8x128xf32>
    %373 = arith.addf %371, %372 : vector<8x128xf32>
    %374 = vector.shape_cast %373 : vector<8x128xf32> to vector<2x4x128xf32>
    %cst_168 = arith.constant 0.000000e+00 : f32
    %375 = vector.broadcast %cst_168 : f32 to vector<2x32xf32>
    %cst_169 = arith.constant 0.000000e+00 : f32
    %376 = vector.broadcast %cst_169 : f32 to vector<2x32xf32>
    %377 = vector.extract_strided_slice %374 {offsets = [0, 0, 0], sizes = [2, 1, 128], strides = [1, 1, 1]} : vector<2x4x128xf32> to vector<2x1x128xf32>
    %378 = vector.shape_cast %377 : vector<2x1x128xf32> to vector<2x128xf32>
    %cst_170 = arith.constant dense<0.000000e+00> : vector<2x128xf32>
    %379 = tpu.matmul %375, %361, %cst_170 {dimension_numbers = #tpu.dot_dimension_numbers<[1], [0], [0], [1], [0, 0, 1, 1], [], []>} : vector<2x32xf32>, vector<32x128xf32>, vector<2x128xf32> -> vector<2x128xf32>
    %380 = arith.addf %378, %379 : vector<2x128xf32>
    %381 = vector.extract_strided_slice %380 {offsets = [0, 0], sizes = [2, 32], strides = [1, 1]} : vector<2x128xf32> to vector<2x32xf32>
    %382 = arith.negf %381 : vector<2x32xf32>
    %383 = math.exp %382 : vector<2x32xf32>
    %cst_171 = arith.constant 1.000000e+00 : f32
    %384 = vector.broadcast %cst_171 : f32 to vector<2x32xf32>
    %385 = arith.addf %384, %383 : vector<2x32xf32>
    %386 = arith.divf %384, %385 : vector<2x32xf32>
    %387 = vector.extract_strided_slice %380 {offsets = [0, 32], sizes = [2, 32], strides = [1, 1]} : vector<2x128xf32> to vector<2x32xf32>
    %388 = arith.negf %387 : vector<2x32xf32>
    %389 = math.exp %388 : vector<2x32xf32>
    %cst_172 = arith.constant 1.000000e+00 : f32
    %390 = vector.broadcast %cst_172 : f32 to vector<2x32xf32>
    %391 = arith.addf %390, %389 : vector<2x32xf32>
    %392 = arith.divf %390, %391 : vector<2x32xf32>
    %393 = vector.extract_strided_slice %380 {offsets = [0, 64], sizes = [2, 32], strides = [1, 1]} : vector<2x128xf32> to vector<2x32xf32>
    %394 = math.tanh %393 : vector<2x32xf32>
    %395 = vector.extract_strided_slice %380 {offsets = [0, 96], sizes = [2, 32], strides = [1, 1]} : vector<2x128xf32> to vector<2x32xf32>
    %396 = arith.negf %395 : vector<2x32xf32>
    %397 = math.exp %396 : vector<2x32xf32>
    %cst_173 = arith.constant 1.000000e+00 : f32
    %398 = vector.broadcast %cst_173 : f32 to vector<2x32xf32>
    %399 = arith.addf %398, %397 : vector<2x32xf32>
    %400 = arith.divf %398, %399 : vector<2x32xf32>
    %401 = arith.mulf %392, %376 : vector<2x32xf32>
    %402 = arith.mulf %386, %394 : vector<2x32xf32>
    %403 = arith.addf %401, %402 : vector<2x32xf32>
    %404 = math.tanh %403 : vector<2x32xf32>
    %405 = arith.mulf %400, %404 : vector<2x32xf32>
    %406 = vector.extract_strided_slice %374 {offsets = [0, 1, 0], sizes = [2, 1, 128], strides = [1, 1, 1]} : vector<2x4x128xf32> to vector<2x1x128xf32>
    %407 = vector.shape_cast %406 : vector<2x1x128xf32> to vector<2x128xf32>
    %cst_174 = arith.constant dense<0.000000e+00> : vector<2x128xf32>
    %408 = tpu.matmul %405, %361, %cst_174 {dimension_numbers = #tpu.dot_dimension_numbers<[1], [0], [0], [1], [0, 0, 1, 1], [], []>} : vector<2x32xf32>, vector<32x128xf32>, vector<2x128xf32> -> vector<2x128xf32>
    %409 = arith.addf %407, %408 : vector<2x128xf32>
    %410 = vector.extract_strided_slice %409 {offsets = [0, 0], sizes = [2, 32], strides = [1, 1]} : vector<2x128xf32> to vector<2x32xf32>
    %411 = arith.negf %410 : vector<2x32xf32>
    %412 = math.exp %411 : vector<2x32xf32>
    %cst_175 = arith.constant 1.000000e+00 : f32
    %413 = vector.broadcast %cst_175 : f32 to vector<2x32xf32>
    %414 = arith.addf %413, %412 : vector<2x32xf32>
    %415 = arith.divf %413, %414 : vector<2x32xf32>
    %416 = vector.extract_strided_slice %409 {offsets = [0, 32], sizes = [2, 32], strides = [1, 1]} : vector<2x128xf32> to vector<2x32xf32>
    %417 = arith.negf %416 : vector<2x32xf32>
    %418 = math.exp %417 : vector<2x32xf32>
    %cst_176 = arith.constant 1.000000e+00 : f32
    %419 = vector.broadcast %cst_176 : f32 to vector<2x32xf32>
    %420 = arith.addf %419, %418 : vector<2x32xf32>
    %421 = arith.divf %419, %420 : vector<2x32xf32>
    %422 = vector.extract_strided_slice %409 {offsets = [0, 64], sizes = [2, 32], strides = [1, 1]} : vector<2x128xf32> to vector<2x32xf32>
    %423 = math.tanh %422 : vector<2x32xf32>
    %424 = vector.extract_strided_slice %409 {offsets = [0, 96], sizes = [2, 32], strides = [1, 1]} : vector<2x128xf32> to vector<2x32xf32>
    %425 = arith.negf %424 : vector<2x32xf32>
    %426 = math.exp %425 : vector<2x32xf32>
    %cst_177 = arith.constant 1.000000e+00 : f32
    %427 = vector.broadcast %cst_177 : f32 to vector<2x32xf32>
    %428 = arith.addf %427, %426 : vector<2x32xf32>
    %429 = arith.divf %427, %428 : vector<2x32xf32>
    %430 = arith.mulf %421, %403 : vector<2x32xf32>
    %431 = arith.mulf %415, %423 : vector<2x32xf32>
    %432 = arith.addf %430, %431 : vector<2x32xf32>
    %433 = math.tanh %432 : vector<2x32xf32>
    %434 = arith.mulf %429, %433 : vector<2x32xf32>
    %435 = vector.extract_strided_slice %374 {offsets = [0, 2, 0], sizes = [2, 1, 128], strides = [1, 1, 1]} : vector<2x4x128xf32> to vector<2x1x128xf32>
    %436 = vector.shape_cast %435 : vector<2x1x128xf32> to vector<2x128xf32>
    %cst_178 = arith.constant dense<0.000000e+00> : vector<2x128xf32>
    %437 = tpu.matmul %434, %361, %cst_178 {dimension_numbers = #tpu.dot_dimension_numbers<[1], [0], [0], [1], [0, 0, 1, 1], [], []>} : vector<2x32xf32>, vector<32x128xf32>, vector<2x128xf32> -> vector<2x128xf32>
    %438 = arith.addf %436, %437 : vector<2x128xf32>
    %439 = vector.extract_strided_slice %438 {offsets = [0, 0], sizes = [2, 32], strides = [1, 1]} : vector<2x128xf32> to vector<2x32xf32>
    %440 = arith.negf %439 : vector<2x32xf32>
    %441 = math.exp %440 : vector<2x32xf32>
    %cst_179 = arith.constant 1.000000e+00 : f32
    %442 = vector.broadcast %cst_179 : f32 to vector<2x32xf32>
    %443 = arith.addf %442, %441 : vector<2x32xf32>
    %444 = arith.divf %442, %443 : vector<2x32xf32>
    %445 = vector.extract_strided_slice %438 {offsets = [0, 32], sizes = [2, 32], strides = [1, 1]} : vector<2x128xf32> to vector<2x32xf32>
    %446 = arith.negf %445 : vector<2x32xf32>
    %447 = math.exp %446 : vector<2x32xf32>
    %cst_180 = arith.constant 1.000000e+00 : f32
    %448 = vector.broadcast %cst_180 : f32 to vector<2x32xf32>
    %449 = arith.addf %448, %447 : vector<2x32xf32>
    %450 = arith.divf %448, %449 : vector<2x32xf32>
    %451 = vector.extract_strided_slice %438 {offsets = [0, 64], sizes = [2, 32], strides = [1, 1]} : vector<2x128xf32> to vector<2x32xf32>
    %452 = math.tanh %451 : vector<2x32xf32>
    %453 = vector.extract_strided_slice %438 {offsets = [0, 96], sizes = [2, 32], strides = [1, 1]} : vector<2x128xf32> to vector<2x32xf32>
    %454 = arith.negf %453 : vector<2x32xf32>
    %455 = math.exp %454 : vector<2x32xf32>
    %cst_181 = arith.constant 1.000000e+00 : f32
    %456 = vector.broadcast %cst_181 : f32 to vector<2x32xf32>
    %457 = arith.addf %456, %455 : vector<2x32xf32>
    %458 = arith.divf %456, %457 : vector<2x32xf32>
    %459 = arith.mulf %450, %432 : vector<2x32xf32>
    %460 = arith.mulf %444, %452 : vector<2x32xf32>
    %461 = arith.addf %459, %460 : vector<2x32xf32>
    %462 = math.tanh %461 : vector<2x32xf32>
    %463 = arith.mulf %458, %462 : vector<2x32xf32>
    %464 = vector.extract_strided_slice %374 {offsets = [0, 3, 0], sizes = [2, 1, 128], strides = [1, 1, 1]} : vector<2x4x128xf32> to vector<2x1x128xf32>
    %465 = vector.shape_cast %464 : vector<2x1x128xf32> to vector<2x128xf32>
    %cst_182 = arith.constant dense<0.000000e+00> : vector<2x128xf32>
    %466 = tpu.matmul %463, %361, %cst_182 {dimension_numbers = #tpu.dot_dimension_numbers<[1], [0], [0], [1], [0, 0, 1, 1], [], []>} : vector<2x32xf32>, vector<32x128xf32>, vector<2x128xf32> -> vector<2x128xf32>
    %467 = arith.addf %465, %466 : vector<2x128xf32>
    %468 = vector.extract_strided_slice %467 {offsets = [0, 0], sizes = [2, 32], strides = [1, 1]} : vector<2x128xf32> to vector<2x32xf32>
    %469 = arith.negf %468 : vector<2x32xf32>
    %470 = math.exp %469 : vector<2x32xf32>
    %cst_183 = arith.constant 1.000000e+00 : f32
    %471 = vector.broadcast %cst_183 : f32 to vector<2x32xf32>
    %472 = arith.addf %471, %470 : vector<2x32xf32>
    %473 = arith.divf %471, %472 : vector<2x32xf32>
    %474 = vector.extract_strided_slice %467 {offsets = [0, 32], sizes = [2, 32], strides = [1, 1]} : vector<2x128xf32> to vector<2x32xf32>
    %475 = arith.negf %474 : vector<2x32xf32>
    %476 = math.exp %475 : vector<2x32xf32>
    %cst_184 = arith.constant 1.000000e+00 : f32
    %477 = vector.broadcast %cst_184 : f32 to vector<2x32xf32>
    %478 = arith.addf %477, %476 : vector<2x32xf32>
    %479 = arith.divf %477, %478 : vector<2x32xf32>
    %480 = vector.extract_strided_slice %467 {offsets = [0, 64], sizes = [2, 32], strides = [1, 1]} : vector<2x128xf32> to vector<2x32xf32>
    %481 = math.tanh %480 : vector<2x32xf32>
    %482 = vector.extract_strided_slice %467 {offsets = [0, 96], sizes = [2, 32], strides = [1, 1]} : vector<2x128xf32> to vector<2x32xf32>
    %483 = arith.negf %482 : vector<2x32xf32>
    %484 = math.exp %483 : vector<2x32xf32>
    %cst_185 = arith.constant 1.000000e+00 : f32
    %485 = vector.broadcast %cst_185 : f32 to vector<2x32xf32>
    %486 = arith.addf %485, %484 : vector<2x32xf32>
    %487 = arith.divf %485, %486 : vector<2x32xf32>
    %488 = arith.mulf %479, %461 : vector<2x32xf32>
    %489 = arith.mulf %473, %481 : vector<2x32xf32>
    %490 = arith.addf %488, %489 : vector<2x32xf32>
    %491 = math.tanh %490 : vector<2x32xf32>
    %492 = arith.mulf %487, %491 : vector<2x32xf32>
    %493 = vector.extract_strided_slice %405 {offsets = [0, 0], sizes = [2, 16], strides = [1, 1]} : vector<2x32xf32> to vector<2x16xf32>
    %494 = vector.extract_strided_slice %492 {offsets = [0, 16], sizes = [2, 16], strides = [1, 1]} : vector<2x32xf32> to vector<2x16xf32>
    %495 = tpu.concatenate %493, %494 in 1 : vector<2x16xf32>, vector<2x16xf32> -> vector<2x32xf32>
    %496 = vector.extract_strided_slice %434 {offsets = [0, 0], sizes = [2, 16], strides = [1, 1]} : vector<2x32xf32> to vector<2x16xf32>
    %497 = vector.extract_strided_slice %463 {offsets = [0, 16], sizes = [2, 16], strides = [1, 1]} : vector<2x32xf32> to vector<2x16xf32>
    %498 = tpu.concatenate %496, %497 in 1 : vector<2x16xf32>, vector<2x16xf32> -> vector<2x32xf32>
    %499 = vector.extract_strided_slice %463 {offsets = [0, 0], sizes = [2, 16], strides = [1, 1]} : vector<2x32xf32> to vector<2x16xf32>
    %500 = vector.extract_strided_slice %434 {offsets = [0, 16], sizes = [2, 16], strides = [1, 1]} : vector<2x32xf32> to vector<2x16xf32>
    %501 = tpu.concatenate %499, %500 in 1 : vector<2x16xf32>, vector<2x16xf32> -> vector<2x32xf32>
    %502 = vector.extract_strided_slice %492 {offsets = [0, 0], sizes = [2, 16], strides = [1, 1]} : vector<2x32xf32> to vector<2x16xf32>
    %503 = vector.extract_strided_slice %405 {offsets = [0, 16], sizes = [2, 16], strides = [1, 1]} : vector<2x32xf32> to vector<2x16xf32>
    %504 = tpu.concatenate %502, %503 in 1 : vector<2x16xf32>, vector<2x16xf32> -> vector<2x32xf32>
    %505 = vector.shape_cast %495 : vector<2x32xf32> to vector<2x1x32xf32>
    %506 = vector.shape_cast %498 : vector<2x32xf32> to vector<2x1x32xf32>
    %507 = vector.shape_cast %501 : vector<2x32xf32> to vector<2x1x32xf32>
    %508 = vector.shape_cast %504 : vector<2x32xf32> to vector<2x1x32xf32>
    %509 = tpu.concatenate %505, %506, %507, %508 in 1 : vector<2x1x32xf32>, vector<2x1x32xf32>, vector<2x1x32xf32>, vector<2x1x32xf32> -> vector<2x4x32xf32>
    %510 = vector.extract_strided_slice %492 {offsets = [0, 0], sizes = [2, 16], strides = [1, 1]} : vector<2x32xf32> to vector<2x16xf32>
    %511 = vector.extract_strided_slice %492 {offsets = [0, 16], sizes = [2, 16], strides = [1, 1]} : vector<2x32xf32> to vector<2x16xf32>
    %512 = vector.extract_strided_slice %490 {offsets = [0, 0], sizes = [2, 16], strides = [1, 1]} : vector<2x32xf32> to vector<2x16xf32>
    %513 = vector.extract_strided_slice %490 {offsets = [0, 16], sizes = [2, 16], strides = [1, 1]} : vector<2x32xf32> to vector<2x16xf32>
    %c1_186 = arith.constant 1 : index
    %c0_187 = arith.constant 0 : index
    %c0_188 = arith.constant 0 : index
    %514 = vector.load %arg18[%c1_186, %c0_187, %c0_188] : memref<2x64x128xf32, #tpu.memory_space<vmem>>, vector<1x64x128xf32>
    %515 = vector.shape_cast %514 : vector<1x64x128xf32> to vector<64x128xf32>
    %c1_189 = arith.constant 1 : index
    %c0_190 = arith.constant 0 : index
    %c0_191 = arith.constant 0 : index
    %516 = vector.load %arg19[%c1_189, %c0_190, %c0_191] : memref<2x32x128xf32, #tpu.memory_space<vmem>>, vector<1x32x128xf32>
    %517 = vector.shape_cast %516 : vector<1x32x128xf32> to vector<32x128xf32>
    %c1_192 = arith.constant 1 : index
    %c0_193 = arith.constant 0 : index
    %c0_194 = arith.constant 0 : index
    %518 = vector.load %arg20[%c1_192, %c0_193, %c0_194] : memref<2x1x128xf32, #tpu.memory_space<vmem>>, vector<1x1x128xf32>
    %519 = vector.shape_cast %518 : vector<1x1x128xf32> to vector<1x128xf32>
    %520 = vector.extract_strided_slice %509 {offsets = [0, 3, 0], sizes = [2, 1, 32], strides = [1, 1, 1]} : vector<2x4x32xf32> to vector<2x1x32xf32>
    %521 = vector.extract_strided_slice %509 {offsets = [0, 2, 0], sizes = [2, 1, 32], strides = [1, 1, 1]} : vector<2x4x32xf32> to vector<2x1x32xf32>
    %522 = vector.extract_strided_slice %509 {offsets = [0, 1, 0], sizes = [2, 1, 32], strides = [1, 1, 1]} : vector<2x4x32xf32> to vector<2x1x32xf32>
    %523 = vector.extract_strided_slice %509 {offsets = [0, 0, 0], sizes = [2, 1, 32], strides = [1, 1, 1]} : vector<2x4x32xf32> to vector<2x1x32xf32>
    %524 = tpu.concatenate %520, %521, %522, %523 in 1 : vector<2x1x32xf32>, vector<2x1x32xf32>, vector<2x1x32xf32>, vector<2x1x32xf32> -> vector<2x4x32xf32>
    %525 = tpu.concatenate %509, %524 in 2 : vector<2x4x32xf32>, vector<2x4x32xf32> -> vector<2x4x64xf32>
    %526 = vector.shape_cast %525 : vector<2x4x64xf32> to vector<8x64xf32>
    %cst_195 = arith.constant dense<0.000000e+00> : vector<8x128xf32>
    %527 = tpu.matmul %526, %515, %cst_195 {dimension_numbers = #tpu.dot_dimension_numbers<[1], [0], [0], [1], [0, 0, 1, 1], [], []>} : vector<8x64xf32>, vector<64x128xf32>, vector<8x128xf32> -> vector<8x128xf32>
    %528 = vector.broadcast %519 : vector<1x128xf32> to vector<8x128xf32>
    %529 = arith.addf %527, %528 : vector<8x128xf32>
    %530 = vector.shape_cast %529 : vector<8x128xf32> to vector<2x4x128xf32>
    %cst_196 = arith.constant 0.000000e+00 : f32
    %531 = vector.broadcast %cst_196 : f32 to vector<2x32xf32>
    %cst_197 = arith.constant 0.000000e+00 : f32
    %532 = vector.broadcast %cst_197 : f32 to vector<2x32xf32>
    %533 = vector.extract_strided_slice %530 {offsets = [0, 0, 0], sizes = [2, 1, 128], strides = [1, 1, 1]} : vector<2x4x128xf32> to vector<2x1x128xf32>
    %534 = vector.shape_cast %533 : vector<2x1x128xf32> to vector<2x128xf32>
    %cst_198 = arith.constant dense<0.000000e+00> : vector<2x128xf32>
    %535 = tpu.matmul %531, %517, %cst_198 {dimension_numbers = #tpu.dot_dimension_numbers<[1], [0], [0], [1], [0, 0, 1, 1], [], []>} : vector<2x32xf32>, vector<32x128xf32>, vector<2x128xf32> -> vector<2x128xf32>
    %536 = arith.addf %534, %535 : vector<2x128xf32>
    %537 = vector.extract_strided_slice %536 {offsets = [0, 0], sizes = [2, 32], strides = [1, 1]} : vector<2x128xf32> to vector<2x32xf32>
    %538 = arith.negf %537 : vector<2x32xf32>
    %539 = math.exp %538 : vector<2x32xf32>
    %cst_199 = arith.constant 1.000000e+00 : f32
    %540 = vector.broadcast %cst_199 : f32 to vector<2x32xf32>
    %541 = arith.addf %540, %539 : vector<2x32xf32>
    %542 = arith.divf %540, %541 : vector<2x32xf32>
    %543 = vector.extract_strided_slice %536 {offsets = [0, 32], sizes = [2, 32], strides = [1, 1]} : vector<2x128xf32> to vector<2x32xf32>
    %544 = arith.negf %543 : vector<2x32xf32>
    %545 = math.exp %544 : vector<2x32xf32>
    %cst_200 = arith.constant 1.000000e+00 : f32
    %546 = vector.broadcast %cst_200 : f32 to vector<2x32xf32>
    %547 = arith.addf %546, %545 : vector<2x32xf32>
    %548 = arith.divf %546, %547 : vector<2x32xf32>
    %549 = vector.extract_strided_slice %536 {offsets = [0, 64], sizes = [2, 32], strides = [1, 1]} : vector<2x128xf32> to vector<2x32xf32>
    %550 = math.tanh %549 : vector<2x32xf32>
    %551 = vector.extract_strided_slice %536 {offsets = [0, 96], sizes = [2, 32], strides = [1, 1]} : vector<2x128xf32> to vector<2x32xf32>
    %552 = arith.negf %551 : vector<2x32xf32>
    %553 = math.exp %552 : vector<2x32xf32>
    %cst_201 = arith.constant 1.000000e+00 : f32
    %554 = vector.broadcast %cst_201 : f32 to vector<2x32xf32>
    %555 = arith.addf %554, %553 : vector<2x32xf32>
    %556 = arith.divf %554, %555 : vector<2x32xf32>
    %557 = arith.mulf %548, %532 : vector<2x32xf32>
    %558 = arith.mulf %542, %550 : vector<2x32xf32>
    %559 = arith.addf %557, %558 : vector<2x32xf32>
    %560 = math.tanh %559 : vector<2x32xf32>
    %561 = arith.mulf %556, %560 : vector<2x32xf32>
    %562 = vector.extract_strided_slice %530 {offsets = [0, 1, 0], sizes = [2, 1, 128], strides = [1, 1, 1]} : vector<2x4x128xf32> to vector<2x1x128xf32>
    %563 = vector.shape_cast %562 : vector<2x1x128xf32> to vector<2x128xf32>
    %cst_202 = arith.constant dense<0.000000e+00> : vector<2x128xf32>
    %564 = tpu.matmul %561, %517, %cst_202 {dimension_numbers = #tpu.dot_dimension_numbers<[1], [0], [0], [1], [0, 0, 1, 1], [], []>} : vector<2x32xf32>, vector<32x128xf32>, vector<2x128xf32> -> vector<2x128xf32>
    %565 = arith.addf %563, %564 : vector<2x128xf32>
    %566 = vector.extract_strided_slice %565 {offsets = [0, 0], sizes = [2, 32], strides = [1, 1]} : vector<2x128xf32> to vector<2x32xf32>
    %567 = arith.negf %566 : vector<2x32xf32>
    %568 = math.exp %567 : vector<2x32xf32>
    %cst_203 = arith.constant 1.000000e+00 : f32
    %569 = vector.broadcast %cst_203 : f32 to vector<2x32xf32>
    %570 = arith.addf %569, %568 : vector<2x32xf32>
    %571 = arith.divf %569, %570 : vector<2x32xf32>
    %572 = vector.extract_strided_slice %565 {offsets = [0, 32], sizes = [2, 32], strides = [1, 1]} : vector<2x128xf32> to vector<2x32xf32>
    %573 = arith.negf %572 : vector<2x32xf32>
    %574 = math.exp %573 : vector<2x32xf32>
    %cst_204 = arith.constant 1.000000e+00 : f32
    %575 = vector.broadcast %cst_204 : f32 to vector<2x32xf32>
    %576 = arith.addf %575, %574 : vector<2x32xf32>
    %577 = arith.divf %575, %576 : vector<2x32xf32>
    %578 = vector.extract_strided_slice %565 {offsets = [0, 64], sizes = [2, 32], strides = [1, 1]} : vector<2x128xf32> to vector<2x32xf32>
    %579 = math.tanh %578 : vector<2x32xf32>
    %580 = vector.extract_strided_slice %565 {offsets = [0, 96], sizes = [2, 32], strides = [1, 1]} : vector<2x128xf32> to vector<2x32xf32>
    %581 = arith.negf %580 : vector<2x32xf32>
    %582 = math.exp %581 : vector<2x32xf32>
    %cst_205 = arith.constant 1.000000e+00 : f32
    %583 = vector.broadcast %cst_205 : f32 to vector<2x32xf32>
    %584 = arith.addf %583, %582 : vector<2x32xf32>
    %585 = arith.divf %583, %584 : vector<2x32xf32>
    %586 = arith.mulf %577, %559 : vector<2x32xf32>
    %587 = arith.mulf %571, %579 : vector<2x32xf32>
    %588 = arith.addf %586, %587 : vector<2x32xf32>
    %589 = math.tanh %588 : vector<2x32xf32>
    %590 = arith.mulf %585, %589 : vector<2x32xf32>
    %591 = vector.extract_strided_slice %530 {offsets = [0, 2, 0], sizes = [2, 1, 128], strides = [1, 1, 1]} : vector<2x4x128xf32> to vector<2x1x128xf32>
    %592 = vector.shape_cast %591 : vector<2x1x128xf32> to vector<2x128xf32>
    %cst_206 = arith.constant dense<0.000000e+00> : vector<2x128xf32>
    %593 = tpu.matmul %590, %517, %cst_206 {dimension_numbers = #tpu.dot_dimension_numbers<[1], [0], [0], [1], [0, 0, 1, 1], [], []>} : vector<2x32xf32>, vector<32x128xf32>, vector<2x128xf32> -> vector<2x128xf32>
    %594 = arith.addf %592, %593 : vector<2x128xf32>
    %595 = vector.extract_strided_slice %594 {offsets = [0, 0], sizes = [2, 32], strides = [1, 1]} : vector<2x128xf32> to vector<2x32xf32>
    %596 = arith.negf %595 : vector<2x32xf32>
    %597 = math.exp %596 : vector<2x32xf32>
    %cst_207 = arith.constant 1.000000e+00 : f32
    %598 = vector.broadcast %cst_207 : f32 to vector<2x32xf32>
    %599 = arith.addf %598, %597 : vector<2x32xf32>
    %600 = arith.divf %598, %599 : vector<2x32xf32>
    %601 = vector.extract_strided_slice %594 {offsets = [0, 32], sizes = [2, 32], strides = [1, 1]} : vector<2x128xf32> to vector<2x32xf32>
    %602 = arith.negf %601 : vector<2x32xf32>
    %603 = math.exp %602 : vector<2x32xf32>
    %cst_208 = arith.constant 1.000000e+00 : f32
    %604 = vector.broadcast %cst_208 : f32 to vector<2x32xf32>
    %605 = arith.addf %604, %603 : vector<2x32xf32>
    %606 = arith.divf %604, %605 : vector<2x32xf32>
    %607 = vector.extract_strided_slice %594 {offsets = [0, 64], sizes = [2, 32], strides = [1, 1]} : vector<2x128xf32> to vector<2x32xf32>
    %608 = math.tanh %607 : vector<2x32xf32>
    %609 = vector.extract_strided_slice %594 {offsets = [0, 96], sizes = [2, 32], strides = [1, 1]} : vector<2x128xf32> to vector<2x32xf32>
    %610 = arith.negf %609 : vector<2x32xf32>
    %611 = math.exp %610 : vector<2x32xf32>
    %cst_209 = arith.constant 1.000000e+00 : f32
    %612 = vector.broadcast %cst_209 : f32 to vector<2x32xf32>
    %613 = arith.addf %612, %611 : vector<2x32xf32>
    %614 = arith.divf %612, %613 : vector<2x32xf32>
    %615 = arith.mulf %606, %588 : vector<2x32xf32>
    %616 = arith.mulf %600, %608 : vector<2x32xf32>
    %617 = arith.addf %615, %616 : vector<2x32xf32>
    %618 = math.tanh %617 : vector<2x32xf32>
    %619 = arith.mulf %614, %618 : vector<2x32xf32>
    %620 = vector.extract_strided_slice %530 {offsets = [0, 3, 0], sizes = [2, 1, 128], strides = [1, 1, 1]} : vector<2x4x128xf32> to vector<2x1x128xf32>
    %621 = vector.shape_cast %620 : vector<2x1x128xf32> to vector<2x128xf32>
    %cst_210 = arith.constant dense<0.000000e+00> : vector<2x128xf32>
    %622 = tpu.matmul %619, %517, %cst_210 {dimension_numbers = #tpu.dot_dimension_numbers<[1], [0], [0], [1], [0, 0, 1, 1], [], []>} : vector<2x32xf32>, vector<32x128xf32>, vector<2x128xf32> -> vector<2x128xf32>
    %623 = arith.addf %621, %622 : vector<2x128xf32>
    %624 = vector.extract_strided_slice %623 {offsets = [0, 0], sizes = [2, 32], strides = [1, 1]} : vector<2x128xf32> to vector<2x32xf32>
    %625 = arith.negf %624 : vector<2x32xf32>
    %626 = math.exp %625 : vector<2x32xf32>
    %cst_211 = arith.constant 1.000000e+00 : f32
    %627 = vector.broadcast %cst_211 : f32 to vector<2x32xf32>
    %628 = arith.addf %627, %626 : vector<2x32xf32>
    %629 = arith.divf %627, %628 : vector<2x32xf32>
    %630 = vector.extract_strided_slice %623 {offsets = [0, 32], sizes = [2, 32], strides = [1, 1]} : vector<2x128xf32> to vector<2x32xf32>
    %631 = arith.negf %630 : vector<2x32xf32>
    %632 = math.exp %631 : vector<2x32xf32>
    %cst_212 = arith.constant 1.000000e+00 : f32
    %633 = vector.broadcast %cst_212 : f32 to vector<2x32xf32>
    %634 = arith.addf %633, %632 : vector<2x32xf32>
    %635 = arith.divf %633, %634 : vector<2x32xf32>
    %636 = vector.extract_strided_slice %623 {offsets = [0, 64], sizes = [2, 32], strides = [1, 1]} : vector<2x128xf32> to vector<2x32xf32>
    %637 = math.tanh %636 : vector<2x32xf32>
    %638 = vector.extract_strided_slice %623 {offsets = [0, 96], sizes = [2, 32], strides = [1, 1]} : vector<2x128xf32> to vector<2x32xf32>
    %639 = arith.negf %638 : vector<2x32xf32>
    %640 = math.exp %639 : vector<2x32xf32>
    %cst_213 = arith.constant 1.000000e+00 : f32
    %641 = vector.broadcast %cst_213 : f32 to vector<2x32xf32>
    %642 = arith.addf %641, %640 : vector<2x32xf32>
    %643 = arith.divf %641, %642 : vector<2x32xf32>
    %644 = arith.mulf %635, %617 : vector<2x32xf32>
    %645 = arith.mulf %629, %637 : vector<2x32xf32>
    %646 = arith.addf %644, %645 : vector<2x32xf32>
    %647 = math.tanh %646 : vector<2x32xf32>
    %648 = arith.mulf %643, %647 : vector<2x32xf32>
    %649 = vector.extract_strided_slice %561 {offsets = [0, 0], sizes = [2, 16], strides = [1, 1]} : vector<2x32xf32> to vector<2x16xf32>
    %650 = vector.extract_strided_slice %648 {offsets = [0, 16], sizes = [2, 16], strides = [1, 1]} : vector<2x32xf32> to vector<2x16xf32>
    %651 = tpu.concatenate %649, %650 in 1 : vector<2x16xf32>, vector<2x16xf32> -> vector<2x32xf32>
    %652 = vector.extract_strided_slice %590 {offsets = [0, 0], sizes = [2, 16], strides = [1, 1]} : vector<2x32xf32> to vector<2x16xf32>
    %653 = vector.extract_strided_slice %619 {offsets = [0, 16], sizes = [2, 16], strides = [1, 1]} : vector<2x32xf32> to vector<2x16xf32>
    %654 = tpu.concatenate %652, %653 in 1 : vector<2x16xf32>, vector<2x16xf32> -> vector<2x32xf32>
    %655 = vector.extract_strided_slice %619 {offsets = [0, 0], sizes = [2, 16], strides = [1, 1]} : vector<2x32xf32> to vector<2x16xf32>
    %656 = vector.extract_strided_slice %590 {offsets = [0, 16], sizes = [2, 16], strides = [1, 1]} : vector<2x32xf32> to vector<2x16xf32>
    %657 = tpu.concatenate %655, %656 in 1 : vector<2x16xf32>, vector<2x16xf32> -> vector<2x32xf32>
    %658 = vector.extract_strided_slice %648 {offsets = [0, 0], sizes = [2, 16], strides = [1, 1]} : vector<2x32xf32> to vector<2x16xf32>
    %659 = vector.extract_strided_slice %561 {offsets = [0, 16], sizes = [2, 16], strides = [1, 1]} : vector<2x32xf32> to vector<2x16xf32>
    %660 = tpu.concatenate %658, %659 in 1 : vector<2x16xf32>, vector<2x16xf32> -> vector<2x32xf32>
    %661 = vector.shape_cast %651 : vector<2x32xf32> to vector<2x1x32xf32>
    %662 = vector.shape_cast %654 : vector<2x32xf32> to vector<2x1x32xf32>
    %663 = vector.shape_cast %657 : vector<2x32xf32> to vector<2x1x32xf32>
    %664 = vector.shape_cast %660 : vector<2x32xf32> to vector<2x1x32xf32>
    %665 = tpu.concatenate %661, %662, %663, %664 in 1 : vector<2x1x32xf32>, vector<2x1x32xf32>, vector<2x1x32xf32>, vector<2x1x32xf32> -> vector<2x4x32xf32>
    %666 = vector.extract_strided_slice %648 {offsets = [0, 0], sizes = [2, 16], strides = [1, 1]} : vector<2x32xf32> to vector<2x16xf32>
    %667 = vector.extract_strided_slice %648 {offsets = [0, 16], sizes = [2, 16], strides = [1, 1]} : vector<2x32xf32> to vector<2x16xf32>
    %668 = vector.extract_strided_slice %646 {offsets = [0, 0], sizes = [2, 16], strides = [1, 1]} : vector<2x32xf32> to vector<2x16xf32>
    %669 = vector.extract_strided_slice %646 {offsets = [0, 16], sizes = [2, 16], strides = [1, 1]} : vector<2x32xf32> to vector<2x16xf32>
    %c0_214 = arith.constant 0 : index
    %c0_215 = arith.constant 0 : index
    %c0_216 = arith.constant 0 : index
    %670 = vector.load %arg21[%c0_214, %c0_215, %c0_216] : memref<2x4x32xf32, #tpu.memory_space<vmem>>, vector<2x4x32xf32>
    tpu.vector_store %arg21[%c0_214, %c0_215, %c0_216], %665 {strides = array<i32>} : memref<2x4x32xf32, #tpu.memory_space<vmem>>, vector<2x4x32xf32>,
    %671 = vector.shape_cast %510 : vector<2x16xf32> to vector<2x1x16xf32>
    %672 = vector.shape_cast %511 : vector<2x16xf32> to vector<2x1x16xf32>
    %673 = vector.shape_cast %666 : vector<2x16xf32> to vector<2x1x16xf32>
    %674 = vector.shape_cast %667 : vector<2x16xf32> to vector<2x1x16xf32>
    %675 = tpu.concatenate %671, %672, %673, %674 in 1 : vector<2x1x16xf32>, vector<2x1x16xf32>, vector<2x1x16xf32>, vector<2x1x16xf32> -> vector<2x4x16xf32>
    %c0_217 = arith.constant 0 : index
    %c0_218 = arith.constant 0 : index
    %c0_219 = arith.constant 0 : index
    %676 = vector.load %arg22[%c0_217, %c0_218, %c0_219] : memref<2x4x16xf32, #tpu.memory_space<vmem>>, vector<2x4x16xf32>
    tpu.vector_store %arg22[%c0_217, %c0_218, %c0_219], %675 {strides = array<i32>} : memref<2x4x16xf32, #tpu.memory_space<vmem>>, vector<2x4x16xf32>,
    %677 = vector.shape_cast %512 : vector<2x16xf32> to vector<2x1x16xf32>
    %678 = vector.shape_cast %513 : vector<2x16xf32> to vector<2x1x16xf32>
    %679 = vector.shape_cast %668 : vector<2x16xf32> to vector<2x1x16xf32>
    %680 = vector.shape_cast %669 : vector<2x16xf32> to vector<2x1x16xf32>
    %681 = tpu.concatenate %677, %678, %679, %680 in 1 : vector<2x1x16xf32>, vector<2x1x16xf32>, vector<2x1x16xf32>, vector<2x1x16xf32> -> vector<2x4x16xf32>
    %c0_220 = arith.constant 0 : index
    %c0_221 = arith.constant 0 : index
    %c0_222 = arith.constant 0 : index
    %682 = vector.load %arg23[%c0_220, %c0_221, %c0_222] : memref<2x4x16xf32, #tpu.memory_space<vmem>>, vector<2x4x16xf32>
    tpu.vector_store %arg23[%c0_220, %c0_221, %c0_222], %681 {strides = array<i32>} : memref<2x4x16xf32, #tpu.memory_space<vmem>>, vector<2x4x16xf32>,
    return
  }
  func.func @transform_0(%arg0: i32) -> (i32, i32, i32) {
    %c0_i32 = arith.constant 0 : i32
    %c0_i32_0 = arith.constant 0 : i32
    %c0_i32_1 = arith.constant 0 : i32
    return %arg0, %c0_i32, %c0_i32_0 : i32, i32, i32
  }
  func.func @transform_1(%arg0: i32) -> (i32, i32) {
    %c0_i32 = arith.constant 0 : i32
    %c0_i32_0 = arith.constant 0 : i32
    %c0_i32_1 = arith.constant 0 : i32
    return %c0_i32, %c0_i32_0 : i32, i32
  }
  func.func @transform_2(%arg0: i32) -> (i32, i32) {
    %c0_i32 = arith.constant 0 : i32
    %c0_i32_0 = arith.constant 0 : i32
    %c0_i32_1 = arith.constant 0 : i32
    return %c0_i32, %c0_i32_0 : i32, i32
  }
  func.func @transform_3(%arg0: i32) -> (i32, i32) {
    %c0_i32 = arith.constant 0 : i32
    %c0_i32_0 = arith.constant 0 : i32
    %c0_i32_1 = arith.constant 0 : i32
    return %c0_i32, %c0_i32_0 : i32, i32
  }
  func.func @transform_4(%arg0: i32) -> (i32, i32) {
    %c0_i32 = arith.constant 0 : i32
    %c0_i32_0 = arith.constant 0 : i32
    %c0_i32_1 = arith.constant 0 : i32
    return %c0_i32, %c0_i32_0 : i32, i32
  }
  func.func @transform_5(%arg0: i32) -> (i32, i32, i32) {
    %c0_i32 = arith.constant 0 : i32
    %c0_i32_0 = arith.constant 0 : i32
    %c0_i32_1 = arith.constant 0 : i32
    %c0_i32_2 = arith.constant 0 : i32
    return %c0_i32, %c0_i32_0, %c0_i32_1 : i32, i32, i32
  }
  func.func @transform_6(%arg0: i32) -> (i32, i32, i32) {
    %c0_i32 = arith.constant 0 : i32
    %c0_i32_0 = arith.constant 0 : i32
    %c0_i32_1 = arith.constant 0 : i32
    %c0_i32_2 = arith.constant 0 : i32
    return %c0_i32, %c0_i32_0, %c0_i32_1 : i32, i32, i32
  }
  func.func @transform_7(%arg0: i32) -> (i32, i32, i32) {
    %c0_i32 = arith.constant 0 : i32
    %c0_i32_0 = arith.constant 0 : i32
    %c0_i32_1 = arith.constant 0 : i32
    %c0_i32_2 = arith.constant 0 : i32
    return %c0_i32, %c0_i32_0, %c0_i32_1 : i32, i32, i32
  }
  func.func @transform_8(%arg0: i32) -> (i32, i32, i32) {
    %c0_i32 = arith.constant 0 : i32
    %c0_i32_0 = arith.constant 0 : i32
    %c0_i32_1 = arith.constant 0 : i32
    %c0_i32_2 = arith.constant 0 : i32
    return %c0_i32, %c0_i32_0, %c0_i32_1 : i32, i32, i32
  }
  func.func @transform_9(%arg0: i32) -> (i32, i32, i32) {
    %c0_i32 = arith.constant 0 : i32
    %c0_i32_0 = arith.constant 0 : i32
    %c0_i32_1 = arith.constant 0 : i32
    %c0_i32_2 = arith.constant 0 : i32
    return %c0_i32, %c0_i32_0, %c0_i32_1 : i32, i32, i32
  }
  func.func @transform_10(%arg0: i32) -> (i32, i32, i32) {
    %c0_i32 = arith.constant 0 : i32
    %c0_i32_0 = arith.constant 0 : i32
    %c0_i32_1 = arith.constant 0 : i32
    %c0_i32_2 = arith.constant 0 : i32
    return %c0_i32, %c0_i32_0, %c0_i32_1 : i32, i32, i32
  }
  func.func @transform_11(%arg0: i32) -> (i32, i32, i32) {
    %c0_i32 = arith.constant 0 : i32
    %c0_i32_0 = arith.constant 0 : i32
    %c0_i32_1 = arith.constant 0 : i32
    %c0_i32_2 = arith.constant 0 : i32
    return %c0_i32, %c0_i32_0, %c0_i32_1 : i32, i32, i32
  }
  func.func @transform_12(%arg0: i32) -> (i32, i32, i32) {
    %c0_i32 = arith.constant 0 : i32
    %c0_i32_0 = arith.constant 0 : i32
    %c0_i32_1 = arith.constant 0 : i32
    %c0_i32_2 = arith.constant 0 : i32
    return %c0_i32, %c0_i32_0, %c0_i32_1 : i32, i32, i32
  }
  func.func @transform_13(%arg0: i32) -> (i32, i32, i32) {
    %c0_i32 = arith.constant 0 : i32
    %c0_i32_0 = arith.constant 0 : i32
    %c0_i32_1 = arith.constant 0 : i32
    %c0_i32_2 = arith.constant 0 : i32
    return %c0_i32, %c0_i32_0, %c0_i32_1 : i32, i32, i32
  }
  func.func @transform_14(%arg0: i32) -> (i32, i32, i32) {
    %c0_i32 = arith.constant 0 : i32
    %c0_i32_0 = arith.constant 0 : i32
    %c0_i32_1 = arith.constant 0 : i32
    %c0_i32_2 = arith.constant 0 : i32
    return %c0_i32, %c0_i32_0, %c0_i32_1 : i32, i32, i32
  }
  func.func @transform_15(%arg0: i32) -> (i32, i32, i32) {
    %c0_i32 = arith.constant 0 : i32
    %c0_i32_0 = arith.constant 0 : i32
    %c0_i32_1 = arith.constant 0 : i32
    %c0_i32_2 = arith.constant 0 : i32
    return %c0_i32, %c0_i32_0, %c0_i32_1 : i32, i32, i32
  }
  func.func @transform_16(%arg0: i32) -> (i32, i32, i32) {
    %c0_i32 = arith.constant 0 : i32
    %c0_i32_0 = arith.constant 0 : i32
    %c0_i32_1 = arith.constant 0 : i32
    %c0_i32_2 = arith.constant 0 : i32
    return %c0_i32, %c0_i32_0, %c0_i32_1 : i32, i32, i32
  }
  func.func @transform_17(%arg0: i32) -> (i32, i32, i32) {
    %c0_i32 = arith.constant 0 : i32
    %c0_i32_0 = arith.constant 0 : i32
    %c0_i32_1 = arith.constant 0 : i32
    %c0_i32_2 = arith.constant 0 : i32
    return %c0_i32, %c0_i32_0, %c0_i32_1 : i32, i32, i32
  }
  func.func @transform_18(%arg0: i32) -> (i32, i32, i32) {
    %c0_i32 = arith.constant 0 : i32
    %c0_i32_0 = arith.constant 0 : i32
    %c0_i32_1 = arith.constant 0 : i32
    %c0_i32_2 = arith.constant 0 : i32
    return %c0_i32, %c0_i32_0, %c0_i32_1 : i32, i32, i32
  }
  func.func @transform_19(%arg0: i32) -> (i32, i32, i32) {
    %c0_i32 = arith.constant 0 : i32
    %c0_i32_0 = arith.constant 0 : i32
    %c0_i32_1 = arith.constant 0 : i32
    %c0_i32_2 = arith.constant 0 : i32
    return %c0_i32, %c0_i32_0, %c0_i32_1 : i32, i32, i32
  }
  func.func @transform_20(%arg0: i32) -> (i32, i32, i32) {
    %c0_i32 = arith.constant 0 : i32
    %c0_i32_0 = arith.constant 0 : i32
    %c0_i32_1 = arith.constant 0 : i32
    return %arg0, %c0_i32, %c0_i32_0 : i32, i32, i32
  }
  func.func @transform_21(%arg0: i32) -> (i32, i32, i32) {
    %c0_i32 = arith.constant 0 : i32
    %c0_i32_0 = arith.constant 0 : i32
    %c0_i32_1 = arith.constant 0 : i32
    return %arg0, %c0_i32, %c0_i32_0 : i32, i32, i32
  }
  func.func @transform_22(%arg0: i32) -> (i32, i32, i32) {
    %c0_i32 = arith.constant 0 : i32
    %c0_i32_0 = arith.constant 0 : i32
    %c0_i32_1 = arith.constant 0 : i32
    return %arg0, %c0_i32, %c0_i32_0 : i32, i32, i32
  }
}

</mosaic_0001>

<llo_original>
// kernel: vit_encoder_forward.1
$region0: #{vit_encoder_forward.1}
  #allocation0 [shape = 'u32[]', space=smem, size = 0x4, offset = 0x4, fixed_abs, tag = 'smem constant byte address 0x4 - core index']
  #allocation1 [shape = 'u32[72,128]{1,0:T(1,128)}', space=vmem, size = 0x9000, scoped, tag = 'internal scratch']
  %s0 = inlined_call_operand.vmem [shape: f32[4,16,48], index: 0, kind: input, shape index: {}]
  %s1 = inlined_call_operand.vmem [shape: f32[48,32], index: 1, kind: input, shape index: {}]
  %s2 = inlined_call_operand.vmem [shape: f32[1,32], index: 2, kind: input, shape index: {}]
  %s3 = inlined_call_operand.vmem [shape: f32[32,32], index: 3, kind: input, shape index: {}]
  %s4 = inlined_call_operand.vmem [shape: f32[8,32], index: 4, kind: input, shape index: {}]
  %s5 = inlined_call_operand.vmem [shape: f32[2,32,96], index: 5, kind: input, shape index: {}]
  %s6 = inlined_call_operand.vmem [shape: f32[2,1,96], index: 6, kind: input, shape index: {}]
  %s7 = inlined_call_operand.vmem [shape: f32[2,32,32], index: 7, kind: input, shape index: {}]
  %s8 = inlined_call_operand.vmem [shape: f32[2,1,32], index: 8, kind: input, shape index: {}]
  %s9 = inlined_call_operand.vmem [shape: f32[2,1,32], index: 9, kind: input, shape index: {}]
  %s10 = inlined_call_operand.vmem [shape: f32[2,1,32], index: 10, kind: input, shape index: {}]
  %s11 = inlined_call_operand.vmem [shape: f32[2,32,128], index: 11, kind: input, shape index: {}]
  %s12 = inlined_call_operand.vmem [shape: f32[2,1,128], index: 12, kind: input, shape index: {}]
  %s13 = inlined_call_operand.vmem [shape: f32[2,128,32], index: 13, kind: input, shape index: {}]
  %s14 = inlined_call_operand.vmem [shape: f32[2,1,32], index: 14, kind: input, shape index: {}]
  %s15 = inlined_call_operand.vmem [shape: f32[2,1,32], index: 15, kind: input, shape index: {}]
  %s16 = inlined_call_operand.vmem [shape: f32[2,1,32], index: 16, kind: input, shape index: {}]
  %s17 = inlined_call_operand.vmem [shape: f32[2,64,128], index: 17, kind: input, shape index: {}]
  %s18 = inlined_call_operand.vmem [shape: f32[2,32,128], index: 18, kind: input, shape index: {}]
  %s19 = inlined_call_operand.vmem [shape: f32[2,1,128], index: 19, kind: input, shape index: {}]
  %s20 = inlined_call_operand.hbm [shape: f32[4,4,32], index: 20, kind: output, shape index: {0}]
  %s21 = inlined_call_operand.vmem [shape: f32[4,4,16], index: 21, kind: output, shape index: {1}]
  %s22 = inlined_call_operand.vmem [shape: f32[4,4,16], index: 22, kind: output, shape index: {2}]
  %23 = xla_tuple %s20, %s21, %s22
  %s24 = sld [smem:[#allocation0]]
  $region129: #{vit_encoder_forward.1} parent=0
    _
  %s26 = ssub.s32 1, %s24
  %s27 = scalar_select 0, %s26, %s24
  $region1: #{vit_encoder_forward.1} parent=0
    #allocation2 [shape = 'u8[8192]{0}', space=vmem, size = 0x2000, scoped, tag = 'output window, operand 0']
    #allocation3 [shape = 's32[2]{0}', space=sflag, size = 0x8, scoped, tag = 'scoped memory for vit_encoder_forward.1']
    %28 = vsyncpa [#allocation3], 0
    %s29 = scalar_lea.sflag [#allocation3], 1
    %30 = vsyncpa %s29, 0
    loop: start=0, step=1, limit=4
    $region2: #{vit_encoder_forward.1} parent=1 // loop_pre_header
      _
    $region3: #{vit_encoder_forward.1} parent=1 // loop_header
      %s32 = sphi 0, %s36
      %p33 = scmp.ge.s32.totalorder %s32, 4
      %s42 = sphi 0, %s44
      %s45 = sphi 0, %s42
      %s46 = sphi 0, %s45
      %s62 = sphi 0, %s46
      %s66 = sphi 0, %s66
      %s68 = sphi 0, %s66
      %s69 = sphi 0, %s68
      %s83 = sphi 0, %s69
      %s87 = sphi 0, %s87
      %s89 = sphi 0, %s87
      %s90 = sphi 0, %s89
      %s104 = sphi 0, %s90
      %s108 = sphi 0, %s108
      %s110 = sphi 0, %s108
      %s111 = sphi 0, %s110
      %s125 = sphi 0, %s111
      %s129 = sphi 0, %s129
      %s131 = sphi 0, %s129
      %s132 = sphi 0, %s131
      %s146 = sphi 0, %s132
      %s150 = sphi 0, %s150
      %s152 = sphi 0, %s150
      %s153 = sphi 0, %s152
      %s167 = sphi 0, %s153
      %s171 = sphi 0, %s171
      %s173 = sphi 0, %s171
      %s174 = sphi 0, %s173
      %s188 = sphi 0, %s174
      %s192 = sphi 0, %s192
      %s194 = sphi 0, %s192
      %s195 = sphi 0, %s194
      %s209 = sphi 0, %s195
      %s213 = sphi 0, %s213
      %s215 = sphi 0, %s213
      %s216 = sphi 0, %s215
      %s230 = sphi 0, %s216
      %s234 = sphi 0, %s234
      %s236 = sphi 0, %s234
      %s237 = sphi 0, %s236
      %s251 = sphi 0, %s237
      %s255 = sphi 0, %s255
      %s257 = sphi 0, %s255
      %s258 = sphi 0, %s257
      %s272 = sphi 0, %s258
      %s276 = sphi 0, %s276
      %s278 = sphi 0, %s276
      %s279 = sphi 0, %s278
      %s293 = sphi 0, %s279
      %s297 = sphi 0, %s297
      %s299 = sphi 0, %s297
      %s300 = sphi 0, %s299
      %s314 = sphi 0, %s300
      %s318 = sphi 0, %s318
      %s320 = sphi 0, %s318
      %s321 = sphi 0, %s320
      %s335 = sphi 0, %s321
      %s339 = sphi 0, %s339
      %s341 = sphi 0, %s339
      %s342 = sphi 0, %s341
      %s356 = sphi 0, %s342
      %s360 = sphi 0, %s360
      %s362 = sphi 0, %s360
      %s363 = sphi 0, %s362
      %s377 = sphi 0, %s363
      %s381 = sphi 0, %s381
      %s383 = sphi 0, %s381
      %s384 = sphi 0, %s383
      %s398 = sphi 0, %s384
      %s402 = sphi 0, %s402
      %s404 = sphi 0, %s402
      %s405 = sphi 0, %s404
      %s419 = sphi 0, %s405
      %s423 = sphi 0, %s423
      %s425 = sphi 0, %s423
      %s426 = sphi 0, %s425
      %s440 = sphi 0, %s426
      %s444 = sphi 0, %s444
      %s446 = sphi 0, %s444
      %s447 = sphi 0, %s446
      %s461 = sphi 0, %s447
      %s467 = sphi 0, %s469
      %s470 = sphi 0, %s467
      %s471 = sphi 0, %s470
      %s487 = sphi 0, %s471
      %s493 = sphi 0, %s495
      %s496 = sphi 0, %s493
      %s497 = sphi 0, %s496
      %s513 = sphi 0, %s497
      %s519 = sphi 0, %s521
      %s522 = sphi 0, %s519
      %s523 = sphi 0, %s522
      %s539 = sphi 0, %s523
    $region4: #{vit_encoder_forward.1} parent=1 // loop_header_branch
      %35 = sbr.rel (%p33) target = $region8
    $region5: #{vit_encoder_forward.1} parent=1 // loop_body
      %s37 = ssub.s32 %s32, 1
      %s38 = ssub.s32 %s32, 2
      %s39 = sadd.s32 %s32, 1
      %s40 = ssub.s32 %s32, %s39
      %p41 = scmp.eq.s32.totalorder %s40, 0
      %s43 = sadd.s32 %s42, 1
      %s44 = scalar_select %p41, %s42, %s43
      %p47 = pneg %p41
      %p48 = scmp.eq.s32.totalorder %s32, 1
      %p49 = por %p47, %p48
      %p50 = scmp.ne.s32.totalorder %s42, %s45
      %p51 = scmp.eq.s32.totalorder %s32, 0
      %p52 = por %p50, %p51
      %p53 = scmp.ne.s32.totalorder %s42, %s45
      %p54 = scmp.eq.s32.totalorder %s37, 1
      %p55 = por %p53, %p54
      %p56 = scmp.ne.s32.totalorder %s45, %s46
      %p57 = scmp.eq.s32.totalorder %s37, 0
      %p58 = por %p56, %p57
      %p59 = scmp.ne.s32.totalorder %s45, %s46
      %p60 = scmp.eq.s32.totalorder %s38, 1
      %p61 = por %p59, %p60
      %p63 = scmp.ne.s32.totalorder %s46, %s62
      %p64 = scmp.eq.s32.totalorder %s38, 0
      %p65 = por %p63, %p64
      %s67 = sadd.s32 %s66, 1
      %p70 = scmp.eq.s32.totalorder %s32, 1
      %p71 = scmp.ne.s32.totalorder %s66, %s68
      %p72 = scmp.eq.s32.totalorder %s32, 0
      %p73 = por %p71, %p72
      %p74 = scmp.ne.s32.totalorder %s66, %s68
      %p75 = scmp.eq.s32.totalorder %s37, 1
      %p76 = por %p74, %p75
      %p77 = scmp.ne.s32.totalorder %s68, %s69
      %p78 = scmp.eq.s32.totalorder %s37, 0
      %p79 = por %p77, %p78
      %p80 = scmp.ne.s32.totalorder %s68, %s69
      %p81 = scmp.eq.s32.totalorder %s38, 1
      %p82 = por %p80, %p81
      %p84 = scmp.ne.s32.totalorder %s69, %s83
      %p85 = scmp.eq.s32.totalorder %s38, 0
      %p86 = por %p84, %p85
      %s88 = sadd.s32 %s87, 1
      %p91 = scmp.eq.s32.totalorder %s32, 1
      %p92 = scmp.ne.s32.totalorder %s87, %s89
      %p93 = scmp.eq.s32.totalorder %s32, 0
      %p94 = por %p92, %p93
      %p95 = scmp.ne.s32.totalorder %s87, %s89
      %p96 = scmp.eq.s32.totalorder %s37, 1
      %p97 = por %p95, %p96
      %p98 = scmp.ne.s32.totalorder %s89, %s90
      %p99 = scmp.eq.s32.totalorder %s37, 0
      %p100 = por %p98, %p99
      %p101 = scmp.ne.s32.totalorder %s89, %s90
      %p102 = scmp.eq.s32.totalorder %s38, 1
      %p103 = por %p101, %p102
      %p105 = scmp.ne.s32.totalorder %s90, %s104
      %p106 = scmp.eq.s32.totalorder %s38, 0
      %p107 = por %p105, %p106
      %s109 = sadd.s32 %s108, 1
      %p112 = scmp.eq.s32.totalorder %s32, 1
      %p113 = scmp.ne.s32.totalorder %s108, %s110
      %p114 = scmp.eq.s32.totalorder %s32, 0
      %p115 = por %p113, %p114
      %p116 = scmp.ne.s32.totalorder %s108, %s110
      %p117 = scmp.eq.s32.totalorder %s37, 1
      %p118 = por %p116, %p117
      %p119 = scmp.ne.s32.totalorder %s110, %s111
      %p120 = scmp.eq.s32.totalorder %s37, 0
      %p121 = por %p119, %p120
      %p122 = scmp.ne.s32.totalorder %s110, %s111
      %p123 = scmp.eq.s32.totalorder %s38, 1
      %p124 = por %p122, %p123
      %p126 = scmp.ne.s32.totalorder %s111, %s125
      %p127 = scmp.eq.s32.totalorder %s38, 0
      %p128 = por %p126, %p127
      %s130 = sadd.s32 %s129, 1
      %p133 = scmp.eq.s32.totalorder %s32, 1
      %p134 = scmp.ne.s32.totalorder %s129, %s131
      %p135 = scmp.eq.s32.totalorder %s32, 0
      %p136 = por %p134, %p135
      %p137 = scmp.ne.s32.totalorder %s129, %s131
      %p138 = scmp.eq.s32.totalorder %s37, 1
      %p139 = por %p137, %p138
      %p140 = scmp.ne.s32.totalorder %s131, %s132
      %p141 = scmp.eq.s32.totalorder %s37, 0
      %p142 = por %p140, %p141
      %p143 = scmp.ne.s32.totalorder %s131, %s132
      %p144 = scmp.eq.s32.totalorder %s38, 1
      %p145 = por %p143, %p144
      %p147 = scmp.ne.s32.totalorder %s132, %s146
      %p148 = scmp.eq.s32.totalorder %s38, 0
      %p149 = por %p147, %p148
      %s151 = sadd.s32 %s150, 1
      %p154 = scmp.eq.s32.totalorder %s32, 1
      %p155 = scmp.ne.s32.totalorder %s150, %s152
      %p156 = scmp.eq.s32.totalorder %s32, 0
      %p157 = por %p155, %p156
      %p158 = scmp.ne.s32.totalorder %s150, %s152
      %p159 = scmp.eq.s32.totalorder %s37, 1
      %p160 = por %p158, %p159
      %p161 = scmp.ne.s32.totalorder %s152, %s153
      %p162 = scmp.eq.s32.totalorder %s37, 0
      %p163 = por %p161, %p162
      %p164 = scmp.ne.s32.totalorder %s152, %s153
      %p165 = scmp.eq.s32.totalorder %s38, 1
      %p166 = por %p164, %p165
      %p168 = scmp.ne.s32.totalorder %s153, %s167
      %p169 = scmp.eq.s32.totalorder %s38, 0
      %p170 = por %p168, %p169
      %s172 = sadd.s32 %s171, 1
      %p175 = scmp.eq.s32.totalorder %s32, 1
      %p176 = scmp.ne.s32.totalorder %s171, %s173
      %p177 = scmp.eq.s32.totalorder %s32, 0
      %p178 = por %p176, %p177
      %p179 = scmp.ne.s32.totalorder %s171, %s173
      %p180 = scmp.eq.s32.totalorder %s37, 1
      %p181 = por %p179, %p180
      %p182 = scmp.ne.s32.totalorder %s173, %s174
      %p183 = scmp.eq.s32.totalorder %s37, 0
      %p184 = por %p182, %p183
      %p185 = scmp.ne.s32.totalorder %s173, %s174
      %p186 = scmp.eq.s32.totalorder %s38, 1
      %p187 = por %p185, %p186
      %p189 = scmp.ne.s32.totalorder %s174, %s188
      %p190 = scmp.eq.s32.totalorder %s38, 0
      %p191 = por %p189, %p190
      %s193 = sadd.s32 %s192, 1
      %p196 = scmp.eq.s32.totalorder %s32, 1
      %p197 = scmp.ne.s32.totalorder %s192, %s194
      %p198 = scmp.eq.s32.totalorder %s32, 0
      %p199 = por %p197, %p198
      %p200 = scmp.ne.s32.totalorder %s192, %s194
      %p201 = scmp.eq.s32.totalorder %s37, 1
      %p202 = por %p200, %p201
      %p203 = scmp.ne.s32.totalorder %s194, %s195
      %p204 = scmp.eq.s32.totalorder %s37, 0
      %p205 = por %p203, %p204
      %p206 = scmp.ne.s32.totalorder %s194, %s195
      %p207 = scmp.eq.s32.totalorder %s38, 1
      %p208 = por %p206, %p207
      %p210 = scmp.ne.s32.totalorder %s195, %s209
      %p211 = scmp.eq.s32.totalorder %s38, 0
      %p212 = por %p210, %p211
      %s214 = sadd.s32 %s213, 1
      %p217 = scmp.eq.s32.totalorder %s32, 1
      %p218 = scmp.ne.s32.totalorder %s213, %s215
      %p219 = scmp.eq.s32.totalorder %s32, 0
      %p220 = por %p218, %p219
      %p221 = scmp.ne.s32.totalorder %s213, %s215
      %p222 = scmp.eq.s32.totalorder %s37, 1
      %p223 = por %p221, %p222
      %p224 = scmp.ne.s32.totalorder %s215, %s216
      %p225 = scmp.eq.s32.totalorder %s37, 0
      %p226 = por %p224, %p225
      %p227 = scmp.ne.s32.totalorder %s215, %s216
      %p228 = scmp.eq.s32.totalorder %s38, 1
      %p229 = por %p227, %p228
      %p231 = scmp.ne.s32.totalorder %s216, %s230
      %p232 = scmp.eq.s32.totalorder %s38, 0
      %p233 = por %p231, %p232
      %s235 = sadd.s32 %s234, 1
      %p238 = scmp.eq.s32.totalorder %s32, 1
      %p239 = scmp.ne.s32.totalorder %s234, %s236
      %p240 = scmp.eq.s32.totalorder %s32, 0
      %p241 = por %p239, %p240
      %p242 = scmp.ne.s32.totalorder %s234, %s236
      %p243 = scmp.eq.s32.totalorder %s37, 1
      %p244 = por %p242, %p243
      %p245 = scmp.ne.s32.totalorder %s236, %s237
      %p246 = scmp.eq.s32.totalorder %s37, 0
      %p247 = por %p245, %p246
      %p248 = scmp.ne.s32.totalorder %s236, %s237
      %p249 = scmp.eq.s32.totalorder %s38, 1
      %p250 = por %p248, %p249
      %p252 = scmp.ne.s32.totalorder %s237, %s251
      %p253 = scmp.eq.s32.totalorder %s38, 0
      %p254 = por %p252, %p253
      %s256 = sadd.s32 %s255, 1
      %p259 = scmp.eq.s32.totalorder %s32, 1
      %p260 = scmp.ne.s32.totalorder %s255, %s257
      %p261 = scmp.eq.s32.totalorder %s32, 0
      %p262 = por %p260, %p261
      %p263 = scmp.ne.s32.totalorder %s255, %s257
      %p264 = scmp.eq.s32.totalorder %s37, 1
      %p265 = por %p263, %p264
      %p266 = scmp.ne.s32.totalorder %s257, %s258
      %p267 = scmp.eq.s32.totalorder %s37, 0
      %p268 = por %p266, %p267
      %p269 = scmp.ne.s32.totalorder %s257, %s258
      %p270 = scmp.eq.s32.totalorder %s38, 1
      %p271 = por %p269, %p270
      %p273 = scmp.ne.s32.totalorder %s258, %s272
      %p274 = scmp.eq.s32.totalorder %s38, 0
      %p275 = por %p273, %p274
      %s277 = sadd.s32 %s276, 1
      %p280 = scmp.eq.s32.totalorder %s32, 1
      %p281 = scmp.ne.s32.totalorder %s276, %s278
      %p282 = scmp.eq.s32.totalorder %s32, 0
      %p283 = por %p281, %p282
      %p284 = scmp.ne.s32.totalorder %s276, %s278
      %p285 = scmp.eq.s32.totalorder %s37, 1
      %p286 = por %p284, %p285
      %p287 = scmp.ne.s32.totalorder %s278, %s279
      %p288 = scmp.eq.s32.totalorder %s37, 0
      %p289 = por %p287, %p288
      %p290 = scmp.ne.s32.totalorder %s278, %s279
      %p291 = scmp.eq.s32.totalorder %s38, 1
      %p292 = por %p290, %p291
      %p294 = scmp.ne.s32.totalorder %s279, %s293
      %p295 = scmp.eq.s32.totalorder %s38, 0
      %p296 = por %p294, %p295
      %s298 = sadd.s32 %s297, 1
      %p301 = scmp.eq.s32.totalorder %s32, 1
      %p302 = scmp.ne.s32.totalorder %s297, %s299
      %p303 = scmp.eq.s32.totalorder %s32, 0
      %p304 = por %p302, %p303
      %p305 = scmp.ne.s32.totalorder %s297, %s299
      %p306 = scmp.eq.s32.totalorder %s37, 1
      %p307 = por %p305, %p306
      %p308 = scmp.ne.s32.totalorder %s299, %s300
      %p309 = scmp.eq.s32.totalorder %s37, 0
      %p310 = por %p308, %p309
      %p311 = scmp.ne.s32.totalorder %s299, %s300
      %p312 = scmp.eq.s32.totalorder %s38, 1
      %p313 = por %p311, %p312
      %p315 = scmp.ne.s32.totalorder %s300, %s314
      %p316 = scmp.eq.s32.totalorder %s38, 0
      %p317 = por %p315, %p316
      %s319 = sadd.s32 %s318, 1
      %p322 = scmp.eq.s32.totalorder %s32, 1
      %p323 = scmp.ne.s32.totalorder %s318, %s320
      %p324 = scmp.eq.s32.totalorder %s32, 0
      %p325 = por %p323, %p324
      %p326 = scmp.ne.s32.totalorder %s318, %s320
      %p327 = scmp.eq.s32.totalorder %s37, 1
      %p328 = por %p326, %p327
      %p329 = scmp.ne.s32.totalorder %s320, %s321
      %p330 = scmp.eq.s32.totalorder %s37, 0
      %p331 = por %p329, %p330
      %p332 = scmp.ne.s32.totalorder %s320, %s321
      %p333 = scmp.eq.s32.totalorder %s38, 1
      %p334 = por %p332, %p333
      %p336 = scmp.ne.s32.totalorder %s321, %s335
      %p337 = scmp.eq.s32.totalorder %s38, 0
      %p338 = por %p336, %p337
      %s340 = sadd.s32 %s339, 1
      %p343 = scmp.eq.s32.totalorder %s32, 1
      %p344 = scmp.ne.s32.totalorder %s339, %s341
      %p345 = scmp.eq.s32.totalorder %s32, 0
      %p346 = por %p344, %p345
      %p347 = scmp.ne.s32.totalorder %s339, %s341
      %p348 = scmp.eq.s32.totalorder %s37, 1
      %p349 = por %p347, %p348
      %p350 = scmp.ne.s32.totalorder %s341, %s342
      %p351 = scmp.eq.s32.totalorder %s37, 0
      %p352 = por %p350, %p351
      %p353 = scmp.ne.s32.totalorder %s341, %s342
      %p354 = scmp.eq.s32.totalorder %s38, 1
      %p355 = por %p353, %p354
      %p357 = scmp.ne.s32.totalorder %s342, %s356
      %p358 = scmp.eq.s32.totalorder %s38, 0
      %p359 = por %p357, %p358
      %s361 = sadd.s32 %s360, 1
      %p364 = scmp.eq.s32.totalorder %s32, 1
      %p365 = scmp.ne.s32.totalorder %s360, %s362
      %p366 = scmp.eq.s32.totalorder %s32, 0
      %p367 = por %p365, %p366
      %p368 = scmp.ne.s32.totalorder %s360, %s362
      %p369 = scmp.eq.s32.totalorder %s37, 1
      %p370 = por %p368, %p369
      %p371 = scmp.ne.s32.totalorder %s362, %s363
      %p372 = scmp.eq.s32.totalorder %s37, 0
      %p373 = por %p371, %p372
      %p374 = scmp.ne.s32.totalorder %s362, %s363
      %p375 = scmp.eq.s32.totalorder %s38, 1
      %p376 = por %p374, %p375
      %p378 = scmp.ne.s32.totalorder %s363, %s377
      %p379 = scmp.eq.s32.totalorder %s38, 0
      %p380 = por %p378, %p379
      %s382 = sadd.s32 %s381, 1
      %p385 = scmp.eq.s32.totalorder %s32, 1
      %p386 = scmp.ne.s32.totalorder %s381, %s383
      %p387 = scmp.eq.s32.totalorder %s32, 0
      %p388 = por %p386, %p387
      %p389 = scmp.ne.s32.totalorder %s381, %s383
      %p390 = scmp.eq.s32.totalorder %s37, 1
      %p391 = por %p389, %p390
      %p392 = scmp.ne.s32.totalorder %s383, %s384
      %p393 = scmp.eq.s32.totalorder %s37, 0
      %p394 = por %p392, %p393
      %p395 = scmp.ne.s32.totalorder %s383, %s384
      %p396 = scmp.eq.s32.totalorder %s38, 1
      %p397 = por %p395, %p396
      %p399 = scmp.ne.s32.totalorder %s384, %s398
      %p400 = scmp.eq.s32.totalorder %s38, 0
      %p401 = por %p399, %p400
      %s403 = sadd.s32 %s402, 1
      %p406 = scmp.eq.s32.totalorder %s32, 1
      %p407 = scmp.ne.s32.totalorder %s402, %s404
      %p408 = scmp.eq.s32.totalorder %s32, 0
      %p409 = por %p407, %p408
      %p410 = scmp.ne.s32.totalorder %s402, %s404
      %p411 = scmp.eq.s32.totalorder %s37, 1
      %p412 = por %p410, %p411
      %p413 = scmp.ne.s32.totalorder %s404, %s405
      %p414 = scmp.eq.s32.totalorder %s37, 0
      %p415 = por %p413, %p414
      %p416 = scmp.ne.s32.totalorder %s404, %s405
      %p417 = scmp.eq.s32.totalorder %s38, 1
      %p418 = por %p416, %p417
      %p420 = scmp.ne.s32.totalorder %s405, %s419
      %p421 = scmp.eq.s32.totalorder %s38, 0
      %p422 = por %p420, %p421
      %s424 = sadd.s32 %s423, 1
      %p427 = scmp.eq.s32.totalorder %s32, 1
      %p428 = scmp.ne.s32.totalorder %s423, %s425
      %p429 = scmp.eq.s32.totalorder %s32, 0
      %p430 = por %p428, %p429
      %p431 = scmp.ne.s32.totalorder %s423, %s425
      %p432 = scmp.eq.s32.totalorder %s37, 1
      %p433 = por %p431, %p432
      %p434 = scmp.ne.s32.totalorder %s425, %s426
      %p435 = scmp.eq.s32.totalorder %s37, 0
      %p436 = por %p434, %p435
      %p437 = scmp.ne.s32.totalorder %s425, %s426
      %p438 = scmp.eq.s32.totalorder %s38, 1
      %p439 = por %p437, %p438
      %p441 = scmp.ne.s32.totalorder %s426, %s440
      %p442 = scmp.eq.s32.totalorder %s38, 0
      %p443 = por %p441, %p442
      %s445 = sadd.s32 %s444, 1
      %p448 = scmp.eq.s32.totalorder %s32, 1
      %p449 = scmp.ne.s32.totalorder %s444, %s446
      %p450 = scmp.eq.s32.totalorder %s32, 0
      %p451 = por %p449, %p450
      %p452 = scmp.ne.s32.totalorder %s444, %s446
      %p453 = scmp.eq.s32.totalorder %s37, 1
      %p454 = por %p452, %p453
      %p455 = scmp.ne.s32.totalorder %s446, %s447
      %p456 = scmp.eq.s32.totalorder %s37, 0
      %p457 = por %p455, %p456
      %p458 = scmp.ne.s32.totalorder %s446, %s447
      %p459 = scmp.eq.s32.totalorder %s38, 1
      %p460 = por %p458, %p459
      %p462 = scmp.ne.s32.totalorder %s447, %s461
      %p463 = scmp.eq.s32.totalorder %s38, 0
      %p464 = por %p462, %p463
      %s465 = ssub.s32 %s32, %s39
      %p466 = scmp.eq.s32.totalorder %s465, 0
      %s468 = sadd.s32 %s467, 1
      %s469 = scalar_select %p466, %s467, %s468
      %p472 = pneg %p466
      %p473 = scmp.eq.s32.totalorder %s32, 1
      %p474 = por %p472, %p473
      %p475 = scmp.ne.s32.totalorder %s467, %s470
      %p476 = scmp.eq.s32.totalorder %s32, 0
      %p477 = por %p475, %p476
      %p478 = scmp.ne.s32.totalorder %s467, %s470
      %p479 = scmp.eq.s32.totalorder %s37, 1
      %p480 = por %p478, %p479
      %p481 = scmp.ne.s32.totalorder %s470, %s471
      %p482 = scmp.eq.s32.totalorder %s37, 0
      %p483 = por %p481, %p482
      %p484 = scmp.ne.s32.totalorder %s470, %s471
      %p485 = scmp.eq.s32.totalorder %s38, 1
      %p486 = por %p484, %p485
      %p488 = scmp.ne.s32.totalorder %s471, %s487
      %p489 = scmp.eq.s32.totalorder %s38, 0
      %p490 = por %p488, %p489
      %s491 = ssub.s32 %s32, %s39
      %p492 = scmp.eq.s32.totalorder %s491, 0
      %s494 = sadd.s32 %s493, 1
      %s495 = scalar_select %p492, %s493, %s494
      %p498 = pneg %p492
      %p499 = scmp.eq.s32.totalorder %s32, 1
      %p500 = por %p498, %p499
      %p501 = scmp.ne.s32.totalorder %s493, %s496
      %p502 = scmp.eq.s32.totalorder %s32, 0
      %p503 = por %p501, %p502
      %p504 = scmp.ne.s32.totalorder %s493, %s496
      %p505 = scmp.eq.s32.totalorder %s37, 1
      %p506 = por %p504, %p505
      %p507 = scmp.ne.s32.totalorder %s496, %s497
      %p508 = scmp.eq.s32.totalorder %s37, 0
      %p509 = por %p507, %p508
      %p510 = scmp.ne.s32.totalorder %s496, %s497
      %p511 = scmp.eq.s32.totalorder %s38, 1
      %p512 = por %p510, %p511
      %p514 = scmp.ne.s32.totalorder %s497, %s513
      %p515 = scmp.eq.s32.totalorder %s38, 0
      %p516 = por %p514, %p515
      %s517 = ssub.s32 %s32, %s39
      %p518 = scmp.eq.s32.totalorder %s517, 0
      %s520 = sadd.s32 %s519, 1
      %s521 = scalar_select %p518, %s519, %s520
      %p524 = pneg %p518
      %p525 = scmp.eq.s32.totalorder %s32, 1
      %p526 = por %p524, %p525
      %p527 = scmp.ne.s32.totalorder %s519, %s522
      %p528 = scmp.eq.s32.totalorder %s32, 0
      %p529 = por %p527, %p528
      %p530 = scmp.ne.s32.totalorder %s519, %s522
      %p531 = scmp.eq.s32.totalorder %s37, 1
      %p532 = por %p530, %p531
      %p533 = scmp.ne.s32.totalorder %s522, %s523
      %p534 = scmp.eq.s32.totalorder %s37, 0
      %p535 = por %p533, %p534
      %p536 = scmp.ne.s32.totalorder %s522, %s523
      %p537 = scmp.eq.s32.totalorder %s38, 1
      %p538 = por %p536, %p537
      %p540 = scmp.ne.s32.totalorder %s523, %s539
      %p541 = scmp.eq.s32.totalorder %s38, 0
      %p542 = por %p540, %p541
      %p543 = scmp.le.s32.totalorder 1, %s32
      %p544 = scmp.lt.s32.totalorder %s32, 3
      %p545 = pnand %p543, %p544
      %p546 = pneg %p545
      // Predicated region
      $region9: #{vit_encoder_forward.1} parent=5 // pred_check
        _
      $region10: #{vit_encoder_forward.1} parent=5 // pred_check_branch
        %548 = sbr.rel (%p545) target = $region12
      $region11: #{vit_encoder_forward.1} parent=5 // pred_region
        %s549 = ssub.s32 %s32, 1
        // Predicated region
        $region13: #{vit_encoder_forward.1} parent=11 // pred_check
          %p550 = pneg %p79
        $region14: #{vit_encoder_forward.1} parent=11 // pred_check_branch
          %552 = sbr.rel (%p550) target = $region16
        $region15: #{vit_encoder_forward.1} parent=11 // pred_region
          _
        $region16: #{vit_encoder_forward.1} parent=11 // pred_fallthru
          _
        // Predicated region
        $region17: #{vit_encoder_forward.1} parent=11 // pred_check
          %p553 = pneg %p100
        $region18: #{vit_encoder_forward.1} parent=11 // pred_check_branch
          %555 = sbr.rel (%p553) target = $region20
        $region19: #{vit_encoder_forward.1} parent=11 // pred_region
          _
        $region20: #{vit_encoder_forward.1} parent=11 // pred_fallthru
          _
        // Predicated region
        $region21: #{vit_encoder_forward.1} parent=11 // pred_check
          %p556 = pneg %p121
        $region22: #{vit_encoder_forward.1} parent=11 // pred_check_branch
          %558 = sbr.rel (%p556) target = $region24
        $region23: #{vit_encoder_forward.1} parent=11 // pred_region
          _
        $region24: #{vit_encoder_forward.1} parent=11 // pred_fallthru
          _
        // Predicated region
        $region25: #{vit_encoder_forward.1} parent=11 // pred_check
          %p559 = pneg %p142
        $region26: #{vit_encoder_forward.1} parent=11 // pred_check_branch
          %561 = sbr.rel (%p559) target = $region28
        $region27: #{vit_encoder_forward.1} parent=11 // pred_region
          _
        $region28: #{vit_encoder_forward.1} parent=11 // pred_fallthru
          _
        // Predicated region
        $region29: #{vit_encoder_forward.1} parent=11 // pred_check
          %p562 = pneg %p163
        $region30: #{vit_encoder_forward.1} parent=11 // pred_check_branch
          %564 = sbr.rel (%p562) target = $region32
        $region31: #{vit_encoder_forward.1} parent=11 // pred_region
          _
        $region32: #{vit_encoder_forward.1} parent=11 // pred_fallthru
          _
        // Predicated region
        $region33: #{vit_encoder_forward.1} parent=11 // pred_check
          %p565 = pneg %p184
        $region34: #{vit_encoder_forward.1} parent=11 // pred_check_branch
          %567 = sbr.rel (%p565) target = $region36
        $region35: #{vit_encoder_forward.1} parent=11 // pred_region
          _
        $region36: #{vit_encoder_forward.1} parent=11 // pred_fallthru
          _
        // Predicated region
        $region37: #{vit_encoder_forward.1} parent=11 // pred_check
          %p568 = pneg %p205
        $region38: #{vit_encoder_forward.1} parent=11 // pred_check_branch
          %570 = sbr.rel (%p568) target = $region40
        $region39: #{vit_encoder_forward.1} parent=11 // pred_region
          _
        $region40: #{vit_encoder_forward.1} parent=11 // pred_fallthru
          _
        // Predicated region
        $region41: #{vit_encoder_forward.1} parent=11 // pred_check
          %p571 = pneg %p226
        $region42: #{vit_encoder_forward.1} parent=11 // pred_check_branch
          %573 = sbr.rel (%p571) target = $region44
        $region43: #{vit_encoder_forward.1} parent=11 // pred_region
          _
        $region44: #{vit_encoder_forward.1} parent=11 // pred_fallthru
          _
        // Predicated region
        $region45: #{vit_encoder_forward.1} parent=11 // pred_check
          %p574 = pneg %p247
        $region46: #{vit_encoder_forward.1} parent=11 // pred_check_branch
          %576 = sbr.rel (%p574) target = $region48
        $region47: #{vit_encoder_forward.1} parent=11 // pred_region
          _
        $region48: #{vit_encoder_forward.1} parent=11 // pred_fallthru
          _
        // Predicated region
        $region49: #{vit_encoder_forward.1} parent=11 // pred_check
          %p577 = pneg %p268
        $region50: #{vit_encoder_forward.1} parent=11 // pred_check_branch
          %579 = sbr.rel (%p577) target = $region52
        $region51: #{vit_encoder_forward.1} parent=11 // pred_region
          _
        $region52: #{vit_encoder_forward.1} parent=11 // pred_fallthru
          _
        // Predicated region
        $region53: #{vit_encoder_forward.1} parent=11 // pred_check
          %p580 = pneg %p289
        $region54: #{vit_encoder_forward.1} parent=11 // pred_check_branch
          %582 = sbr.rel (%p580) target = $region56
        $region55: #{vit_encoder_forward.1} parent=11 // pred_region
          _
        $region56: #{vit_encoder_forward.1} parent=11 // pred_fallthru
          _
        // Predicated region
        $region57: #{vit_encoder_forward.1} parent=11 // pred_check
          %p583 = pneg %p310
        $region58: #{vit_encoder_forward.1} parent=11 // pred_check_branch
          %585 = sbr.rel (%p583) target = $region60
        $region59: #{vit_encoder_forward.1} parent=11 // pred_region
          _
        $region60: #{vit_encoder_forward.1} parent=11 // pred_fallthru
          _
        // Predicated region
        $region61: #{vit_encoder_forward.1} parent=11 // pred_check
          %p586 = pneg %p331
        $region62: #{vit_encoder_forward.1} parent=11 // pred_check_branch
          %588 = sbr.rel (%p586) target = $region64
        $region63: #{vit_encoder_forward.1} parent=11 // pred_region
          _
        $region64: #{vit_encoder_forward.1} parent=11 // pred_fallthru
          _
        // Predicated region
        $region65: #{vit_encoder_forward.1} parent=11 // pred_check
          %p589 = pneg %p352
        $region66: #{vit_encoder_forward.1} parent=11 // pred_check_branch
          %591 = sbr.rel (%p589) target = $region68
        $region67: #{vit_encoder_forward.1} parent=11 // pred_region
          _
        $region68: #{vit_encoder_forward.1} parent=11 // pred_fallthru
          _
        // Predicated region
        $region69: #{vit_encoder_forward.1} parent=11 // pred_check
          %p592 = pneg %p373
        $region70: #{vit_encoder_forward.1} parent=11 // pred_check_branch
          %594 = sbr.rel (%p592) target = $region72
        $region71: #{vit_encoder_forward.1} parent=11 // pred_region
          _
        $region72: #{vit_encoder_forward.1} parent=11 // pred_fallthru
          _
        // Predicated region
        $region73: #{vit_encoder_forward.1} parent=11 // pred_check
          %p595 = pneg %p394
        $region74: #{vit_encoder_forward.1} parent=11 // pred_check_branch
          %597 = sbr.rel (%p595) target = $region76
        $region75: #{vit_encoder_forward.1} parent=11 // pred_region
          _
        $region76: #{vit_encoder_forward.1} parent=11 // pred_fallthru
          _
        // Predicated region
        $region77: #{vit_encoder_forward.1} parent=11 // pred_check
          %p598 = pneg %p415
        $region78: #{vit_encoder_forward.1} parent=11 // pred_check_branch
          %600 = sbr.rel (%p598) target = $region80
        $region79: #{vit_encoder_forward.1} parent=11 // pred_region
          _
        $region80: #{vit_encoder_forward.1} parent=11 // pred_fallthru
          _
        // Predicated region
        $region81: #{vit_encoder_forward.1} parent=11 // pred_check
          %p601 = pneg %p436
        $region82: #{vit_encoder_forward.1} parent=11 // pred_check_branch
          %603 = sbr.rel (%p601) target = $region84
        $region83: #{vit_encoder_forward.1} parent=11 // pred_region
          _
        $region84: #{vit_encoder_forward.1} parent=11 // pred_fallthru
          _
        // Predicated region
        $region85: #{vit_encoder_forward.1} parent=11 // pred_check
          %p604 = pneg %p457
        $region86: #{vit_encoder_forward.1} parent=11 // pred_check_branch
          %606 = sbr.rel (%p604) target = $region88
        $region87: #{vit_encoder_forward.1} parent=11 // pred_region
          _
        $region88: #{vit_encoder_forward.1} parent=11 // pred_fallthru
          _
      $region12: #{vit_encoder_forward.1} parent=5 // pred_fallthru
        _
      %p607 = scmp.lt.s32.totalorder %s32, 2
      // Predicated region
      $region89: #{vit_encoder_forward.1} parent=5 // pred_check
        %p608 = pneg %p607
      $region90: #{vit_encoder_forward.1} parent=5 // pred_check_branch
        %610 = sbr.rel (%p608) target = $region92
      $region91: #{vit_encoder_forward.1} parent=5 // pred_region
        // Predicated region
        $region93: #{vit_encoder_forward.1} parent=91 // pred_check
          %p611 = pneg %p52
        $region94: #{vit_encoder_forward.1} parent=91 // pred_check_branch
          %613 = sbr.rel (%p611) target = $region96
        $region95: #{vit_encoder_forward.1} parent=91 // pred_region
          %s614 = smul.u32 2, %s32
          %p615 = scmp.lt.s32.totalorder %s614, 3
          %s616 = scalar_select %p615, %s614, 3
          %s617 = smul.addr %s616, 2
          %s618 = smul.addr %s617, 8
          %s619 = scalar_lea.vmem %s0, %s618
          %s620 = smul.u32 2, %s32
        $region96: #{vit_encoder_forward.1} parent=91 // pred_fallthru
          _
      $region92: #{vit_encoder_forward.1} parent=5 // pred_fallthru
        _
      %p621 = scmp.le.s32.totalorder 1, %s32
      %p622 = scmp.lt.s32.totalorder %s32, 3
      %p623 = pnand %p621, %p622
      %p624 = pneg %p623
      // Predicated region
      $region97: #{vit_encoder_forward.1} parent=5 // pred_check
        _
      $region98: #{vit_encoder_forward.1} parent=5 // pred_check_branch
        %626 = sbr.rel (%p623) target = $region100
      $region99: #{vit_encoder_forward.1} parent=5 // pred_region
        %s627 = ssub.s32 %s32, 1
        %s628 = smul.u32 2, %s37
        %p629 = scmp.lt.s32.totalorder %s628, 3
        %s630 = scalar_select %p629, %s628, 3
        %s631 = smul.addr %s630, 2
        %s632 = smul.addr %s631, 8
        %s633 = scalar_lea.vmem %s0, %s632
        %p634 = pneg %p58
        %p635 = pneg %p55
        %p636 = pneg %p79
        %p637 = pneg %p76
        %p638 = pneg %p100
        %p639 = pneg %p97
        %p640 = pneg %p121
        %p641 = pneg %p118
        %p642 = pneg %p142
        %p643 = pneg %p139
        %p644 = pneg %p163
        %p645 = pneg %p160
        %p646 = pneg %p184
        %p647 = pneg %p181
        %p648 = pneg %p205
        %p649 = pneg %p202
        %p650 = pneg %p226
        %p651 = pneg %p223
        %p652 = pneg %p247
        %p653 = pneg %p244
        %p654 = pneg %p268
        %p655 = pneg %p265
        %p656 = pneg %p289
        %p657 = pneg %p286
        %p658 = pneg %p310
        %p659 = pneg %p307
        %p660 = pneg %p331
        %p661 = pneg %p328
        %p662 = pneg %p352
        %p663 = pneg %p349
        %p664 = pneg %p373
        %p665 = pneg %p370
        %p666 = pneg %p394
        %p667 = pneg %p391
        %p668 = pneg %p415
        %p669 = pneg %p412
        %p670 = pneg %p436
        %p671 = pneg %p433
        %p672 = pneg %p457
        %p673 = pneg %p454
        %p674 = pneg %p483
        %p675 = pneg %p480
        %s676 = sand.u32 %s470, 1
        %s677 = scalar_lea.sflag [#allocation3], %s676
        %s678 = sand.u32 %s470, 1
        %s679 = smul.addr %s678, 8
        %s680 = scalar_lea.vmem [#allocation2], %s679
        %p681 = pneg %p509
        %p682 = pneg %p506
        %s683 = smul.u32 2, %s37
        %p684 = scmp.lt.s32.totalorder %s683, 3
        %s685 = scalar_select %p684, %s683, 3
        %s686 = smul.addr %s685, 4
        %s687 = scalar_lea.vmem %s21, %s686
        %p688 = pneg %p535
        %p689 = pneg %p532
        %s690 = smul.u32 2, %s37
        %p691 = scmp.lt.s32.totalorder %s690, 3
        %s692 = scalar_select %p691, %s690, 3
        %s693 = smul.addr %s692, 4
        %s694 = scalar_lea.vmem %s22, %s693
        %s695 = smul.u32 2, %s37
        %p696 = scmp.lt.s32.totalorder %s695, 3
        %s697 = scalar_select %p696, %s695, 3
        %s698 = smul.addr %s697, 2
        %s699 = smul.addr %s698, 8
        %s700 = scalar_lea.vmem %s0, %s699
        %s701 = smul.u32 2, %s37
        %s702 = smul.u32 2, %s37
        %s703 = smul.u32 2, %s37
        %p704 = scmp.lt.s32.totalorder %s703, 3
        %s705 = scalar_select %p704, %s703, 3
        %s706 = smul.addr %s705, 4
        %s707 = scalar_lea.vmem %s21, %s706
        %s708 = smul.u32 2, %s37
        %s709 = smul.u32 2, %s37
        %p710 = scmp.lt.s32.totalorder %s709, 3
        %s711 = scalar_select %p710, %s709, 3
        %s712 = smul.addr %s711, 4
        %s713 = scalar_lea.vmem %s22, %s712
        %s714 = smul.u32 2, %s37
        %v715 = vld [vmem:[%s700] sm:$0xff]
        %v716 = vld [vmem:[%s700 + $0x8] sm:$0xff]
        %v717 = vld [vmem:[%s700 + $0x10] sm:$0xff]
        %v718 = vld [vmem:[%s700 + $0x18] sm:$0xff]
        %v719 = vld [vmem:[%s1] sm:$0xff]
        %v720 = vld [vmem:[%s1 + $0x8] sm:$0xff]
        %v721 = vld [vmem:[%s1 + $0x10] sm:$0xff]
        %v722 = vld [vmem:[%s1 + $0x18] sm:$0xff]
        %v723 = vld [vmem:[%s1 + $0x20] sm:$0xff]
        %v724 = vld [vmem:[%s1 + $0x28] sm:$0xff]
        %v725 = vld [vmem:[%s2] sm:$0x1]
        %v727 = vperm.slane %v725, 0
        %vm729 = vcmask 392192
        %v731 = vsel %vm729, %v715, 0
        %v734 = vsel %vm729, %v716, 0
        %v737 = vsel %vm729, %v717, 0
        %v740 = vsel %vm729, %v718, 0
        %742 = vmatpush.msra.mxu0 0.0
        %743 = vmatpush.msra.mxu0 0.0
        %744 = vmatpush.msra.mxu0 0.0
        %745 = vmatpush.msra.mxu0 0.0
        %746 = vmatpush.msra.mxu0 0.0
        %747 = vmatpush.msra.mxu0 0.0
        %748 = vmatpush.msra.mxu0 0.0
        %749 = vmatpush.msra.mxu0 0.0
        %750 = vmatpush.msra.mxu0 0.0
        %751 = vmatpush.msra.mxu0 0.0
        %752 = vmatpush.msra.mxu0 %v724
        %753 = vmatpush.msra.mxu0 %v723
        %754 = vmatpush.msra.mxu0 %v722
        %755 = vmatpush.msra.mxu0 %v721
        %756 = vmatpush.msra.mxu0 %v720
        %757 = vmatpush.msra.mxu0 %v719
        %758 = vmatmul.f32.gmra.mxu0 %v731
        %v759 = vpop.f32.mrf.mxu0
        %v760 = vadd.f32 %v727, %v759
        %761 = vmatmul.f32.gmra.mxu0 %v734
        %v762 = vpop.f32.mrf.mxu0
        %v763 = vadd.f32 %v727, %v762
        %764 = vmatmul.f32.gmra.mxu0 %v737
        %v765 = vpop.f32.mrf.mxu0
        %v766 = vadd.f32 %v727, %v765
        %767 = vmatmul.f32.gmra.mxu0 %v740
        %v768 = vpop.f32.mrf.mxu0
        %v769 = vadd.f32 %v727, %v768
        %770 = vdwg.mxu0
        %v771 = vld [vmem:[%s3] sm:$0xff]
        %v772 = vld [vmem:[%s3 + $0x8] sm:$0xff]
        %v773 = vld [vmem:[%s3 + $0x10] sm:$0xff]
        %v774 = vld [vmem:[%s3 + $0x18] sm:$0xff]
        %v775 = vadd.f32 %v760, %v771
        %v776 = vadd.f32 %v763, %v772
        %v777 = vadd.f32 %v766, %v773
        %v778 = vadd.f32 %v769, %v774
        %v779 = vld [vmem:[%s5] sm:$0xff]
        %v780 = vld [vmem:[%s5 + $0x8] sm:$0xff]
        %v781 = vld [vmem:[%s5 + $0x10] sm:$0xff]
        %v782 = vld [vmem:[%s5 + $0x18] sm:$0xff]
        %v783 = vld [vmem:[%s6] sm:$0x1]
        %v785 = vperm.slane %v783, 0
        %vm787 = vcmask 261120
        %v789 = vsel %vm787, %v775, 0
        %v792 = vsel %vm787, %v776, 0
        %v795 = vsel %vm787, %v777, 0
        %v798 = vsel %vm787, %v778, 0
        %800 = vmatpush.msra.mxu0 0.0
        %801 = vmatpush.msra.mxu0 0.0
        %802 = vmatpush.msra.mxu0 0.0
        %803 = vmatpush.msra.mxu0 0.0
        %804 = vmatpush.msra.mxu0 0.0
        %805 = vmatpush.msra.mxu0 0.0
        %806 = vmatpush.msra.mxu0 0.0
        %807 = vmatpush.msra.mxu0 0.0
        %808 = vmatpush.msra.mxu0 0.0
        %809 = vmatpush.msra.mxu0 0.0
        %810 = vmatpush.msra.mxu0 0.0
        %811 = vmatpush.msra.mxu0 0.0
        %812 = vmatpush.msra.mxu0 %v782
        %813 = vmatpush.msra.mxu0 %v781
        %814 = vmatpush.msra.mxu0 %v780
        %815 = vmatpush.msra.mxu0 %v779
        %816 = vmatmul.f32.gmra.mxu0 %v789
        %v817 = vpop.f32.mrf.mxu0
        %v818 = vadd.f32 %v785, %v817
        %819 = vmatmul.f32.gmra.mxu0 %v792
        %v820 = vpop.f32.mrf.mxu0
        %v821 = vadd.f32 %v785, %v820
        %822 = vmatmul.f32.gmra.mxu0 %v795
        %v823 = vpop.f32.mrf.mxu0
        %v824 = vadd.f32 %v785, %v823
        %825 = vmatmul.f32.gmra.mxu0 %v798
        %v826 = vpop.f32.mrf.mxu0
        %v827 = vadd.f32 %v785, %v826
        %828 = vdwg.mxu0
        %v829 = vmul.f32 %v818, 0.35355338
        %v830 = vmul.f32 %v821, 0.35355338
        %v831 = vmul.f32 %v824, 0.35355338
        %v832 = vmul.f32 %v827, 0.35355338
        %835 = vrot.lane.b32.xlu0 %v818, 96
        %v836 = vpop.permute.xlu0 %835
        %837 = vrot.lane.b32.xlu0 %v821, 96
        %v838 = vpop.permute.xlu0 %837
        %vm839 = vcmask 64512
        %v841 = vsel %vm839, %v829, 0
        %v844 = vsel %vm839, %v830, 0
        %v846 = vsel %vm839, %v836, 0
        %v848 = vsel %vm839, %v838, 0
        %850 = vmatpush.xpose.msra.mxu0 0.0
        %851 = vmatpush.xpose.msra.mxu0 0.0
        %852 = vmatpush.xpose.msra.mxu0 0.0
        %853 = vmatpush.xpose.msra.mxu0 0.0
        %854 = vmatpush.xpose.msra.mxu0 0.0
        %855 = vmatpush.xpose.msra.mxu0 0.0
        %856 = vmatpush.xpose.msra.mxu0 0.0
        %857 = vmatpush.xpose.msra.mxu0 0.0
        %858 = vmatpush.xpose.msra.mxu0 0.0
        %859 = vmatpush.xpose.msra.mxu0 0.0
        %860 = vmatpush.xpose.msra.mxu0 0.0
        %861 = vmatpush.xpose.msra.mxu0 0.0
        %862 = vmatpush.xpose.msra.mxu0 0.0
        %863 = vmatpush.xpose.msra.mxu0 0.0
        %864 = vmatpush.xpose.msra.mxu0 %v848
        %865 = vmatpush.xpose.msra.mxu0 %v846
        %866 = vmatmul.f32.gmra.mxu0 %v841
        %v867 = vpop.f32.mrf.mxu0
        %v868 = vadd.f32 0.0, %v867
        %869 = vmatmul.f32.gmra.mxu0 %v844
        %v870 = vpop.f32.mrf.mxu0
        %v871 = vadd.f32 0.0, %v870
        %872 = vdwg.mxu0
        %875 = vrot.lane.b32.xlu0 %v824, 96
        %v876 = vpop.permute.xlu0 %875
        %877 = vrot.lane.b32.xlu0 %v827, 96
        %v878 = vpop.permute.xlu0 %877
        %v880 = vsel %vm839, %v831, 0
        %v883 = vsel %vm839, %v832, 0
        %v885 = vsel %vm839, %v876, 0
        %v887 = vsel %vm839, %v878, 0
        %889 = vmatpush.xpose.msra.mxu0 0.0
        %890 = vmatpush.xpose.msra.mxu0 0.0
        %891 = vmatpush.xpose.msra.mxu0 0.0
        %892 = vmatpush.xpose.msra.mxu0 0.0
        %893 = vmatpush.xpose.msra.mxu0 0.0
        %894 = vmatpush.xpose.msra.mxu0 0.0
        %895 = vmatpush.xpose.msra.mxu0 0.0
        %896 = vmatpush.xpose.msra.mxu0 0.0
        %897 = vmatpush.xpose.msra.mxu0 0.0
        %898 = vmatpush.xpose.msra.mxu0 0.0
        %899 = vmatpush.xpose.msra.mxu0 0.0
        %900 = vmatpush.xpose.msra.mxu0 0.0
        %901 = vmatpush.xpose.msra.mxu0 0.0
        %902 = vmatpush.xpose.msra.mxu0 0.0
        %903 = vmatpush.xpose.msra.mxu0 %v887
        %904 = vmatpush.xpose.msra.mxu0 %v885
        %905 = vmatmul.f32.gmra.mxu0 %v880
        %v906 = vpop.f32.mrf.mxu0
        %v907 = vadd.f32 0.0, %v906
        %908 = vmatmul.f32.gmra.mxu0 %v883
        %v909 = vpop.f32.mrf.mxu0
        %v910 = vadd.f32 0.0, %v909
        %911 = vdwg.mxu0
        %vm912 = vcmask 130048
        %v913 = vsel %vm912, %v868, -inf
        %914 = vmax.xlane.f32.xlu0 %v913
        %v915 = vpop.xlane.xlu0 %914
        %v916 = vsel %vm912, %v871, -inf
        %917 = vmax.xlane.f32.xlu0 %v916
        %v918 = vpop.xlane.xlu0 %917
        %v919 = vsel %vm912, %v907, -inf
        %920 = vmax.xlane.f32.xlu0 %v919
        %v921 = vpop.xlane.xlu0 %920
        %v922 = vsel %vm912, %v910, -inf
        %923 = vmax.xlane.f32.xlu0 %v922
        %v924 = vpop.xlane.xlu0 %923
        %v925 = vsub.f32 %v868, %v915
        %v926 = vsub.f32 %v871, %v918
        %v927 = vsub.f32 %v907, %v921
        %v928 = vsub.f32 %v910, %v924
        %v929 = vmul.f32 %v925, 1.442695
        %v930 = vpow.pop %v929
        %v931 = vmul.f32 %v926, 1.442695
        %v932 = vpow.pop %v931
        %v933 = vmul.f32 %v927, 1.442695
        %v934 = vpow.pop %v933
        %v935 = vmul.f32 %v928, 1.442695
        %v936 = vpow.pop %v935
        %v937 = vsel %vm912, %v930, 0.0
        %938 = vadd.xlane.f32.xlu0 %v937
        %v939 = vpop.xlane.xlu0 %938
        %v940 = vsel %vm912, %v932, 0.0
        %941 = vadd.xlane.f32.xlu0 %v940
        %v942 = vpop.xlane.xlu0 %941
        %v943 = vsel %vm912, %v934, 0.0
        %944 = vadd.xlane.f32.xlu0 %v943
        %v945 = vpop.xlane.xlu0 %944
        %v946 = vsel %vm912, %v936, 0.0
        %947 = vadd.xlane.f32.xlu0 %v946
        %v948 = vpop.xlane.xlu0 %947
        %v949 = vrcp.pop %v939
        %v950 = vrcp.pop %v942
        %v951 = vrcp.pop %v945
        %v952 = vrcp.pop %v948
        %v953 = vmul.f32 %v930, %v949
        %v954 = vmul.f32 %v932, %v950
        %v955 = vmul.f32 %v934, %v951
        %v956 = vmul.f32 %v936, %v952
        %957 = vrot.lane.b32.xlu0 %v818, 64
        %v958 = vpop.permute.xlu0 %957
        %959 = vrot.lane.b32.xlu0 %v821, 64
        %v960 = vpop.permute.xlu0 %959
        %v964 = vsel %vm912, %v953, 0
        %v967 = vsel %vm912, %v954, 0
        %969 = vmatpush.msra.mxu0 0.0
        %970 = vmatpush.msra.mxu0 0.0
        %971 = vmatpush.msra.mxu0 0.0
        %972 = vmatpush.msra.mxu0 0.0
        %973 = vmatpush.msra.mxu0 0.0
        %974 = vmatpush.msra.mxu0 0.0
        %975 = vmatpush.msra.mxu0 0.0
        %976 = vmatpush.msra.mxu0 0.0
        %977 = vmatpush.msra.mxu0 0.0
        %978 = vmatpush.msra.mxu0 0.0
        %979 = vmatpush.msra.mxu0 0.0
        %980 = vmatpush.msra.mxu0 0.0
        %981 = vmatpush.msra.mxu0 0.0
        %982 = vmatpush.msra.mxu0 0.0
        %983 = vmatpush.msra.mxu0 %v960
        %984 = vmatpush.msra.mxu0 %v958
        %985 = vmatmul.f32.gmra.mxu0 %v964
        %v986 = vpop.f32.mrf.mxu0
        %v987 = vadd.f32 0.0, %v986
        %988 = vmatmul.f32.gmra.mxu0 %v967
        %v989 = vpop.f32.mrf.mxu0
        %v990 = vadd.f32 0.0, %v989
        %991 = vdwg.mxu0
        %992 = vrot.lane.b32.xlu0 %v824, 64
        %v993 = vpop.permute.xlu0 %992
        %994 = vrot.lane.b32.xlu0 %v827, 64
        %v995 = vpop.permute.xlu0 %994
        %v999 = vsel %vm912, %v955, 0
        %v1002 = vsel %vm912, %v956, 0
        %1004 = vmatpush.msra.mxu0 0.0
        %1005 = vmatpush.msra.mxu0 0.0
        %1006 = vmatpush.msra.mxu0 0.0
        %1007 = vmatpush.msra.mxu0 0.0
        %1008 = vmatpush.msra.mxu0 0.0
        %1009 = vmatpush.msra.mxu0 0.0
        %1010 = vmatpush.msra.mxu0 0.0
        %1011 = vmatpush.msra.mxu0 0.0
        %1012 = vmatpush.msra.mxu0 0.0
        %1013 = vmatpush.msra.mxu0 0.0
        %1014 = vmatpush.msra.mxu0 0.0
        %1015 = vmatpush.msra.mxu0 0.0
        %1016 = vmatpush.msra.mxu0 0.0
        %1017 = vmatpush.msra.mxu0 0.0
        %1018 = vmatpush.msra.mxu0 %v995
        %1019 = vmatpush.msra.mxu0 %v993
        %1020 = vmatmul.f32.gmra.mxu0 %v999
        %v1021 = vpop.f32.mrf.mxu0
        %v1022 = vadd.f32 0.0, %v1021
        %1023 = vmatmul.f32.gmra.mxu0 %v1002
        %v1024 = vpop.f32.mrf.mxu0
        %v1025 = vadd.f32 0.0, %v1024
        %1026 = vdwg.mxu0
        %1027 = vrot.lane.b32.xlu0 %v829, 120
        %v1028 = vpop.permute.xlu0 %1027
        %1029 = vrot.lane.b32.xlu0 %v830, 120
        %v1030 = vpop.permute.xlu0 %1029
        %1031 = vrot.lane.b32.xlu0 %v818, 88
        %v1032 = vpop.permute.xlu0 %1031
        %1033 = vrot.lane.b32.xlu0 %v821, 88
        %v1034 = vpop.permute.xlu0 %1033
        %v1035 = vsel %vm839, %v1028, 0
        %v1037 = vsel %vm839, %v1030, 0
        %v1039 = vsel %vm839, %v1032, 0
        %v1041 = vsel %vm839, %v1034, 0
        %1043 = vmatpush.xpose.msra.mxu0 0.0
        %1044 = vmatpush.xpose.msra.mxu0 0.0
        %1045 = vmatpush.xpose.msra.mxu0 0.0
        %1046 = vmatpush.xpose.msra.mxu0 0.0
        %1047 = vmatpush.xpose.msra.mxu0 0.0
        %1048 = vmatpush.xpose.msra.mxu0 0.0
        %1049 = vmatpush.xpose.msra.mxu0 0.0
        %1050 = vmatpush.xpose.msra.mxu0 0.0
        %1051 = vmatpush.xpose.msra.mxu0 0.0
        %1052 = vmatpush.xpose.msra.mxu0 0.0
        %1053 = vmatpush.xpose.msra.mxu0 0.0
        %1054 = vmatpush.xpose.msra.mxu0 0.0
        %1055 = vmatpush.xpose.msra.mxu0 0.0
        %1056 = vmatpush.xpose.msra.mxu0 0.0
        %1057 = vmatpush.xpose.msra.mxu0 %v1041
        %1058 = vmatpush.xpose.msra.mxu0 %v1039
        %1059 = vmatmul.f32.gmra.mxu0 %v1035
        %v1060 = vpop.f32.mrf.mxu0
        %v1061 = vadd.f32 0.0, %v1060
        %1062 = vmatmul.f32.gmra.mxu0 %v1037
        %v1063 = vpop.f32.mrf.mxu0
        %v1064 = vadd.f32 0.0, %v1063
        %1065 = vdwg.mxu0
        %1066 = vrot.lane.b32.xlu0 %v831, 120
        %v1067 = vpop.permute.xlu0 %1066
        %1068 = vrot.lane.b32.xlu0 %v832, 120
        %v1069 = vpop.permute.xlu0 %1068
        %1070 = vrot.lane.b32.xlu0 %v824, 88
        %v1071 = vpop.permute.xlu0 %1070
        %1072 = vrot.lane.b32.xlu0 %v827, 88
        %v1073 = vpop.permute.xlu0 %1072
        %v1074 = vsel %vm839, %v1067, 0
        %v1076 = vsel %vm839, %v1069, 0
        %v1078 = vsel %vm839, %v1071, 0
        %v1080 = vsel %vm839, %v1073, 0
        %1082 = vmatpush.xpose.msra.mxu0 0.0
        %1083 = vmatpush.xpose.msra.mxu0 0.0
        %1084 = vmatpush.xpose.msra.mxu0 0.0
        %1085 = vmatpush.xpose.msra.mxu0 0.0
        %1086 = vmatpush.xpose.msra.mxu0 0.0
        %1087 = vmatpush.xpose.msra.mxu0 0.0
        %1088 = vmatpush.xpose.msra.mxu0 0.0
        %1089 = vmatpush.xpose.msra.mxu0 0.0
        %1090 = vmatpush.xpose.msra.mxu0 0.0
        %1091 = vmatpush.xpose.msra.mxu0 0.0
        %1092 = vmatpush.xpose.msra.mxu0 0.0
        %1093 = vmatpush.xpose.msra.mxu0 0.0
        %1094 = vmatpush.xpose.msra.mxu0 0.0
        %1095 = vmatpush.xpose.msra.mxu0 0.0
        %1096 = vmatpush.xpose.msra.mxu0 %v1080
        %1097 = vmatpush.xpose.msra.mxu0 %v1078
        %1098 = vmatmul.f32.gmra.mxu0 %v1074
        %v1099 = vpop.f32.mrf.mxu0
        %v1100 = vadd.f32 0.0, %v1099
        %1101 = vmatmul.f32.gmra.mxu0 %v1076
        %v1102 = vpop.f32.mrf.mxu0
        %v1103 = vadd.f32 0.0, %v1102
        %1104 = vdwg.mxu0
        %v1105 = vsel %vm912, %v1061, -inf
        %1106 = vmax.xlane.f32.xlu0 %v1105
        %v1107 = vpop.xlane.xlu0 %1106
        %v1108 = vsel %vm912, %v1064, -inf
        %1109 = vmax.xlane.f32.xlu0 %v1108
        %v1110 = vpop.xlane.xlu0 %1109
        %v1111 = vsel %vm912, %v1100, -inf
        %1112 = vmax.xlane.f32.xlu0 %v1111
        %v1113 = vpop.xlane.xlu0 %1112
        %v1114 = vsel %vm912, %v1103, -inf
        %1115 = vmax.xlane.f32.xlu0 %v1114
        %v1116 = vpop.xlane.xlu0 %1115
        %v1117 = vsub.f32 %v1061, %v1107
        %v1118 = vsub.f32 %v1064, %v1110
        %v1119 = vsub.f32 %v1100, %v1113
        %v1120 = vsub.f32 %v1103, %v1116
        %v1121 = vmul.f32 %v1117, 1.442695
        %v1122 = vpow.pop %v1121
        %v1123 = vmul.f32 %v1118, 1.442695
        %v1124 = vpow.pop %v1123
        %v1125 = vmul.f32 %v1119, 1.442695
        %v1126 = vpow.pop %v1125
        %v1127 = vmul.f32 %v1120, 1.442695
        %v1128 = vpow.pop %v1127
        %v1129 = vsel %vm912, %v1122, 0.0
        %1130 = vadd.xlane.f32.xlu0 %v1129
        %v1131 = vpop.xlane.xlu0 %1130
        %v1132 = vsel %vm912, %v1124, 0.0
        %1133 = vadd.xlane.f32.xlu0 %v1132
        %v1134 = vpop.xlane.xlu0 %1133
        %v1135 = vsel %vm912, %v1126, 0.0
        %1136 = vadd.xlane.f32.xlu0 %v1135
        %v1137 = vpop.xlane.xlu0 %1136
        %v1138 = vsel %vm912, %v1128, 0.0
        %1139 = vadd.xlane.f32.xlu0 %v1138
        %v1140 = vpop.xlane.xlu0 %1139
        %v1141 = vrcp.pop %v1131
        %v1142 = vrcp.pop %v1134
        %v1143 = vrcp.pop %v1137
        %v1144 = vrcp.pop %v1140
        %v1145 = vmul.f32 %v1122, %v1141
        %v1146 = vmul.f32 %v1124, %v1142
        %v1147 = vmul.f32 %v1126, %v1143
        %v1148 = vmul.f32 %v1128, %v1144
        %1149 = vrot.lane.b32.xlu0 %v818, 56
        %v1150 = vpop.permute.xlu0 %1149
        %1151 = vrot.lane.b32.xlu0 %v821, 56
        %v1152 = vpop.permute.xlu0 %1151
        %v1156 = vsel %vm912, %v1145, 0
        %v1159 = vsel %vm912, %v1146, 0
        %1161 = vmatpush.msra.mxu0 0.0
        %1162 = vmatpush.msra.mxu0 0.0
        %1163 = vmatpush.msra.mxu0 0.0
        %1164 = vmatpush.msra.mxu0 0.0
        %1165 = vmatpush.msra.mxu0 0.0
        %1166 = vmatpush.msra.mxu0 0.0
        %1167 = vmatpush.msra.mxu0 0.0
        %1168 = vmatpush.msra.mxu0 0.0
        %1169 = vmatpush.msra.mxu0 0.0
        %1170 = vmatpush.msra.mxu0 0.0
        %1171 = vmatpush.msra.mxu0 0.0
        %1172 = vmatpush.msra.mxu0 0.0
        %1173 = vmatpush.msra.mxu0 0.0
        %1174 = vmatpush.msra.mxu0 0.0
        %1175 = vmatpush.msra.mxu0 %v1152
        %1176 = vmatpush.msra.mxu0 %v1150
        %1177 = vmatmul.f32.gmra.mxu0 %v1156
        %v1178 = vpop.f32.mrf.mxu0
        %v1179 = vadd.f32 0.0, %v1178
        %1180 = vmatmul.f32.gmra.mxu0 %v1159
        %v1181 = vpop.f32.mrf.mxu0
        %v1182 = vadd.f32 0.0, %v1181
        %1183 = vdwg.mxu0
        %1184 = vrot.lane.b32.xlu0 %v824, 56
        %v1185 = vpop.permute.xlu0 %1184
        %1186 = vrot.lane.b32.xlu0 %v827, 56
        %v1187 = vpop.permute.xlu0 %1186
        %v1191 = vsel %vm912, %v1147, 0
        %v1194 = vsel %vm912, %v1148, 0
        %1196 = vmatpush.msra.mxu0 0.0
        %1197 = vmatpush.msra.mxu0 0.0
        %1198 = vmatpush.msra.mxu0 0.0
        %1199 = vmatpush.msra.mxu0 0.0
        %1200 = vmatpush.msra.mxu0 0.0
        %1201 = vmatpush.msra.mxu0 0.0
        %1202 = vmatpush.msra.mxu0 0.0
        %1203 = vmatpush.msra.mxu0 0.0
        %1204 = vmatpush.msra.mxu0 0.0
        %1205 = vmatpush.msra.mxu0 0.0
        %1206 = vmatpush.msra.mxu0 0.0
        %1207 = vmatpush.msra.mxu0 0.0
        %1208 = vmatpush.msra.mxu0 0.0
        %1209 = vmatpush.msra.mxu0 0.0
        %1210 = vmatpush.msra.mxu0 %v1187
        %1211 = vmatpush.msra.mxu0 %v1185
        %1212 = vmatmul.f32.gmra.mxu0 %v1191
        %v1213 = vpop.f32.mrf.mxu0
        %v1214 = vadd.f32 0.0, %v1213
        %1215 = vmatmul.f32.gmra.mxu0 %v1194
        %v1216 = vpop.f32.mrf.mxu0
        %v1217 = vadd.f32 0.0, %v1216
        %1218 = vdwg.mxu0
        %1219 = vrot.lane.b32.xlu0 %v829, 112
        %v1220 = vpop.permute.xlu0 %1219
        %1221 = vrot.lane.b32.xlu0 %v830, 112
        %v1222 = vpop.permute.xlu0 %1221
        %1223 = vrot.lane.b32.xlu0 %v818, 80
        %v1224 = vpop.permute.xlu0 %1223
        %1225 = vrot.lane.b32.xlu0 %v821, 80
        %v1226 = vpop.permute.xlu0 %1225
        %v1227 = vsel %vm839, %v1220, 0
        %v1229 = vsel %vm839, %v1222, 0
        %v1231 = vsel %vm839, %v1224, 0
        %v1233 = vsel %vm839, %v1226, 0
        %1235 = vmatpush.xpose.msra.mxu0 0.0
        %1236 = vmatpush.xpose.msra.mxu0 0.0
        %1237 = vmatpush.xpose.msra.mxu0 0.0
        %1238 = vmatpush.xpose.msra.mxu0 0.0
        %1239 = vmatpush.xpose.msra.mxu0 0.0
        %1240 = vmatpush.xpose.msra.mxu0 0.0
        %1241 = vmatpush.xpose.msra.mxu0 0.0
        %1242 = vmatpush.xpose.msra.mxu0 0.0
        %1243 = vmatpush.xpose.msra.mxu0 0.0
        %1244 = vmatpush.xpose.msra.mxu0 0.0
        %1245 = vmatpush.xpose.msra.mxu0 0.0
        %1246 = vmatpush.xpose.msra.mxu0 0.0
        %1247 = vmatpush.xpose.msra.mxu0 0.0
        %1248 = vmatpush.xpose.msra.mxu0 0.0
        %1249 = vmatpush.xpose.msra.mxu0 %v1233
        %1250 = vmatpush.xpose.msra.mxu0 %v1231
        %1251 = vmatmul.f32.gmra.mxu0 %v1227
        %v1252 = vpop.f32.mrf.mxu0
        %v1253 = vadd.f32 0.0, %v1252
        %1254 = vmatmul.f32.gmra.mxu0 %v1229
        %v1255 = vpop.f32.mrf.mxu0
        %v1256 = vadd.f32 0.0, %v1255
        %1257 = vdwg.mxu0
        %1258 = vrot.lane.b32.xlu0 %v831, 112
        %v1259 = vpop.permute.xlu0 %1258
        %1260 = vrot.lane.b32.xlu0 %v832, 112
        %v1261 = vpop.permute.xlu0 %1260
        %1262 = vrot.lane.b32.xlu0 %v824, 80
        %v1263 = vpop.permute.xlu0 %1262
        %1264 = vrot.lane.b32.xlu0 %v827, 80
        %v1265 = vpop.permute.xlu0 %1264
        %v1266 = vsel %vm839, %v1259, 0
        %v1268 = vsel %vm839, %v1261, 0
        %v1270 = vsel %vm839, %v1263, 0
        %v1272 = vsel %vm839, %v1265, 0
        %1274 = vmatpush.xpose.msra.mxu0 0.0
        %1275 = vmatpush.xpose.msra.mxu0 0.0
        %1276 = vmatpush.xpose.msra.mxu0 0.0
        %1277 = vmatpush.xpose.msra.mxu0 0.0
        %1278 = vmatpush.xpose.msra.mxu0 0.0
        %1279 = vmatpush.xpose.msra.mxu0 0.0
        %1280 = vmatpush.xpose.msra.mxu0 0.0
        %1281 = vmatpush.xpose.msra.mxu0 0.0
        %1282 = vmatpush.xpose.msra.mxu0 0.0
        %1283 = vmatpush.xpose.msra.mxu0 0.0
        %1284 = vmatpush.xpose.msra.mxu0 0.0
        %1285 = vmatpush.xpose.msra.mxu0 0.0
        %1286 = vmatpush.xpose.msra.mxu0 0.0
        %1287 = vmatpush.xpose.msra.mxu0 0.0
        %1288 = vmatpush.xpose.msra.mxu0 %v1272
        %1289 = vmatpush.xpose.msra.mxu0 %v1270
        %1290 = vmatmul.f32.gmra.mxu0 %v1266
        %v1291 = vpop.f32.mrf.mxu0
        %v1292 = vadd.f32 0.0, %v1291
        %1293 = vmatmul.f32.gmra.mxu0 %v1268
        %v1294 = vpop.f32.mrf.mxu0
        %v1295 = vadd.f32 0.0, %v1294
        %1296 = vdwg.mxu0
        %v1297 = vsel %vm912, %v1253, -inf
        %1298 = vmax.xlane.f32.xlu0 %v1297
        %v1299 = vpop.xlane.xlu0 %1298
        %v1300 = vsel %vm912, %v1256, -inf
        %1301 = vmax.xlane.f32.xlu0 %v1300
        %v1302 = vpop.xlane.xlu0 %1301
        %v1303 = vsel %vm912, %v1292, -inf
        %1304 = vmax.xlane.f32.xlu0 %v1303
        %v1305 = vpop.xlane.xlu0 %1304
        %v1306 = vsel %vm912, %v1295, -inf
        %1307 = vmax.xlane.f32.xlu0 %v1306
        %v1308 = vpop.xlane.xlu0 %1307
        %v1309 = vsub.f32 %v1253, %v1299
        %v1310 = vsub.f32 %v1256, %v1302
        %v1311 = vsub.f32 %v1292, %v1305
        %v1312 = vsub.f32 %v1295, %v1308
        %v1313 = vmul.f32 %v1309, 1.442695
        %v1314 = vpow.pop %v1313
        %v1315 = vmul.f32 %v1310, 1.442695
        %v1316 = vpow.pop %v1315
        %v1317 = vmul.f32 %v1311, 1.442695
        %v1318 = vpow.pop %v1317
        %v1319 = vmul.f32 %v1312, 1.442695
        %v1320 = vpow.pop %v1319
        %v1321 = vsel %vm912, %v1314, 0.0
        %1322 = vadd.xlane.f32.xlu0 %v1321
        %v1323 = vpop.xlane.xlu0 %1322
        %v1324 = vsel %vm912, %v1316, 0.0
        %1325 = vadd.xlane.f32.xlu0 %v1324
        %v1326 = vpop.xlane.xlu0 %1325
        %v1327 = vsel %vm912, %v1318, 0.0
        %1328 = vadd.xlane.f32.xlu0 %v1327
        %v1329 = vpop.xlane.xlu0 %1328
        %v1330 = vsel %vm912, %v1320, 0.0
        %1331 = vadd.xlane.f32.xlu0 %v1330
        %v1332 = vpop.xlane.xlu0 %1331
        %v1333 = vrcp.pop %v1323
        %v1334 = vrcp.pop %v1326
        %v1335 = vrcp.pop %v1329
        %v1336 = vrcp.pop %v1332
        %v1337 = vmul.f32 %v1314, %v1333
        %v1338 = vmul.f32 %v1316, %v1334
        %v1339 = vmul.f32 %v1318, %v1335
        %v1340 = vmul.f32 %v1320, %v1336
        %1341 = vrot.lane.b32.xlu0 %v818, 48
        %v1342 = vpop.permute.xlu0 %1341
        %1343 = vrot.lane.b32.xlu0 %v821, 48
        %v1344 = vpop.permute.xlu0 %1343
        %v1348 = vsel %vm912, %v1337, 0
        %v1351 = vsel %vm912, %v1338, 0
        %1353 = vmatpush.msra.mxu0 0.0
        %1354 = vmatpush.msra.mxu0 0.0
        %1355 = vmatpush.msra.mxu0 0.0
        %1356 = vmatpush.msra.mxu0 0.0
        %1357 = vmatpush.msra.mxu0 0.0
        %1358 = vmatpush.msra.mxu0 0.0
        %1359 = vmatpush.msra.mxu0 0.0
        %1360 = vmatpush.msra.mxu0 0.0
        %1361 = vmatpush.msra.mxu0 0.0
        %1362 = vmatpush.msra.mxu0 0.0
        %1363 = vmatpush.msra.mxu0 0.0
        %1364 = vmatpush.msra.mxu0 0.0
        %1365 = vmatpush.msra.mxu0 0.0
        %1366 = vmatpush.msra.mxu0 0.0
        %1367 = vmatpush.msra.mxu0 %v1344
        %1368 = vmatpush.msra.mxu0 %v1342
        %1369 = vmatmul.f32.gmra.mxu0 %v1348
        %v1370 = vpop.f32.mrf.mxu0
        %v1371 = vadd.f32 0.0, %v1370
        %1372 = vmatmul.f32.gmra.mxu0 %v1351
        %v1373 = vpop.f32.mrf.mxu0
        %v1374 = vadd.f32 0.0, %v1373
        %1375 = vdwg.mxu0
        %1376 = vrot.lane.b32.xlu0 %v824, 48
        %v1377 = vpop.permute.xlu0 %1376
        %1378 = vrot.lane.b32.xlu0 %v827, 48
        %v1379 = vpop.permute.xlu0 %1378
        %v1383 = vsel %vm912, %v1339, 0
        %v1386 = vsel %vm912, %v1340, 0
        %1388 = vmatpush.msra.mxu0 0.0
        %1389 = vmatpush.msra.mxu0 0.0
        %1390 = vmatpush.msra.mxu0 0.0
        %1391 = vmatpush.msra.mxu0 0.0
        %1392 = vmatpush.msra.mxu0 0.0
        %1393 = vmatpush.msra.mxu0 0.0
        %1394 = vmatpush.msra.mxu0 0.0
        %1395 = vmatpush.msra.mxu0 0.0
        %1396 = vmatpush.msra.mxu0 0.0
        %1397 = vmatpush.msra.mxu0 0.0
        %1398 = vmatpush.msra.mxu0 0.0
        %1399 = vmatpush.msra.mxu0 0.0
        %1400 = vmatpush.msra.mxu0 0.0
        %1401 = vmatpush.msra.mxu0 0.0
        %1402 = vmatpush.msra.mxu0 %v1379
        %1403 = vmatpush.msra.mxu0 %v1377
        %1404 = vmatmul.f32.gmra.mxu0 %v1383
        %v1405 = vpop.f32.mrf.mxu0
        %v1406 = vadd.f32 0.0, %v1405
        %1407 = vmatmul.f32.gmra.mxu0 %v1386
        %v1408 = vpop.f32.mrf.mxu0
        %v1409 = vadd.f32 0.0, %v1408
        %1410 = vdwg.mxu0
        %1411 = vrot.lane.b32.xlu0 %v829, 104
        %v1412 = vpop.permute.xlu0 %1411
        %1413 = vrot.lane.b32.xlu0 %v830, 104
        %v1414 = vpop.permute.xlu0 %1413
        %1415 = vrot.lane.b32.xlu0 %v818, 72
        %v1416 = vpop.permute.xlu0 %1415
        %1417 = vrot.lane.b32.xlu0 %v821, 72
        %v1418 = vpop.permute.xlu0 %1417
        %v1419 = vsel %vm839, %v1412, 0
        %v1421 = vsel %vm839, %v1414, 0
        %v1423 = vsel %vm839, %v1416, 0
        %v1425 = vsel %vm839, %v1418, 0
        %1427 = vmatpush.xpose.msra.mxu0 0.0
        %1428 = vmatpush.xpose.msra.mxu0 0.0
        %1429 = vmatpush.xpose.msra.mxu0 0.0
        %1430 = vmatpush.xpose.msra.mxu0 0.0
        %1431 = vmatpush.xpose.msra.mxu0 0.0
        %1432 = vmatpush.xpose.msra.mxu0 0.0
        %1433 = vmatpush.xpose.msra.mxu0 0.0
        %1434 = vmatpush.xpose.msra.mxu0 0.0
        %1435 = vmatpush.xpose.msra.mxu0 0.0
        %1436 = vmatpush.xpose.msra.mxu0 0.0
        %1437 = vmatpush.xpose.msra.mxu0 0.0
        %1438 = vmatpush.xpose.msra.mxu0 0.0
        %1439 = vmatpush.xpose.msra.mxu0 0.0
        %1440 = vmatpush.xpose.msra.mxu0 0.0
        %1441 = vmatpush.xpose.msra.mxu0 %v1425
        %1442 = vmatpush.xpose.msra.mxu0 %v1423
        %1443 = vmatmul.f32.gmra.mxu0 %v1419
        %v1444 = vpop.f32.mrf.mxu0
        %v1445 = vadd.f32 0.0, %v1444
        %1446 = vmatmul.f32.gmra.mxu0 %v1421
        %v1447 = vpop.f32.mrf.mxu0
        %v1448 = vadd.f32 0.0, %v1447
        %1449 = vdwg.mxu0
        %1450 = vrot.lane.b32.xlu0 %v831, 104
        %v1451 = vpop.permute.xlu0 %1450
        %1452 = vrot.lane.b32.xlu0 %v832, 104
        %v1453 = vpop.permute.xlu0 %1452
        %1454 = vrot.lane.b32.xlu0 %v824, 72
        %v1455 = vpop.permute.xlu0 %1454
        %1456 = vrot.lane.b32.xlu0 %v827, 72
        %v1457 = vpop.permute.xlu0 %1456
        %v1458 = vsel %vm839, %v1451, 0
        %v1460 = vsel %vm839, %v1453, 0
        %v1462 = vsel %vm839, %v1455, 0
        %v1464 = vsel %vm839, %v1457, 0
        %1466 = vmatpush.xpose.msra.mxu0 0.0
        %1467 = vmatpush.xpose.msra.mxu0 0.0
        %1468 = vmatpush.xpose.msra.mxu0 0.0
        %1469 = vmatpush.xpose.msra.mxu0 0.0
        %1470 = vmatpush.xpose.msra.mxu0 0.0
        %1471 = vmatpush.xpose.msra.mxu0 0.0
        %1472 = vmatpush.xpose.msra.mxu0 0.0
        %1473 = vmatpush.xpose.msra.mxu0 0.0
        %1474 = vmatpush.xpose.msra.mxu0 0.0
        %1475 = vmatpush.xpose.msra.mxu0 0.0
        %1476 = vmatpush.xpose.msra.mxu0 0.0
        %1477 = vmatpush.xpose.msra.mxu0 0.0
        %1478 = vmatpush.xpose.msra.mxu0 0.0
        %1479 = vmatpush.xpose.msra.mxu0 0.0
        %1480 = vmatpush.xpose.msra.mxu0 %v1464
        %1481 = vmatpush.xpose.msra.mxu0 %v1462
        %1482 = vmatmul.f32.gmra.mxu0 %v1458
        %v1483 = vpop.f32.mrf.mxu0
        %v1484 = vadd.f32 0.0, %v1483
        %1485 = vmatmul.f32.gmra.mxu0 %v1460
        %v1486 = vpop.f32.mrf.mxu0
        %v1487 = vadd.f32 0.0, %v1486
        %1488 = vdwg.mxu0
        %v1489 = vsel %vm912, %v1445, -inf
        %1490 = vmax.xlane.f32.xlu0 %v1489
        %v1491 = vpop.xlane.xlu0 %1490
        %v1492 = vsel %vm912, %v1448, -inf
        %1493 = vmax.xlane.f32.xlu0 %v1492
        %v1494 = vpop.xlane.xlu0 %1493
        %v1495 = vsel %vm912, %v1484, -inf
        %1496 = vmax.xlane.f32.xlu0 %v1495
        %v1497 = vpop.xlane.xlu0 %1496
        %v1498 = vsel %vm912, %v1487, -inf
        %1499 = vmax.xlane.f32.xlu0 %v1498
        %v1500 = vpop.xlane.xlu0 %1499
        %v1501 = vsub.f32 %v1445, %v1491
        %v1502 = vsub.f32 %v1448, %v1494
        %v1503 = vsub.f32 %v1484, %v1497
        %v1504 = vsub.f32 %v1487, %v1500
        %v1505 = vmul.f32 %v1501, 1.442695
        %v1506 = vpow.pop %v1505
        %v1507 = vmul.f32 %v1502, 1.442695
        %v1508 = vpow.pop %v1507
        %v1509 = vmul.f32 %v1503, 1.442695
        %v1510 = vpow.pop %v1509
        %v1511 = vmul.f32 %v1504, 1.442695
        %v1512 = vpow.pop %v1511
        %v1513 = vsel %vm912, %v1506, 0.0
        %1514 = vadd.xlane.f32.xlu0 %v1513
        %v1515 = vpop.xlane.xlu0 %1514
        %v1516 = vsel %vm912, %v1508, 0.0
        %1517 = vadd.xlane.f32.xlu0 %v1516
        %v1518 = vpop.xlane.xlu0 %1517
        %v1519 = vsel %vm912, %v1510, 0.0
        %1520 = vadd.xlane.f32.xlu0 %v1519
        %v1521 = vpop.xlane.xlu0 %1520
        %v1522 = vsel %vm912, %v1512, 0.0
        %1523 = vadd.xlane.f32.xlu0 %v1522
        %v1524 = vpop.xlane.xlu0 %1523
        %v1525 = vrcp.pop %v1515
        %v1526 = vrcp.pop %v1518
        %v1527 = vrcp.pop %v1521
        %v1528 = vrcp.pop %v1524
        %v1529 = vmul.f32 %v1506, %v1525
        %v1530 = vmul.f32 %v1508, %v1526
        %v1531 = vmul.f32 %v1510, %v1527
        %v1532 = vmul.f32 %v1512, %v1528
        %1533 = vrot.lane.b32.xlu0 %v818, 40
        %v1534 = vpop.permute.xlu0 %1533
        %1535 = vrot.lane.b32.xlu0 %v821, 40
        %v1536 = vpop.permute.xlu0 %1535
        %v1540 = vsel %vm912, %v1529, 0
        %v1543 = vsel %vm912, %v1530, 0
        %1545 = vmatpush.msra.mxu0 0.0
        %1546 = vmatpush.msra.mxu0 0.0
        %1547 = vmatpush.msra.mxu0 0.0
        %1548 = vmatpush.msra.mxu0 0.0
        %1549 = vmatpush.msra.mxu0 0.0
        %1550 = vmatpush.msra.mxu0 0.0
        %1551 = vmatpush.msra.mxu0 0.0
        %1552 = vmatpush.msra.mxu0 0.0
        %1553 = vmatpush.msra.mxu0 0.0
        %1554 = vmatpush.msra.mxu0 0.0
        %1555 = vmatpush.msra.mxu0 0.0
        %1556 = vmatpush.msra.mxu0 0.0
        %1557 = vmatpush.msra.mxu0 0.0
        %1558 = vmatpush.msra.mxu0 0.0
        %1559 = vmatpush.msra.mxu0 %v1536
        %1560 = vmatpush.msra.mxu0 %v1534
        %1561 = vmatmul.f32.gmra.mxu0 %v1540
        %v1562 = vpop.f32.mrf.mxu0
        %v1563 = vadd.f32 0.0, %v1562
        %1564 = vmatmul.f32.gmra.mxu0 %v1543
        %v1565 = vpop.f32.mrf.mxu0
        %v1566 = vadd.f32 0.0, %v1565
        %1567 = vdwg.mxu0
        %1568 = vrot.lane.b32.xlu0 %v824, 40
        %v1569 = vpop.permute.xlu0 %1568
        %1570 = vrot.lane.b32.xlu0 %v827, 40
        %v1571 = vpop.permute.xlu0 %1570
        %v1575 = vsel %vm912, %v1531, 0
        %v1578 = vsel %vm912, %v1532, 0
        %1580 = vmatpush.msra.mxu0 0.0
        %1581 = vmatpush.msra.mxu0 0.0
        %1582 = vmatpush.msra.mxu0 0.0
        %1583 = vmatpush.msra.mxu0 0.0
        %1584 = vmatpush.msra.mxu0 0.0
        %1585 = vmatpush.msra.mxu0 0.0
        %1586 = vmatpush.msra.mxu0 0.0
        %1587 = vmatpush.msra.mxu0 0.0
        %1588 = vmatpush.msra.mxu0 0.0
        %1589 = vmatpush.msra.mxu0 0.0
        %1590 = vmatpush.msra.mxu0 0.0
        %1591 = vmatpush.msra.mxu0 0.0
        %1592 = vmatpush.msra.mxu0 0.0
        %1593 = vmatpush.msra.mxu0 0.0
        %1594 = vmatpush.msra.mxu0 %v1571
        %1595 = vmatpush.msra.mxu0 %v1569
        %1596 = vmatmul.f32.gmra.mxu0 %v1575
        %v1597 = vpop.f32.mrf.mxu0
        %v1598 = vadd.f32 0.0, %v1597
        %1599 = vmatmul.f32.gmra.mxu0 %v1578
        %v1600 = vpop.f32.mrf.mxu0
        %v1601 = vadd.f32 0.0, %v1600
        %1602 = vdwg.mxu0
        %1607 = vrot.lane.b32.xlu0 %v1179, 8
        %v1608 = vpop.permute.xlu0 %1607
        %1609 = vrot.lane.b32.xlu0 %v1182, 8
        %v1610 = vpop.permute.xlu0 %1609
        %1611 = vrot.lane.b32.xlu0 %v1214, 8
        %v1612 = vpop.permute.xlu0 %1611
        %1613 = vrot.lane.b32.xlu0 %v1217, 8
        %v1614 = vpop.permute.xlu0 %1613
        %1623 = vrot.lane.b32.xlu0 %v1371, 16
        %v1624 = vpop.permute.xlu0 %1623
        %1625 = vrot.lane.b32.xlu0 %v1374, 16
        %v1626 = vpop.permute.xlu0 %1625
        %1627 = vrot.lane.b32.xlu0 %v1406, 16
        %v1628 = vpop.permute.xlu0 %1627
        %1629 = vrot.lane.b32.xlu0 %v1409, 16
        %v1630 = vpop.permute.xlu0 %1629
        %1639 = vrot.lane.b32.xlu0 %v1563, 24
        %v1640 = vpop.permute.xlu0 %1639
        %1641 = vrot.lane.b32.xlu0 %v1566, 24
        %v1642 = vpop.permute.xlu0 %1641
        %1643 = vrot.lane.b32.xlu0 %v1598, 24
        %v1644 = vpop.permute.xlu0 %1643
        %1645 = vrot.lane.b32.xlu0 %v1601, 24
        %v1646 = vpop.permute.xlu0 %1645
        %v1651 = vsel %vm839, %v987, %v1608
        %v1652 = vsel %vm839, %v990, %v1610
        %v1653 = vsel %vm839, %v1022, %v1612
        %v1654 = vsel %vm839, %v1025, %v1614
        %v1655 = vsel %vm912, %v1651, %v1624
        %v1656 = vsel %vm912, %v1652, %v1626
        %v1657 = vsel %vm912, %v1653, %v1628
        %v1658 = vsel %vm912, %v1654, %v1630
        %vm1659 = vcmask 195584
        %v1660 = vsel %vm1659, %v1655, %v1640
        %v1661 = vsel %vm1659, %v1656, %v1642
        %v1662 = vsel %vm1659, %v1657, %v1644
        %v1663 = vsel %vm1659, %v1658, %v1646
        %v1664 = vld [vmem:[%s7] sm:$0xff]
        %v1665 = vld [vmem:[%s7 + $0x8] sm:$0xff]
        %v1666 = vld [vmem:[%s7 + $0x10] sm:$0xff]
        %v1667 = vld [vmem:[%s7 + $0x18] sm:$0xff]
        %v1668 = vld [vmem:[%s8] sm:$0x1]
        %v1670 = vperm.slane %v1668, 0
        %v1673 = vsel %vm787, %v1660, 0
        %v1676 = vsel %vm787, %v1661, 0
        %v1679 = vsel %vm787, %v1662, 0
        %v1682 = vsel %vm787, %v1663, 0
        %1684 = vmatpush.msra.mxu0 0.0
        %1685 = vmatpush.msra.mxu0 0.0
        %1686 = vmatpush.msra.mxu0 0.0
        %1687 = vmatpush.msra.mxu0 0.0
        %1688 = vmatpush.msra.mxu0 0.0
        %1689 = vmatpush.msra.mxu0 0.0
        %1690 = vmatpush.msra.mxu0 0.0
        %1691 = vmatpush.msra.mxu0 0.0
        %1692 = vmatpush.msra.mxu0 0.0
        %1693 = vmatpush.msra.mxu0 0.0
        %1694 = vmatpush.msra.mxu0 0.0
        %1695 = vmatpush.msra.mxu0 0.0
        %1696 = vmatpush.msra.mxu0 %v1667
        %1697 = vmatpush.msra.mxu0 %v1666
        %1698 = vmatpush.msra.mxu0 %v1665
        %1699 = vmatpush.msra.mxu0 %v1664
        %1700 = vmatmul.f32.gmra.mxu0 %v1673
        %v1701 = vpop.f32.mrf.mxu0
        %v1702 = vadd.f32 %v1670, %v1701
        %1703 = vmatmul.f32.gmra.mxu0 %v1676
        %v1704 = vpop.f32.mrf.mxu0
        %v1705 = vadd.f32 %v1670, %v1704
        %1706 = vmatmul.f32.gmra.mxu0 %v1679
        %v1707 = vpop.f32.mrf.mxu0
        %v1708 = vadd.f32 %v1670, %v1707
        %1709 = vmatmul.f32.gmra.mxu0 %v1682
        %v1710 = vpop.f32.mrf.mxu0
        %v1711 = vadd.f32 %v1670, %v1710
        %1712 = vdwg.mxu0
        %v1713 = vadd.f32 %v775, %v1702
        %v1714 = vadd.f32 %v776, %v1705
        %v1715 = vadd.f32 %v777, %v1708
        %v1716 = vadd.f32 %v778, %v1711
        %v1717 = vld [vmem:[%s9] sm:$0x1]
        %v1718 = vld [vmem:[%s10] sm:$0x1]
        %v1719 = vsel %vm787, %v1713, 0.0
        %1720 = vadd.xlane.f32.xlu0 %v1719
        %v1721 = vpop.xlane.xlu0 %1720
        %v1722 = vsel %vm787, %v1714, 0.0
        %1723 = vadd.xlane.f32.xlu0 %v1722
        %v1724 = vpop.xlane.xlu0 %1723
        %v1725 = vsel %vm787, %v1715, 0.0
        %1726 = vadd.xlane.f32.xlu0 %v1725
        %v1727 = vpop.xlane.xlu0 %1726
        %v1728 = vsel %vm787, %v1716, 0.0
        %1729 = vadd.xlane.f32.xlu0 %v1728
        %v1730 = vpop.xlane.xlu0 %1729
        %v1731 = vrcp.pop 32.0
        %v1732 = vmul.f32 32.0, %v1731
        %v1733 = vsub.f32 1.0, %v1732
        %v1734 = vmul.f32 %v1731, %v1733
        %v1735 = vadd.f32 %v1731, %v1734
        %vm1736 = vweird.f32 %v1731
        %v1737 = vsel %vm1736, %v1731, %v1735
        %v1738 = vmul.f32 %v1721, %v1737
        %v1739 = vmul.f32 %v1724, %v1737
        %v1740 = vmul.f32 %v1727, %v1737
        %v1741 = vmul.f32 %v1730, %v1737
        %v1742 = vsub.f32 %v1713, %v1738
        %v1743 = vsub.f32 %v1714, %v1739
        %v1744 = vsub.f32 %v1715, %v1740
        %v1745 = vsub.f32 %v1716, %v1741
        %v1746 = vmul.f32 %v1742, %v1742
        %v1747 = vmul.f32 %v1743, %v1743
        %v1748 = vmul.f32 %v1744, %v1744
        %v1749 = vmul.f32 %v1745, %v1745
        %v1750 = vsel %vm787, %v1746, 0.0
        %1751 = vadd.xlane.f32.xlu0 %v1750
        %v1752 = vpop.xlane.xlu0 %1751
        %v1753 = vsel %vm787, %v1747, 0.0
        %1754 = vadd.xlane.f32.xlu0 %v1753
        %v1755 = vpop.xlane.xlu0 %1754
        %v1756 = vsel %vm787, %v1748, 0.0
        %1757 = vadd.xlane.f32.xlu0 %v1756
        %v1758 = vpop.xlane.xlu0 %1757
        %v1759 = vsel %vm787, %v1749, 0.0
        %1760 = vadd.xlane.f32.xlu0 %v1759
        %v1761 = vpop.xlane.xlu0 %1760
        %v1762 = vmul.f32 %v1752, %v1737
        %v1763 = vmul.f32 %v1755, %v1737
        %v1764 = vmul.f32 %v1758, %v1737
        %v1765 = vmul.f32 %v1761, %v1737
        %v1766 = vadd.f32 %v1762, 1e-05
        %v1767 = vadd.f32 %v1763, 1e-05
        %v1768 = vadd.f32 %v1764, 1e-05
        %v1769 = vadd.f32 %v1765, 1e-05
        %v1770 = vrsqrt.pop %v1766
        %v1771 = vmul.f32 %v1770, %v1766
        %v1772 = vmul.f32 %v1771, %v1770
        %v1773 = vmul.f32 0.5, %v1772
        %v1774 = vsub.f32 1.5, %v1773
        %v1775 = vmul.f32 %v1770, %v1774
        %vm1776 = vweird.f32 %v1766
        %vm1777 = vweird.f32 %v1770
        %vm1778 = vmor %vm1776, %vm1777
        %v1779 = vsel %vm1778, %v1770, %v1775
        %v1780 = vrsqrt.pop %v1767
        %v1781 = vmul.f32 %v1780, %v1767
        %v1782 = vmul.f32 %v1781, %v1780
        %v1783 = vmul.f32 0.5, %v1782
        %v1784 = vsub.f32 1.5, %v1783
        %v1785 = vmul.f32 %v1780, %v1784
        %vm1786 = vweird.f32 %v1767
        %vm1787 = vweird.f32 %v1780
        %vm1788 = vmor %vm1786, %vm1787
        %v1789 = vsel %vm1788, %v1780, %v1785
        %v1790 = vrsqrt.pop %v1768
        %v1791 = vmul.f32 %v1790, %v1768
        %v1792 = vmul.f32 %v1791, %v1790
        %v1793 = vmul.f32 0.5, %v1792
        %v1794 = vsub.f32 1.5, %v1793
        %v1795 = vmul.f32 %v1790, %v1794
        %vm1796 = vweird.f32 %v1768
        %vm1797 = vweird.f32 %v1790
        %vm1798 = vmor %vm1796, %vm1797
        %v1799 = vsel %vm1798, %v1790, %v1795
        %v1800 = vrsqrt.pop %v1769
        %v1801 = vmul.f32 %v1800, %v1769
        %v1802 = vmul.f32 %v1801, %v1800
        %v1803 = vmul.f32 0.5, %v1802
        %v1804 = vsub.f32 1.5, %v1803
        %v1805 = vmul.f32 %v1800, %v1804
        %vm1806 = vweird.f32 %v1769
        %vm1807 = vweird.f32 %v1800
        %vm1808 = vmor %vm1806, %vm1807
        %v1809 = vsel %vm1808, %v1800, %v1805
        %v1810 = vmul.f32 %v1742, %v1779
        %v1811 = vmul.f32 %v1743, %v1789
        %v1812 = vmul.f32 %v1744, %v1799
        %v1813 = vmul.f32 %v1745, %v1809
        %v1815 = vperm.slane %v1717, 0
        %v1817 = vmul.f32 %v1810, %v1815
        %v1818 = vmul.f32 %v1811, %v1815
        %v1819 = vmul.f32 %v1812, %v1815
        %v1820 = vmul.f32 %v1813, %v1815
        %v1822 = vperm.slane %v1718, 0
        %v1824 = vadd.f32 %v1817, %v1822
        %v1825 = vadd.f32 %v1818, %v1822
        %v1826 = vadd.f32 %v1819, %v1822
        %v1827 = vadd.f32 %v1820, %v1822
        %v1828 = vld [vmem:[%s11] sm:$0xff]
        %v1829 = vld [vmem:[%s11 + $0x8] sm:$0xff]
        %v1830 = vld [vmem:[%s11 + $0x10] sm:$0xff]
        %v1831 = vld [vmem:[%s11 + $0x18] sm:$0xff]
        %v1832 = vld [vmem:[%s12] sm:$0x1]
        %v1834 = vperm.slane %v1832, 0
        %v1837 = vsel %vm787, %v1824, 0
        %v1840 = vsel %vm787, %v1825, 0
        %v1843 = vsel %vm787, %v1826, 0
        %v1846 = vsel %vm787, %v1827, 0
        %1848 = vmatpush.msra.mxu0 0.0
        %1849 = vmatpush.msra.mxu0 0.0
        %1850 = vmatpush.msra.mxu0 0.0
        %1851 = vmatpush.msra.mxu0 0.0
        %1852 = vmatpush.msra.mxu0 0.0
        %1853 = vmatpush.msra.mxu0 0.0
        %1854 = vmatpush.msra.mxu0 0.0
        %1855 = vmatpush.msra.mxu0 0.0
        %1856 = vmatpush.msra.mxu0 0.0
        %1857 = vmatpush.msra.mxu0 0.0
        %1858 = vmatpush.msra.mxu0 0.0
        %1859 = vmatpush.msra.mxu0 0.0
        %1860 = vmatpush.msra.mxu0 %v1831
        %1861 = vmatpush.msra.mxu0 %v1830
        %1862 = vmatpush.msra.mxu0 %v1829
        %1863 = vmatpush.msra.mxu0 %v1828
        %1864 = vmatmul.f32.gmra.mxu0 %v1837
        %v1865 = vpop.f32.mrf.mxu0
        %v1866 = vadd.f32 %v1834, %v1865
        %1867 = vmatmul.f32.gmra.mxu0 %v1840
        %v1868 = vpop.f32.mrf.mxu0
        %v1869 = vadd.f32 %v1834, %v1868
        %1870 = vmatmul.f32.gmra.mxu0 %v1843
        %v1871 = vpop.f32.mrf.mxu0
        %v1872 = vadd.f32 %v1834, %v1871
        %1873 = vmatmul.f32.gmra.mxu0 %v1846
        %v1874 = vpop.f32.mrf.mxu0
        %v1875 = vadd.f32 %v1834, %v1874
        %1876 = vdwg.mxu0
        %v1877 = vmul.f32 %v1866, 0.5
        %v1878 = vmul.f32 %v1869, 0.5
        %v1879 = vmul.f32 %v1872, 0.5
        %v1880 = vmul.f32 %v1875, 0.5
        %v1881 = vmul.f32 %v1866, 0.044715
        %v1882 = vmul.f32 %v1869, 0.044715
        %v1883 = vmul.f32 %v1872, 0.044715
        %v1884 = vmul.f32 %v1875, 0.044715
        %v1885 = vmul.f32 %v1881, %v1866
        %v1886 = vmul.f32 %v1882, %v1869
        %v1887 = vmul.f32 %v1883, %v1872
        %v1888 = vmul.f32 %v1884, %v1875
        %v1889 = vmul.f32 %v1885, %v1866
        %v1890 = vmul.f32 %v1886, %v1869
        %v1891 = vmul.f32 %v1887, %v1872
        %v1892 = vmul.f32 %v1888, %v1875
        %v1893 = vadd.f32 %v1866, %v1889
        %v1894 = vadd.f32 %v1869, %v1890
        %v1895 = vadd.f32 %v1872, %v1891
        %v1896 = vadd.f32 %v1875, %v1892
        %v1897 = vmul.f32 %v1893, 0.7978846
        %v1898 = vmul.f32 %v1894, 0.7978846
        %v1899 = vmul.f32 %v1895, 0.7978846
        %v1900 = vmul.f32 %v1896, 0.7978846
        %v1901 = vtanh.pop %v1897
        %v1902 = vtanh.pop %v1898
        %v1903 = vtanh.pop %v1899
        %v1904 = vtanh.pop %v1900
        %v1905 = vadd.f32 %v1901, 1.0
        %v1906 = vadd.f32 %v1902, 1.0
        %v1907 = vadd.f32 %v1903, 1.0
        %v1908 = vadd.f32 %v1904, 1.0
        %v1909 = vmul.f32 %v1877, %v1905
        %v1910 = vmul.f32 %v1878, %v1906
        %v1911 = vmul.f32 %v1879, %v1907
        %v1912 = vmul.f32 %v1880, %v1908
        %v1913 = vld [vmem:[%s13] sm:$0xff]
        %v1914 = vld [vmem:[%s13 + $0x8] sm:$0xff]
        %v1915 = vld [vmem:[%s13 + $0x10] sm:$0xff]
        %v1916 = vld [vmem:[%s13 + $0x18] sm:$0xff]
        %v1917 = vld [vmem:[%s13 + $0x20] sm:$0xff]
        %v1918 = vld [vmem:[%s13 + $0x28] sm:$0xff]
        %v1919 = vld [vmem:[%s13 + $0x30] sm:$0xff]
        %v1920 = vld [vmem:[%s13 + $0x38] sm:$0xff]
        %v1921 = vld [vmem:[%s13 + $0x40] sm:$0xff]
        %v1922 = vld [vmem:[%s13 + $0x48] sm:$0xff]
        %v1923 = vld [vmem:[%s13 + $0x50] sm:$0xff]
        %v1924 = vld [vmem:[%s13 + $0x58] sm:$0xff]
        %v1925 = vld [vmem:[%s13 + $0x60] sm:$0xff]
        %v1926 = vld [vmem:[%s13 + $0x68] sm:$0xff]
        %v1927 = vld [vmem:[%s13 + $0x70] sm:$0xff]
        %v1928 = vld [vmem:[%s13 + $0x78] sm:$0xff]
        %v1929 = vld [vmem:[%s14] sm:$0x1]
        %v1931 = vperm.slane %v1929, 0
        %1933 = vmatpush.msra.mxu0 %v1928
        %1934 = vmatpush.msra.mxu0 %v1927
        %1935 = vmatpush.msra.mxu0 %v1926
        %1936 = vmatpush.msra.mxu0 %v1925
        %1937 = vmatpush.msra.mxu0 %v1924
        %1938 = vmatpush.msra.mxu0 %v1923
        %1939 = vmatpush.msra.mxu0 %v1922
        %1940 = vmatpush.msra.mxu0 %v1921
        %1941 = vmatpush.msra.mxu0 %v1920
        %1942 = vmatpush.msra.mxu0 %v1919
        %1943 = vmatpush.msra.mxu0 %v1918
        %1944 = vmatpush.msra.mxu0 %v1917
        %1945 = vmatpush.msra.mxu0 %v1916
        %1946 = vmatpush.msra.mxu0 %v1915
        %1947 = vmatpush.msra.mxu0 %v1914
        %1948 = vmatpush.msra.mxu0 %v1913
        %1949 = vmatmul.f32.gmra.mxu0 %v1909
        %v1950 = vpop.f32.mrf.mxu0
        %v1951 = vadd.f32 %v1931, %v1950
        %1952 = vmatmul.f32.gmra.mxu0 %v1910
        %v1953 = vpop.f32.mrf.mxu0
        %v1954 = vadd.f32 %v1931, %v1953
        %1955 = vmatmul.f32.gmra.mxu0 %v1911
        %v1956 = vpop.f32.mrf.mxu0
        %v1957 = vadd.f32 %v1931, %v1956
        %1958 = vmatmul.f32.gmra.mxu0 %v1912
        %v1959 = vpop.f32.mrf.mxu0
        %v1960 = vadd.f32 %v1931, %v1959
        %1961 = vdwg.mxu0
        %v1962 = vadd.f32 %v1824, %v1951
        %v1963 = vadd.f32 %v1825, %v1954
        %v1964 = vadd.f32 %v1826, %v1957
        %v1965 = vadd.f32 %v1827, %v1960
        %v1966 = vld [vmem:[%s15] sm:$0x1]
        %v1967 = vld [vmem:[%s16] sm:$0x1]
        %v1968 = vsel %vm787, %v1962, 0.0
        %1969 = vadd.xlane.f32.xlu0 %v1968
        %v1970 = vpop.xlane.xlu0 %1969
        %v1971 = vsel %vm787, %v1963, 0.0
        %1972 = vadd.xlane.f32.xlu0 %v1971
        %v1973 = vpop.xlane.xlu0 %1972
        %v1974 = vsel %vm787, %v1964, 0.0
        %1975 = vadd.xlane.f32.xlu0 %v1974
        %v1976 = vpop.xlane.xlu0 %1975
        %v1977 = vsel %vm787, %v1965, 0.0
        %1978 = vadd.xlane.f32.xlu0 %v1977
        %v1979 = vpop.xlane.xlu0 %1978
        %v1980 = vmul.f32 %v1970, %v1737
        %v1981 = vmul.f32 %v1973, %v1737
        %v1982 = vmul.f32 %v1976, %v1737
        %v1983 = vmul.f32 %v1979, %v1737
        %v1984 = vsub.f32 %v1962, %v1980
        %v1985 = vsub.f32 %v1963, %v1981
        %v1986 = vsub.f32 %v1964, %v1982
        %v1987 = vsub.f32 %v1965, %v1983
        %v1988 = vmul.f32 %v1984, %v1984
        %v1989 = vmul.f32 %v1985, %v1985
        %v1990 = vmul.f32 %v1986, %v1986
        %v1991 = vmul.f32 %v1987, %v1987
        %v1992 = vsel %vm787, %v1988, 0.0
        %1993 = vadd.xlane.f32.xlu0 %v1992
        %v1994 = vpop.xlane.xlu0 %1993
        %v1995 = vsel %vm787, %v1989, 0.0
        %1996 = vadd.xlane.f32.xlu0 %v1995
        %v1997 = vpop.xlane.xlu0 %1996
        %v1998 = vsel %vm787, %v1990, 0.0
        %1999 = vadd.xlane.f32.xlu0 %v1998
        %v2000 = vpop.xlane.xlu0 %1999
        %v2001 = vsel %vm787, %v1991, 0.0
        %2002 = vadd.xlane.f32.xlu0 %v2001
        %v2003 = vpop.xlane.xlu0 %2002
        %v2004 = vmul.f32 %v1994, %v1737
        %v2005 = vmul.f32 %v1997, %v1737
        %v2006 = vmul.f32 %v2000, %v1737
        %v2007 = vmul.f32 %v2003, %v1737
        %v2008 = vadd.f32 %v2004, 1e-05
        %v2009 = vadd.f32 %v2005, 1e-05
        %v2010 = vadd.f32 %v2006, 1e-05
        %v2011 = vadd.f32 %v2007, 1e-05
        %v2012 = vrsqrt.pop %v2008
        %v2013 = vmul.f32 %v2012, %v2008
        %v2014 = vmul.f32 %v2013, %v2012
        %v2015 = vmul.f32 0.5, %v2014
        %v2016 = vsub.f32 1.5, %v2015
        %v2017 = vmul.f32 %v2012, %v2016
        %vm2018 = vweird.f32 %v2008
        %vm2019 = vweird.f32 %v2012
        %vm2020 = vmor %vm2018, %vm2019
        %v2021 = vsel %vm2020, %v2012, %v2017
        %v2022 = vrsqrt.pop %v2009
        %v2023 = vmul.f32 %v2022, %v2009
        %v2024 = vmul.f32 %v2023, %v2022
        %v2025 = vmul.f32 0.5, %v2024
        %v2026 = vsub.f32 1.5, %v2025
        %v2027 = vmul.f32 %v2022, %v2026
        %vm2028 = vweird.f32 %v2009
        %vm2029 = vweird.f32 %v2022
        %vm2030 = vmor %vm2028, %vm2029
        %v2031 = vsel %vm2030, %v2022, %v2027
        %v2032 = vrsqrt.pop %v2010
        %v2033 = vmul.f32 %v2032, %v2010
        %v2034 = vmul.f32 %v2033, %v2032
        %v2035 = vmul.f32 0.5, %v2034
        %v2036 = vsub.f32 1.5, %v2035
        %v2037 = vmul.f32 %v2032, %v2036
        %vm2038 = vweird.f32 %v2010
        %vm2039 = vweird.f32 %v2032
        %vm2040 = vmor %vm2038, %vm2039
        %v2041 = vsel %vm2040, %v2032, %v2037
        %v2042 = vrsqrt.pop %v2011
        %v2043 = vmul.f32 %v2042, %v2011
        %v2044 = vmul.f32 %v2043, %v2042
        %v2045 = vmul.f32 0.5, %v2044
        %v2046 = vsub.f32 1.5, %v2045
        %v2047 = vmul.f32 %v2042, %v2046
        %vm2048 = vweird.f32 %v2011
        %vm2049 = vweird.f32 %v2042
        %vm2050 = vmor %vm2048, %vm2049
        %v2051 = vsel %vm2050, %v2042, %v2047
        %v2052 = vmul.f32 %v1984, %v2021
        %v2053 = vmul.f32 %v1985, %v2031
        %v2054 = vmul.f32 %v1986, %v2041
        %v2055 = vmul.f32 %v1987, %v2051
        %v2057 = vperm.slane %v1966, 0
        %v2059 = vmul.f32 %v2052, %v2057
        %v2060 = vmul.f32 %v2053, %v2057
        %v2061 = vmul.f32 %v2054, %v2057
        %v2062 = vmul.f32 %v2055, %v2057
        %v2064 = vperm.slane %v1967, 0
        %v2066 = vadd.f32 %v2059, %v2064
        %v2067 = vadd.f32 %v2060, %v2064
        %v2068 = vadd.f32 %v2061, %v2064
        %v2069 = vadd.f32 %v2062, %v2064
        %s2070 = scalar_lea.vmem %s5, 32
        %v2071 = vld [vmem:[%s2070] sm:$0xff]
        %v2072 = vld [vmem:[%s2070 + $0x8] sm:$0xff]
        %v2073 = vld [vmem:[%s2070 + $0x10] sm:$0xff]
        %v2074 = vld [vmem:[%s2070 + $0x18] sm:$0xff]
        %s2075 = scalar_lea.vmem %s6, 1
        %v2076 = vld [vmem:[%s2075] sm:$0x1]
        %v2078 = vperm.slane %v2076, 0
        %v2081 = vsel %vm787, %v2066, 0
        %v2084 = vsel %vm787, %v2067, 0
        %v2087 = vsel %vm787, %v2068, 0
        %v2090 = vsel %vm787, %v2069, 0
        %2092 = vmatpush.msra.mxu0 0.0
        %2093 = vmatpush.msra.mxu0 0.0
        %2094 = vmatpush.msra.mxu0 0.0
        %2095 = vmatpush.msra.mxu0 0.0
        %2096 = vmatpush.msra.mxu0 0.0
        %2097 = vmatpush.msra.mxu0 0.0
        %2098 = vmatpush.msra.mxu0 0.0
        %2099 = vmatpush.msra.mxu0 0.0
        %2100 = vmatpush.msra.mxu0 0.0
        %2101 = vmatpush.msra.mxu0 0.0
        %2102 = vmatpush.msra.mxu0 0.0
        %2103 = vmatpush.msra.mxu0 0.0
        %2104 = vmatpush.msra.mxu0 %v2074
        %2105 = vmatpush.msra.mxu0 %v2073
        %2106 = vmatpush.msra.mxu0 %v2072
        %2107 = vmatpush.msra.mxu0 %v2071
        %2108 = vmatmul.f32.gmra.mxu0 %v2081
        %v2109 = vpop.f32.mrf.mxu0
        %v2110 = vadd.f32 %v2078, %v2109
        %2111 = vmatmul.f32.gmra.mxu0 %v2084
        %v2112 = vpop.f32.mrf.mxu0
        %v2113 = vadd.f32 %v2078, %v2112
        %2114 = vmatmul.f32.gmra.mxu0 %v2087
        %v2115 = vpop.f32.mrf.mxu0
        %v2116 = vadd.f32 %v2078, %v2115
        %2117 = vmatmul.f32.gmra.mxu0 %v2090
        %v2118 = vpop.f32.mrf.mxu0
        %v2119 = vadd.f32 %v2078, %v2118
        %2120 = vdwg.mxu0
        %v2121 = vmul.f32 %v2110, 0.35355338
        %v2122 = vmul.f32 %v2113, 0.35355338
        %v2123 = vmul.f32 %v2116, 0.35355338
        %v2124 = vmul.f32 %v2119, 0.35355338
        %2127 = vrot.lane.b32.xlu0 %v2110, 96
        %v2128 = vpop.permute.xlu0 %2127
        %2129 = vrot.lane.b32.xlu0 %v2113, 96
        %v2130 = vpop.permute.xlu0 %2129
        %v2132 = vsel %vm839, %v2121, 0
        %v2135 = vsel %vm839, %v2122, 0
        %v2137 = vsel %vm839, %v2128, 0
        %v2139 = vsel %vm839, %v2130, 0
        %2141 = vmatpush.xpose.msra.mxu0 0.0
        %2142 = vmatpush.xpose.msra.mxu0 0.0
        %2143 = vmatpush.xpose.msra.mxu0 0.0
        %2144 = vmatpush.xpose.msra.mxu0 0.0
        %2145 = vmatpush.xpose.msra.mxu0 0.0
        %2146 = vmatpush.xpose.msra.mxu0 0.0
        %2147 = vmatpush.xpose.msra.mxu0 0.0
        %2148 = vmatpush.xpose.msra.mxu0 0.0
        %2149 = vmatpush.xpose.msra.mxu0 0.0
        %2150 = vmatpush.xpose.msra.mxu0 0.0
        %2151 = vmatpush.xpose.msra.mxu0 0.0
        %2152 = vmatpush.xpose.msra.mxu0 0.0
        %2153 = vmatpush.xpose.msra.mxu0 0.0
        %2154 = vmatpush.xpose.msra.mxu0 0.0
        %2155 = vmatpush.xpose.msra.mxu0 %v2139
        %2156 = vmatpush.xpose.msra.mxu0 %v2137
        %2157 = vmatmul.f32.gmra.mxu0 %v2132
        %v2158 = vpop.f32.mrf.mxu0
        %v2159 = vadd.f32 0.0, %v2158
        %2160 = vmatmul.f32.gmra.mxu0 %v2135
        %v2161 = vpop.f32.mrf.mxu0
        %v2162 = vadd.f32 0.0, %v2161
        %2163 = vdwg.mxu0
        %2166 = vrot.lane.b32.xlu0 %v2116, 96
        %v2167 = vpop.permute.xlu0 %2166
        %2168 = vrot.lane.b32.xlu0 %v2119, 96
        %v2169 = vpop.permute.xlu0 %2168
        %v2171 = vsel %vm839, %v2123, 0
        %v2174 = vsel %vm839, %v2124, 0
        %v2176 = vsel %vm839, %v2167, 0
        %v2178 = vsel %vm839, %v2169, 0
        %2180 = vmatpush.xpose.msra.mxu0 0.0
        %2181 = vmatpush.xpose.msra.mxu0 0.0
        %2182 = vmatpush.xpose.msra.mxu0 0.0
        %2183 = vmatpush.xpose.msra.mxu0 0.0
        %2184 = vmatpush.xpose.msra.mxu0 0.0
        %2185 = vmatpush.xpose.msra.mxu0 0.0
        %2186 = vmatpush.xpose.msra.mxu0 0.0
        %2187 = vmatpush.xpose.msra.mxu0 0.0
        %2188 = vmatpush.xpose.msra.mxu0 0.0
        %2189 = vmatpush.xpose.msra.mxu0 0.0
        %2190 = vmatpush.xpose.msra.mxu0 0.0
        %2191 = vmatpush.xpose.msra.mxu0 0.0
        %2192 = vmatpush.xpose.msra.mxu0 0.0
        %2193 = vmatpush.xpose.msra.mxu0 0.0
        %2194 = vmatpush.xpose.msra.mxu0 %v2178
        %2195 = vmatpush.xpose.msra.mxu0 %v2176
        %2196 = vmatmul.f32.gmra.mxu0 %v2171
        %v2197 = vpop.f32.mrf.mxu0
        %v2198 = vadd.f32 0.0, %v2197
        %2199 = vmatmul.f32.gmra.mxu0 %v2174
        %v2200 = vpop.f32.mrf.mxu0
        %v2201 = vadd.f32 0.0, %v2200
        %2202 = vdwg.mxu0
        %v2203 = vsel %vm912, %v2159, -inf
        %2204 = vmax.xlane.f32.xlu0 %v2203
        %v2205 = vpop.xlane.xlu0 %2204
        %v2206 = vsel %vm912, %v2162, -inf
        %2207 = vmax.xlane.f32.xlu0 %v2206
        %v2208 = vpop.xlane.xlu0 %2207
        %v2209 = vsel %vm912, %v2198, -inf
        %2210 = vmax.xlane.f32.xlu0 %v2209
        %v2211 = vpop.xlane.xlu0 %2210
        %v2212 = vsel %vm912, %v2201, -inf
        %2213 = vmax.xlane.f32.xlu0 %v2212
        %v2214 = vpop.xlane.xlu0 %2213
        %v2215 = vsub.f32 %v2159, %v2205
        %v2216 = vsub.f32 %v2162, %v2208
        %v2217 = vsub.f32 %v2198, %v2211
        %v2218 = vsub.f32 %v2201, %v2214
        %v2219 = vmul.f32 %v2215, 1.442695
        %v2220 = vpow.pop %v2219
        %v2221 = vmul.f32 %v2216, 1.442695
        %v2222 = vpow.pop %v2221
        %v2223 = vmul.f32 %v2217, 1.442695
        %v2224 = vpow.pop %v2223
        %v2225 = vmul.f32 %v2218, 1.442695
        %v2226 = vpow.pop %v2225
        %v2227 = vsel %vm912, %v2220, 0.0
        %2228 = vadd.xlane.f32.xlu0 %v2227
        %v2229 = vpop.xlane.xlu0 %2228
        %v2230 = vsel %vm912, %v2222, 0.0
        %2231 = vadd.xlane.f32.xlu0 %v2230
        %v2232 = vpop.xlane.xlu0 %2231
        %v2233 = vsel %vm912, %v2224, 0.0
        %2234 = vadd.xlane.f32.xlu0 %v2233
        %v2235 = vpop.xlane.xlu0 %2234
        %v2236 = vsel %vm912, %v2226, 0.0
        %2237 = vadd.xlane.f32.xlu0 %v2236
        %v2238 = vpop.xlane.xlu0 %2237
        %v2239 = vrcp.pop %v2229
        %v2240 = vrcp.pop %v2232
        %v2241 = vrcp.pop %v2235
        %v2242 = vrcp.pop %v2238
        %v2243 = vmul.f32 %v2220, %v2239
        %v2244 = vmul.f32 %v2222, %v2240
        %v2245 = vmul.f32 %v2224, %v2241
        %v2246 = vmul.f32 %v2226, %v2242
        %2247 = vrot.lane.b32.xlu0 %v2110, 64
        %v2248 = vpop.permute.xlu0 %2247
        %2249 = vrot.lane.b32.xlu0 %v2113, 64
        %v2250 = vpop.permute.xlu0 %2249
        %v2254 = vsel %vm912, %v2243, 0
        %v2257 = vsel %vm912, %v2244, 0
        %2259 = vmatpush.msra.mxu0 0.0
        %2260 = vmatpush.msra.mxu0 0.0
        %2261 = vmatpush.msra.mxu0 0.0
        %2262 = vmatpush.msra.mxu0 0.0
        %2263 = vmatpush.msra.mxu0 0.0
        %2264 = vmatpush.msra.mxu0 0.0
        %2265 = vmatpush.msra.mxu0 0.0
        %2266 = vmatpush.msra.mxu0 0.0
        %2267 = vmatpush.msra.mxu0 0.0
        %2268 = vmatpush.msra.mxu0 0.0
        %2269 = vmatpush.msra.mxu0 0.0
        %2270 = vmatpush.msra.mxu0 0.0
        %2271 = vmatpush.msra.mxu0 0.0
        %2272 = vmatpush.msra.mxu0 0.0
        %2273 = vmatpush.msra.mxu0 %v2250
        %2274 = vmatpush.msra.mxu0 %v2248
        %2275 = vmatmul.f32.gmra.mxu0 %v2254
        %v2276 = vpop.f32.mrf.mxu0
        %v2277 = vadd.f32 0.0, %v2276
        %2278 = vmatmul.f32.gmra.mxu0 %v2257
        %v2279 = vpop.f32.mrf.mxu0
        %v2280 = vadd.f32 0.0, %v2279
        %2281 = vdwg.mxu0
        %2282 = vrot.lane.b32.xlu0 %v2116, 64
        %v2283 = vpop.permute.xlu0 %2282
        %2284 = vrot.lane.b32.xlu0 %v2119, 64
        %v2285 = vpop.permute.xlu0 %2284
        %v2289 = vsel %vm912, %v2245, 0
        %v2292 = vsel %vm912, %v2246, 0
        %2294 = vmatpush.msra.mxu0 0.0
        %2295 = vmatpush.msra.mxu0 0.0
        %2296 = vmatpush.msra.mxu0 0.0
        %2297 = vmatpush.msra.mxu0 0.0
        %2298 = vmatpush.msra.mxu0 0.0
        %2299 = vmatpush.msra.mxu0 0.0
        %2300 = vmatpush.msra.mxu0 0.0
        %2301 = vmatpush.msra.mxu0 0.0
        %2302 = vmatpush.msra.mxu0 0.0
        %2303 = vmatpush.msra.mxu0 0.0
        %2304 = vmatpush.msra.mxu0 0.0
        %2305 = vmatpush.msra.mxu0 0.0
        %2306 = vmatpush.msra.mxu0 0.0
        %2307 = vmatpush.msra.mxu0 0.0
        %2308 = vmatpush.msra.mxu0 %v2285
        %2309 = vmatpush.msra.mxu0 %v2283
        %2310 = vmatmul.f32.gmra.mxu0 %v2289
        %v2311 = vpop.f32.mrf.mxu0
        %v2312 = vadd.f32 0.0, %v2311
        %2313 = vmatmul.f32.gmra.mxu0 %v2292
        %v2314 = vpop.f32.mrf.mxu0
        %v2315 = vadd.f32 0.0, %v2314
        %2316 = vdwg.mxu0
        %2317 = vrot.lane.b32.xlu0 %v2121, 120
        %v2318 = vpop.permute.xlu0 %2317
        %2319 = vrot.lane.b32.xlu0 %v2122, 120
        %v2320 = vpop.permute.xlu0 %2319
        %2321 = vrot.lane.b32.xlu0 %v2110, 88
        %v2322 = vpop.permute.xlu0 %2321
        %2323 = vrot.lane.b32.xlu0 %v2113, 88
        %v2324 = vpop.permute.xlu0 %2323
        %v2325 = vsel %vm839, %v2318, 0
        %v2327 = vsel %vm839, %v2320, 0
        %v2329 = vsel %vm839, %v2322, 0
        %v2331 = vsel %vm839, %v2324, 0
        %2333 = vmatpush.xpose.msra.mxu0 0.0
        %2334 = vmatpush.xpose.msra.mxu0 0.0
        %2335 = vmatpush.xpose.msra.mxu0 0.0
        %2336 = vmatpush.xpose.msra.mxu0 0.0
        %2337 = vmatpush.xpose.msra.mxu0 0.0
        %2338 = vmatpush.xpose.msra.mxu0 0.0
        %2339 = vmatpush.xpose.msra.mxu0 0.0
        %2340 = vmatpush.xpose.msra.mxu0 0.0
        %2341 = vmatpush.xpose.msra.mxu0 0.0
        %2342 = vmatpush.xpose.msra.mxu0 0.0
        %2343 = vmatpush.xpose.msra.mxu0 0.0
        %2344 = vmatpush.xpose.msra.mxu0 0.0
        %2345 = vmatpush.xpose.msra.mxu0 0.0
        %2346 = vmatpush.xpose.msra.mxu0 0.0
        %2347 = vmatpush.xpose.msra.mxu0 %v2331
        %2348 = vmatpush.xpose.msra.mxu0 %v2329
        %2349 = vmatmul.f32.gmra.mxu0 %v2325
        %v2350 = vpop.f32.mrf.mxu0
        %v2351 = vadd.f32 0.0, %v2350
        %2352 = vmatmul.f32.gmra.mxu0 %v2327
        %v2353 = vpop.f32.mrf.mxu0
        %v2354 = vadd.f32 0.0, %v2353
        %2355 = vdwg.mxu0
        %2356 = vrot.lane.b32.xlu0 %v2123, 120
        %v2357 = vpop.permute.xlu0 %2356
        %2358 = vrot.lane.b32.xlu0 %v2124, 120
        %v2359 = vpop.permute.xlu0 %2358
        %2360 = vrot.lane.b32.xlu0 %v2116, 88
        %v2361 = vpop.permute.xlu0 %2360
        %2362 = vrot.lane.b32.xlu0 %v2119, 88
        %v2363 = vpop.permute.xlu0 %2362
        %v2364 = vsel %vm839, %v2357, 0
        %v2366 = vsel %vm839, %v2359, 0
        %v2368 = vsel %vm839, %v2361, 0
        %v2370 = vsel %vm839, %v2363, 0
        %2372 = vmatpush.xpose.msra.mxu0 0.0
        %2373 = vmatpush.xpose.msra.mxu0 0.0
        %2374 = vmatpush.xpose.msra.mxu0 0.0
        %2375 = vmatpush.xpose.msra.mxu0 0.0
        %2376 = vmatpush.xpose.msra.mxu0 0.0
        %2377 = vmatpush.xpose.msra.mxu0 0.0
        %2378 = vmatpush.xpose.msra.mxu0 0.0
        %2379 = vmatpush.xpose.msra.mxu0 0.0
        %2380 = vmatpush.xpose.msra.mxu0 0.0
        %2381 = vmatpush.xpose.msra.mxu0 0.0
        %2382 = vmatpush.xpose.msra.mxu0 0.0
        %2383 = vmatpush.xpose.msra.mxu0 0.0
        %2384 = vmatpush.xpose.msra.mxu0 0.0
        %2385 = vmatpush.xpose.msra.mxu0 0.0
        %2386 = vmatpush.xpose.msra.mxu0 %v2370
        %2387 = vmatpush.xpose.msra.mxu0 %v2368
        %2388 = vmatmul.f32.gmra.mxu0 %v2364
        %v2389 = vpop.f32.mrf.mxu0
        %v2390 = vadd.f32 0.0, %v2389
        %2391 = vmatmul.f32.gmra.mxu0 %v2366
        %v2392 = vpop.f32.mrf.mxu0
        %v2393 = vadd.f32 0.0, %v2392
        %2394 = vdwg.mxu0
        %v2395 = vsel %vm912, %v2351, -inf
        %2396 = vmax.xlane.f32.xlu0 %v2395
        %v2397 = vpop.xlane.xlu0 %2396
        %v2398 = vsel %vm912, %v2354, -inf
        %2399 = vmax.xlane.f32.xlu0 %v2398
        %v2400 = vpop.xlane.xlu0 %2399
        %v2401 = vsel %vm912, %v2390, -inf
        %2402 = vmax.xlane.f32.xlu0 %v2401
        %v2403 = vpop.xlane.xlu0 %2402
        %v2404 = vsel %vm912, %v2393, -inf
        %2405 = vmax.xlane.f32.xlu0 %v2404
        %v2406 = vpop.xlane.xlu0 %2405
        %v2407 = vsub.f32 %v2351, %v2397
        %v2408 = vsub.f32 %v2354, %v2400
        %v2409 = vsub.f32 %v2390, %v2403
        %v2410 = vsub.f32 %v2393, %v2406
        %v2411 = vmul.f32 %v2407, 1.442695
        %v2412 = vpow.pop %v2411
        %v2413 = vmul.f32 %v2408, 1.442695
        %v2414 = vpow.pop %v2413
        %v2415 = vmul.f32 %v2409, 1.442695
        %v2416 = vpow.pop %v2415
        %v2417 = vmul.f32 %v2410, 1.442695
        %v2418 = vpow.pop %v2417
        %v2419 = vsel %vm912, %v2412, 0.0
        %2420 = vadd.xlane.f32.xlu0 %v2419
        %v2421 = vpop.xlane.xlu0 %2420
        %v2422 = vsel %vm912, %v2414, 0.0
        %2423 = vadd.xlane.f32.xlu0 %v2422
        %v2424 = vpop.xlane.xlu0 %2423
        %v2425 = vsel %vm912, %v2416, 0.0
        %2426 = vadd.xlane.f32.xlu0 %v2425
        %v2427 = vpop.xlane.xlu0 %2426
        %v2428 = vsel %vm912, %v2418, 0.0
        %2429 = vadd.xlane.f32.xlu0 %v2428
        %v2430 = vpop.xlane.xlu0 %2429
        %v2431 = vrcp.pop %v2421
        %v2432 = vrcp.pop %v2424
        %v2433 = vrcp.pop %v2427
        %v2434 = vrcp.pop %v2430
        %v2435 = vmul.f32 %v2412, %v2431
        %v2436 = vmul.f32 %v2414, %v2432
        %v2437 = vmul.f32 %v2416, %v2433
        %v2438 = vmul.f32 %v2418, %v2434
        %2439 = vrot.lane.b32.xlu0 %v2110, 56
        %v2440 = vpop.permute.xlu0 %2439
        %2441 = vrot.lane.b32.xlu0 %v2113, 56
        %v2442 = vpop.permute.xlu0 %2441
        %v2446 = vsel %vm912, %v2435, 0
        %v2449 = vsel %vm912, %v2436, 0
        %2451 = vmatpush.msra.mxu0 0.0
        %2452 = vmatpush.msra.mxu0 0.0
        %2453 = vmatpush.msra.mxu0 0.0
        %2454 = vmatpush.msra.mxu0 0.0
        %2455 = vmatpush.msra.mxu0 0.0
        %2456 = vmatpush.msra.mxu0 0.0
        %2457 = vmatpush.msra.mxu0 0.0
        %2458 = vmatpush.msra.mxu0 0.0
        %2459 = vmatpush.msra.mxu0 0.0
        %2460 = vmatpush.msra.mxu0 0.0
        %2461 = vmatpush.msra.mxu0 0.0
        %2462 = vmatpush.msra.mxu0 0.0
        %2463 = vmatpush.msra.mxu0 0.0
        %2464 = vmatpush.msra.mxu0 0.0
        %2465 = vmatpush.msra.mxu0 %v2442
        %2466 = vmatpush.msra.mxu0 %v2440
        %2467 = vmatmul.f32.gmra.mxu0 %v2446
        %v2468 = vpop.f32.mrf.mxu0
        %v2469 = vadd.f32 0.0, %v2468
        %2470 = vmatmul.f32.gmra.mxu0 %v2449
        %v2471 = vpop.f32.mrf.mxu0
        %v2472 = vadd.f32 0.0, %v2471
        %2473 = vdwg.mxu0
        %2474 = vrot.lane.b32.xlu0 %v2116, 56
        %v2475 = vpop.permute.xlu0 %2474
        %2476 = vrot.lane.b32.xlu0 %v2119, 56
        %v2477 = vpop.permute.xlu0 %2476
        %v2481 = vsel %vm912, %v2437, 0
        %v2484 = vsel %vm912, %v2438, 0
        %2486 = vmatpush.msra.mxu0 0.0
        %2487 = vmatpush.msra.mxu0 0.0
        %2488 = vmatpush.msra.mxu0 0.0
        %2489 = vmatpush.msra.mxu0 0.0
        %2490 = vmatpush.msra.mxu0 0.0
        %2491 = vmatpush.msra.mxu0 0.0
        %2492 = vmatpush.msra.mxu0 0.0
        %2493 = vmatpush.msra.mxu0 0.0
        %2494 = vmatpush.msra.mxu0 0.0
        %2495 = vmatpush.msra.mxu0 0.0
        %2496 = vmatpush.msra.mxu0 0.0
        %2497 = vmatpush.msra.mxu0 0.0
        %2498 = vmatpush.msra.mxu0 0.0
        %2499 = vmatpush.msra.mxu0 0.0
        %2500 = vmatpush.msra.mxu0 %v2477
        %2501 = vmatpush.msra.mxu0 %v2475
        %2502 = vmatmul.f32.gmra.mxu0 %v2481
        %v2503 = vpop.f32.mrf.mxu0
        %v2504 = vadd.f32 0.0, %v2503
        %2505 = vmatmul.f32.gmra.mxu0 %v2484
        %v2506 = vpop.f32.mrf.mxu0
        %v2507 = vadd.f32 0.0, %v2506
        %2508 = vdwg.mxu0
        %2509 = vrot.lane.b32.xlu0 %v2121, 112
        %v2510 = vpop.permute.xlu0 %2509
        %2511 = vrot.lane.b32.xlu0 %v2122, 112
        %v2512 = vpop.permute.xlu0 %2511
        %2513 = vrot.lane.b32.xlu0 %v2110, 80
        %v2514 = vpop.permute.xlu0 %2513
        %2515 = vrot.lane.b32.xlu0 %v2113, 80
        %v2516 = vpop.permute.xlu0 %2515
        %v2517 = vsel %vm839, %v2510, 0
        %v2519 = vsel %vm839, %v2512, 0
        %v2521 = vsel %vm839, %v2514, 0
        %v2523 = vsel %vm839, %v2516, 0
        %2525 = vmatpush.xpose.msra.mxu0 0.0
        %2526 = vmatpush.xpose.msra.mxu0 0.0
        %2527 = vmatpush.xpose.msra.mxu0 0.0
        %2528 = vmatpush.xpose.msra.mxu0 0.0
        %2529 = vmatpush.xpose.msra.mxu0 0.0
        %2530 = vmatpush.xpose.msra.mxu0 0.0
        %2531 = vmatpush.xpose.msra.mxu0 0.0
        %2532 = vmatpush.xpose.msra.mxu0 0.0
        %2533 = vmatpush.xpose.msra.mxu0 0.0
        %2534 = vmatpush.xpose.msra.mxu0 0.0
        %2535 = vmatpush.xpose.msra.mxu0 0.0
        %2536 = vmatpush.xpose.msra.mxu0 0.0
        %2537 = vmatpush.xpose.msra.mxu0 0.0
        %2538 = vmatpush.xpose.msra.mxu0 0.0
        %2539 = vmatpush.xpose.msra.mxu0 %v2523
        %2540 = vmatpush.xpose.msra.mxu0 %v2521
        %2541 = vmatmul.f32.gmra.mxu0 %v2517
        %v2542 = vpop.f32.mrf.mxu0
        %v2543 = vadd.f32 0.0, %v2542
        %2544 = vmatmul.f32.gmra.mxu0 %v2519
        %v2545 = vpop.f32.mrf.mxu0
        %v2546 = vadd.f32 0.0, %v2545
        %2547 = vdwg.mxu0
        %2548 = vrot.lane.b32.xlu0 %v2123, 112
        %v2549 = vpop.permute.xlu0 %2548
        %2550 = vrot.lane.b32.xlu0 %v2124, 112
        %v2551 = vpop.permute.xlu0 %2550
        %2552 = vrot.lane.b32.xlu0 %v2116, 80
        %v2553 = vpop.permute.xlu0 %2552
        %2554 = vrot.lane.b32.xlu0 %v2119, 80
        %v2555 = vpop.permute.xlu0 %2554
        %v2556 = vsel %vm839, %v2549, 0
        %v2558 = vsel %vm839, %v2551, 0
        %v2560 = vsel %vm839, %v2553, 0
        %v2562 = vsel %vm839, %v2555, 0
        %2564 = vmatpush.xpose.msra.mxu0 0.0
        %2565 = vmatpush.xpose.msra.mxu0 0.0
        %2566 = vmatpush.xpose.msra.mxu0 0.0
        %2567 = vmatpush.xpose.msra.mxu0 0.0
        %2568 = vmatpush.xpose.msra.mxu0 0.0
        %2569 = vmatpush.xpose.msra.mxu0 0.0
        %2570 = vmatpush.xpose.msra.mxu0 0.0
        %2571 = vmatpush.xpose.msra.mxu0 0.0
        %2572 = vmatpush.xpose.msra.mxu0 0.0
        %2573 = vmatpush.xpose.msra.mxu0 0.0
        %2574 = vmatpush.xpose.msra.mxu0 0.0
        %2575 = vmatpush.xpose.msra.mxu0 0.0
        %2576 = vmatpush.xpose.msra.mxu0 0.0
        %2577 = vmatpush.xpose.msra.mxu0 0.0
        %2578 = vmatpush.xpose.msra.mxu0 %v2562
        %2579 = vmatpush.xpose.msra.mxu0 %v2560
        %2580 = vmatmul.f32.gmra.mxu0 %v2556
        %v2581 = vpop.f32.mrf.mxu0
        %v2582 = vadd.f32 0.0, %v2581
        %2583 = vmatmul.f32.gmra.mxu0 %v2558
        %v2584 = vpop.f32.mrf.mxu0
        %v2585 = vadd.f32 0.0, %v2584
        %2586 = vdwg.mxu0
        %v2587 = vsel %vm912, %v2543, -inf
        %2588 = vmax.xlane.f32.xlu0 %v2587
        %v2589 = vpop.xlane.xlu0 %2588
        %v2590 = vsel %vm912, %v2546, -inf
        %2591 = vmax.xlane.f32.xlu0 %v2590
        %v2592 = vpop.xlane.xlu0 %2591
        %v2593 = vsel %vm912, %v2582, -inf
        %2594 = vmax.xlane.f32.xlu0 %v2593
        %v2595 = vpop.xlane.xlu0 %2594
        %v2596 = vsel %vm912, %v2585, -inf
        %2597 = vmax.xlane.f32.xlu0 %v2596
        %v2598 = vpop.xlane.xlu0 %2597
        %v2599 = vsub.f32 %v2543, %v2589
        %v2600 = vsub.f32 %v2546, %v2592
        %v2601 = vsub.f32 %v2582, %v2595
        %v2602 = vsub.f32 %v2585, %v2598
        %v2603 = vmul.f32 %v2599, 1.442695
        %v2604 = vpow.pop %v2603
        %v2605 = vmul.f32 %v2600, 1.442695
        %v2606 = vpow.pop %v2605
        %v2607 = vmul.f32 %v2601, 1.442695
        %v2608 = vpow.pop %v2607
        %v2609 = vmul.f32 %v2602, 1.442695
        %v2610 = vpow.pop %v2609
        %v2611 = vsel %vm912, %v2604, 0.0
        %2612 = vadd.xlane.f32.xlu0 %v2611
        %v2613 = vpop.xlane.xlu0 %2612
        %v2614 = vsel %vm912, %v2606, 0.0
        %2615 = vadd.xlane.f32.xlu0 %v2614
        %v2616 = vpop.xlane.xlu0 %2615
        %v2617 = vsel %vm912, %v2608, 0.0
        %2618 = vadd.xlane.f32.xlu0 %v2617
        %v2619 = vpop.xlane.xlu0 %2618
        %v2620 = vsel %vm912, %v2610, 0.0
        %2621 = vadd.xlane.f32.xlu0 %v2620
        %v2622 = vpop.xlane.xlu0 %2621
        %v2623 = vrcp.pop %v2613
        %v2624 = vrcp.pop %v2616
        %v2625 = vrcp.pop %v2619
        %v2626 = vrcp.pop %v2622
        %v2627 = vmul.f32 %v2604, %v2623
        %v2628 = vmul.f32 %v2606, %v2624
        %v2629 = vmul.f32 %v2608, %v2625
        %v2630 = vmul.f32 %v2610, %v2626
        %2631 = vrot.lane.b32.xlu0 %v2110, 48
        %v2632 = vpop.permute.xlu0 %2631
        %2633 = vrot.lane.b32.xlu0 %v2113, 48
        %v2634 = vpop.permute.xlu0 %2633
        %v2638 = vsel %vm912, %v2627, 0
        %v2641 = vsel %vm912, %v2628, 0
        %2643 = vmatpush.msra.mxu0 0.0
        %2644 = vmatpush.msra.mxu0 0.0
        %2645 = vmatpush.msra.mxu0 0.0
        %2646 = vmatpush.msra.mxu0 0.0
        %2647 = vmatpush.msra.mxu0 0.0
        %2648 = vmatpush.msra.mxu0 0.0
        %2649 = vmatpush.msra.mxu0 0.0
        %2650 = vmatpush.msra.mxu0 0.0
        %2651 = vmatpush.msra.mxu0 0.0
        %2652 = vmatpush.msra.mxu0 0.0
        %2653 = vmatpush.msra.mxu0 0.0
        %2654 = vmatpush.msra.mxu0 0.0
        %2655 = vmatpush.msra.mxu0 0.0
        %2656 = vmatpush.msra.mxu0 0.0
        %2657 = vmatpush.msra.mxu0 %v2634
        %2658 = vmatpush.msra.mxu0 %v2632
        %2659 = vmatmul.f32.gmra.mxu0 %v2638
        %v2660 = vpop.f32.mrf.mxu0
        %v2661 = vadd.f32 0.0, %v2660
        %2662 = vmatmul.f32.gmra.mxu0 %v2641
        %v2663 = vpop.f32.mrf.mxu0
        %v2664 = vadd.f32 0.0, %v2663
        %2665 = vdwg.mxu0
        %2666 = vrot.lane.b32.xlu0 %v2116, 48
        %v2667 = vpop.permute.xlu0 %2666
        %2668 = vrot.lane.b32.xlu0 %v2119, 48
        %v2669 = vpop.permute.xlu0 %2668
        %v2673 = vsel %vm912, %v2629, 0
        %v2676 = vsel %vm912, %v2630, 0
        %2678 = vmatpush.msra.mxu0 0.0
        %2679 = vmatpush.msra.mxu0 0.0
        %2680 = vmatpush.msra.mxu0 0.0
        %2681 = vmatpush.msra.mxu0 0.0
        %2682 = vmatpush.msra.mxu0 0.0
        %2683 = vmatpush.msra.mxu0 0.0
        %2684 = vmatpush.msra.mxu0 0.0
        %2685 = vmatpush.msra.mxu0 0.0
        %2686 = vmatpush.msra.mxu0 0.0
        %2687 = vmatpush.msra.mxu0 0.0
        %2688 = vmatpush.msra.mxu0 0.0
        %2689 = vmatpush.msra.mxu0 0.0
        %2690 = vmatpush.msra.mxu0 0.0
        %2691 = vmatpush.msra.mxu0 0.0
        %2692 = vmatpush.msra.mxu0 %v2669
        %2693 = vmatpush.msra.mxu0 %v2667
        %2694 = vmatmul.f32.gmra.mxu0 %v2673
        %v2695 = vpop.f32.mrf.mxu0
        %v2696 = vadd.f32 0.0, %v2695
        %2697 = vmatmul.f32.gmra.mxu0 %v2676
        %v2698 = vpop.f32.mrf.mxu0
        %v2699 = vadd.f32 0.0, %v2698
        %2700 = vdwg.mxu0
        %2701 = vrot.lane.b32.xlu0 %v2121, 104
        %v2702 = vpop.permute.xlu0 %2701
        %2703 = vrot.lane.b32.xlu0 %v2122, 104
        %v2704 = vpop.permute.xlu0 %2703
        %2705 = vrot.lane.b32.xlu0 %v2110, 72
        %v2706 = vpop.permute.xlu0 %2705
        %2707 = vrot.lane.b32.xlu0 %v2113, 72
        %v2708 = vpop.permute.xlu0 %2707
        %v2709 = vsel %vm839, %v2702, 0
        %v2711 = vsel %vm839, %v2704, 0
        %v2713 = vsel %vm839, %v2706, 0
        %v2715 = vsel %vm839, %v2708, 0
        %2717 = vmatpush.xpose.msra.mxu0 0.0
        %2718 = vmatpush.xpose.msra.mxu0 0.0
        %2719 = vmatpush.xpose.msra.mxu0 0.0
        %2720 = vmatpush.xpose.msra.mxu0 0.0
        %2721 = vmatpush.xpose.msra.mxu0 0.0
        %2722 = vmatpush.xpose.msra.mxu0 0.0
        %2723 = vmatpush.xpose.msra.mxu0 0.0
        %2724 = vmatpush.xpose.msra.mxu0 0.0
        %2725 = vmatpush.xpose.msra.mxu0 0.0
        %2726 = vmatpush.xpose.msra.mxu0 0.0
        %2727 = vmatpush.xpose.msra.mxu0 0.0
        %2728 = vmatpush.xpose.msra.mxu0 0.0
        %2729 = vmatpush.xpose.msra.mxu0 0.0
        %2730 = vmatpush.xpose.msra.mxu0 0.0
        %2731 = vmatpush.xpose.msra.mxu0 %v2715
        %2732 = vmatpush.xpose.msra.mxu0 %v2713
        %2733 = vmatmul.f32.gmra.mxu0 %v2709
        %v2734 = vpop.f32.mrf.mxu0
        %v2735 = vadd.f32 0.0, %v2734
        %2736 = vmatmul.f32.gmra.mxu0 %v2711
        %v2737 = vpop.f32.mrf.mxu0
        %v2738 = vadd.f32 0.0, %v2737
        %2739 = vdwg.mxu0
        %2740 = vrot.lane.b32.xlu0 %v2123, 104
        %v2741 = vpop.permute.xlu0 %2740
        %2742 = vrot.lane.b32.xlu0 %v2124, 104
        %v2743 = vpop.permute.xlu0 %2742
        %2744 = vrot.lane.b32.xlu0 %v2116, 72
        %v2745 = vpop.permute.xlu0 %2744
        %2746 = vrot.lane.b32.xlu0 %v2119, 72
        %v2747 = vpop.permute.xlu0 %2746
        %v2748 = vsel %vm839, %v2741, 0
        %v2750 = vsel %vm839, %v2743, 0
        %v2752 = vsel %vm839, %v2745, 0
        %v2754 = vsel %vm839, %v2747, 0
        %2756 = vmatpush.xpose.msra.mxu0 0.0
        %2757 = vmatpush.xpose.msra.mxu0 0.0
        %2758 = vmatpush.xpose.msra.mxu0 0.0
        %2759 = vmatpush.xpose.msra.mxu0 0.0
        %2760 = vmatpush.xpose.msra.mxu0 0.0
        %2761 = vmatpush.xpose.msra.mxu0 0.0
        %2762 = vmatpush.xpose.msra.mxu0 0.0
        %2763 = vmatpush.xpose.msra.mxu0 0.0
        %2764 = vmatpush.xpose.msra.mxu0 0.0
        %2765 = vmatpush.xpose.msra.mxu0 0.0
        %2766 = vmatpush.xpose.msra.mxu0 0.0
        %2767 = vmatpush.xpose.msra.mxu0 0.0
        %2768 = vmatpush.xpose.msra.mxu0 0.0
        %2769 = vmatpush.xpose.msra.mxu0 0.0
        %2770 = vmatpush.xpose.msra.mxu0 %v2754
        %2771 = vmatpush.xpose.msra.mxu0 %v2752
        %2772 = vmatmul.f32.gmra.mxu0 %v2748
        %v2773 = vpop.f32.mrf.mxu0
        %v2774 = vadd.f32 0.0, %v2773
        %2775 = vmatmul.f32.gmra.mxu0 %v2750
        %v2776 = vpop.f32.mrf.mxu0
        %v2777 = vadd.f32 0.0, %v2776
        %2778 = vdwg.mxu0
        %v2779 = vsel %vm912, %v2735, -inf
        %2780 = vmax.xlane.f32.xlu0 %v2779
        %v2781 = vpop.xlane.xlu0 %2780
        %v2782 = vsel %vm912, %v2738, -inf
        %2783 = vmax.xlane.f32.xlu0 %v2782
        %v2784 = vpop.xlane.xlu0 %2783
        %v2785 = vsel %vm912, %v2774, -inf
        %2786 = vmax.xlane.f32.xlu0 %v2785
        %v2787 = vpop.xlane.xlu0 %2786
        %v2788 = vsel %vm912, %v2777, -inf
        %2789 = vmax.xlane.f32.xlu0 %v2788
        %v2790 = vpop.xlane.xlu0 %2789
        %v2791 = vsub.f32 %v2735, %v2781
        %v2792 = vsub.f32 %v2738, %v2784
        %v2793 = vsub.f32 %v2774, %v2787
        %v2794 = vsub.f32 %v2777, %v2790
        %v2795 = vmul.f32 %v2791, 1.442695
        %v2796 = vpow.pop %v2795
        %v2797 = vmul.f32 %v2792, 1.442695
        %v2798 = vpow.pop %v2797
        %v2799 = vmul.f32 %v2793, 1.442695
        %v2800 = vpow.pop %v2799
        %v2801 = vmul.f32 %v2794, 1.442695
        %v2802 = vpow.pop %v2801
        %v2803 = vsel %vm912, %v2796, 0.0
        %2804 = vadd.xlane.f32.xlu0 %v2803
        %v2805 = vpop.xlane.xlu0 %2804
        %v2806 = vsel %vm912, %v2798, 0.0
        %2807 = vadd.xlane.f32.xlu0 %v2806
        %v2808 = vpop.xlane.xlu0 %2807
        %v2809 = vsel %vm912, %v2800, 0.0
        %2810 = vadd.xlane.f32.xlu0 %v2809
        %v2811 = vpop.xlane.xlu0 %2810
        %v2812 = vsel %vm912, %v2802, 0.0
        %2813 = vadd.xlane.f32.xlu0 %v2812
        %v2814 = vpop.xlane.xlu0 %2813
        %v2815 = vrcp.pop %v2805
        %v2816 = vrcp.pop %v2808
        %v2817 = vrcp.pop %v2811
        %v2818 = vrcp.pop %v2814
        %v2819 = vmul.f32 %v2796, %v2815
        %v2820 = vmul.f32 %v2798, %v2816
        %v2821 = vmul.f32 %v2800, %v2817
        %v2822 = vmul.f32 %v2802, %v2818
        %2823 = vrot.lane.b32.xlu0 %v2110, 40
        %v2824 = vpop.permute.xlu0 %2823
        %2825 = vrot.lane.b32.xlu0 %v2113, 40
        %v2826 = vpop.permute.xlu0 %2825
        %v2830 = vsel %vm912, %v2819, 0
        %v2833 = vsel %vm912, %v2820, 0
        %2835 = vmatpush.msra.mxu0 0.0
        %2836 = vmatpush.msra.mxu0 0.0
        %2837 = vmatpush.msra.mxu0 0.0
        %2838 = vmatpush.msra.mxu0 0.0
        %2839 = vmatpush.msra.mxu0 0.0
        %2840 = vmatpush.msra.mxu0 0.0
        %2841 = vmatpush.msra.mxu0 0.0
        %2842 = vmatpush.msra.mxu0 0.0
        %2843 = vmatpush.msra.mxu0 0.0
        %2844 = vmatpush.msra.mxu0 0.0
        %2845 = vmatpush.msra.mxu0 0.0
        %2846 = vmatpush.msra.mxu0 0.0
        %2847 = vmatpush.msra.mxu0 0.0
        %2848 = vmatpush.msra.mxu0 0.0
        %2849 = vmatpush.msra.mxu0 %v2826
        %2850 = vmatpush.msra.mxu0 %v2824
        %2851 = vmatmul.f32.gmra.mxu0 %v2830
        %v2852 = vpop.f32.mrf.mxu0
        %v2853 = vadd.f32 0.0, %v2852
        %2854 = vmatmul.f32.gmra.mxu0 %v2833
        %v2855 = vpop.f32.mrf.mxu0
        %v2856 = vadd.f32 0.0, %v2855
        %2857 = vdwg.mxu0
        %2858 = vrot.lane.b32.xlu0 %v2116, 40
        %v2859 = vpop.permute.xlu0 %2858
        %2860 = vrot.lane.b32.xlu0 %v2119, 40
        %v2861 = vpop.permute.xlu0 %2860
        %v2865 = vsel %vm912, %v2821, 0
        %v2868 = vsel %vm912, %v2822, 0
        %2870 = vmatpush.msra.mxu0 0.0
        %2871 = vmatpush.msra.mxu0 0.0
        %2872 = vmatpush.msra.mxu0 0.0
        %2873 = vmatpush.msra.mxu0 0.0
        %2874 = vmatpush.msra.mxu0 0.0
        %2875 = vmatpush.msra.mxu0 0.0
        %2876 = vmatpush.msra.mxu0 0.0
        %2877 = vmatpush.msra.mxu0 0.0
        %2878 = vmatpush.msra.mxu0 0.0
        %2879 = vmatpush.msra.mxu0 0.0
        %2880 = vmatpush.msra.mxu0 0.0
        %2881 = vmatpush.msra.mxu0 0.0
        %2882 = vmatpush.msra.mxu0 0.0
        %2883 = vmatpush.msra.mxu0 0.0
        %2884 = vmatpush.msra.mxu0 %v2861
        %2885 = vmatpush.msra.mxu0 %v2859
        %2886 = vmatmul.f32.gmra.mxu0 %v2865
        %v2887 = vpop.f32.mrf.mxu0
        %v2888 = vadd.f32 0.0, %v2887
        %2889 = vmatmul.f32.gmra.mxu0 %v2868
        %v2890 = vpop.f32.mrf.mxu0
        %v2891 = vadd.f32 0.0, %v2890
        %2892 = vdwg.mxu0
        %2897 = vrot.lane.b32.xlu0 %v2469, 8
        %v2898 = vpop.permute.xlu0 %2897
        %2899 = vrot.lane.b32.xlu0 %v2472, 8
        %v2900 = vpop.permute.xlu0 %2899
        %2901 = vrot.lane.b32.xlu0 %v2504, 8
        %v2902 = vpop.permute.xlu0 %2901
        %2903 = vrot.lane.b32.xlu0 %v2507, 8
        %v2904 = vpop.permute.xlu0 %2903
        %2913 = vrot.lane.b32.xlu0 %v2661, 16
        %v2914 = vpop.permute.xlu0 %2913
        %2915 = vrot.lane.b32.xlu0 %v2664, 16
        %v2916 = vpop.permute.xlu0 %2915
        %2917 = vrot.lane.b32.xlu0 %v2696, 16
        %v2918 = vpop.permute.xlu0 %2917
        %2919 = vrot.lane.b32.xlu0 %v2699, 16
        %v2920 = vpop.permute.xlu0 %2919
        %2929 = vrot.lane.b32.xlu0 %v2853, 24
        %v2930 = vpop.permute.xlu0 %2929
        %2931 = vrot.lane.b32.xlu0 %v2856, 24
        %v2932 = vpop.permute.xlu0 %2931
        %2933 = vrot.lane.b32.xlu0 %v2888, 24
        %v2934 = vpop.permute.xlu0 %2933
        %2935 = vrot.lane.b32.xlu0 %v2891, 24
        %v2936 = vpop.permute.xlu0 %2935
        %v2941 = vsel %vm839, %v2277, %v2898
        %v2942 = vsel %vm839, %v2280, %v2900
        %v2943 = vsel %vm839, %v2312, %v2902
        %v2944 = vsel %vm839, %v2315, %v2904
        %v2945 = vsel %vm912, %v2941, %v2914
        %v2946 = vsel %vm912, %v2942, %v2916
        %v2947 = vsel %vm912, %v2943, %v2918
        %v2948 = vsel %vm912, %v2944, %v2920
        %v2949 = vsel %vm1659, %v2945, %v2930
        %v2950 = vsel %vm1659, %v2946, %v2932
        %v2951 = vsel %vm1659, %v2947, %v2934
        %v2952 = vsel %vm1659, %v2948, %v2936
        %s2953 = scalar_lea.vmem %s7, 32
        %v2954 = vld [vmem:[%s2953] sm:$0xff]
        %v2955 = vld [vmem:[%s2953 + $0x8] sm:$0xff]
        %v2956 = vld [vmem:[%s2953 + $0x10] sm:$0xff]
        %v2957 = vld [vmem:[%s2953 + $0x18] sm:$0xff]
        %s2958 = scalar_lea.vmem %s8, 1
        %v2959 = vld [vmem:[%s2958] sm:$0x1]
        %v2961 = vperm.slane %v2959, 0
        %v2964 = vsel %vm787, %v2949, 0
        %v2967 = vsel %vm787, %v2950, 0
        %v2970 = vsel %vm787, %v2951, 0
        %v2973 = vsel %vm787, %v2952, 0
        %2975 = vmatpush.msra.mxu0 0.0
        %2976 = vmatpush.msra.mxu0 0.0
        %2977 = vmatpush.msra.mxu0 0.0
        %2978 = vmatpush.msra.mxu0 0.0
        %2979 = vmatpush.msra.mxu0 0.0
        %2980 = vmatpush.msra.mxu0 0.0
        %2981 = vmatpush.msra.mxu0 0.0
        %2982 = vmatpush.msra.mxu0 0.0
        %2983 = vmatpush.msra.mxu0 0.0
        %2984 = vmatpush.msra.mxu0 0.0
        %2985 = vmatpush.msra.mxu0 0.0
        %2986 = vmatpush.msra.mxu0 0.0
        %2987 = vmatpush.msra.mxu0 %v2957
        %2988 = vmatpush.msra.mxu0 %v2956
        %2989 = vmatpush.msra.mxu0 %v2955
        %2990 = vmatpush.msra.mxu0 %v2954
        %2991 = vmatmul.f32.gmra.mxu0 %v2964
        %v2992 = vpop.f32.mrf.mxu0
        %v2993 = vadd.f32 %v2961, %v2992
        %2994 = vmatmul.f32.gmra.mxu0 %v2967
        %v2995 = vpop.f32.mrf.mxu0
        %v2996 = vadd.f32 %v2961, %v2995
        %2997 = vmatmul.f32.gmra.mxu0 %v2970
        %v2998 = vpop.f32.mrf.mxu0
        %v2999 = vadd.f32 %v2961, %v2998
        %3000 = vmatmul.f32.gmra.mxu0 %v2973
        %v3001 = vpop.f32.mrf.mxu0
        %v3002 = vadd.f32 %v2961, %v3001
        %3003 = vdwg.mxu0
        %v3004 = vadd.f32 %v2066, %v2993
        %v3005 = vadd.f32 %v2067, %v2996
        %v3006 = vadd.f32 %v2068, %v2999
        %v3007 = vadd.f32 %v2069, %v3002
        %s3008 = scalar_lea.vmem %s9, 1
        %v3009 = vld [vmem:[%s3008] sm:$0x1]
        %s3010 = scalar_lea.vmem %s10, 1
        %v3011 = vld [vmem:[%s3010] sm:$0x1]
        %v3012 = vsel %vm787, %v3004, 0.0
        %3013 = vadd.xlane.f32.xlu0 %v3012
        %v3014 = vpop.xlane.xlu0 %3013
        %v3015 = vsel %vm787, %v3005, 0.0
        %3016 = vadd.xlane.f32.xlu0 %v3015
        %v3017 = vpop.xlane.xlu0 %3016
        %v3018 = vsel %vm787, %v3006, 0.0
        %3019 = vadd.xlane.f32.xlu0 %v3018
        %v3020 = vpop.xlane.xlu0 %3019
        %v3021 = vsel %vm787, %v3007, 0.0
        %3022 = vadd.xlane.f32.xlu0 %v3021
        %v3023 = vpop.xlane.xlu0 %3022
        %v3024 = vmul.f32 %v3014, %v1737
        %v3025 = vmul.f32 %v3017, %v1737
        %v3026 = vmul.f32 %v3020, %v1737
        %v3027 = vmul.f32 %v3023, %v1737
        %v3028 = vsub.f32 %v3004, %v3024
        %v3029 = vsub.f32 %v3005, %v3025
        %v3030 = vsub.f32 %v3006, %v3026
        %v3031 = vsub.f32 %v3007, %v3027
        %v3032 = vmul.f32 %v3028, %v3028
        %v3033 = vmul.f32 %v3029, %v3029
        %v3034 = vmul.f32 %v3030, %v3030
        %v3035 = vmul.f32 %v3031, %v3031
        %v3036 = vsel %vm787, %v3032, 0.0
        %3037 = vadd.xlane.f32.xlu0 %v3036
        %v3038 = vpop.xlane.xlu0 %3037
        %v3039 = vsel %vm787, %v3033, 0.0
        %3040 = vadd.xlane.f32.xlu0 %v3039
        %v3041 = vpop.xlane.xlu0 %3040
        %v3042 = vsel %vm787, %v3034, 0.0
        %3043 = vadd.xlane.f32.xlu0 %v3042
        %v3044 = vpop.xlane.xlu0 %3043
        %v3045 = vsel %vm787, %v3035, 0.0
        %3046 = vadd.xlane.f32.xlu0 %v3045
        %v3047 = vpop.xlane.xlu0 %3046
        %v3048 = vmul.f32 %v3038, %v1737
        %v3049 = vmul.f32 %v3041, %v1737
        %v3050 = vmul.f32 %v3044, %v1737
        %v3051 = vmul.f32 %v3047, %v1737
        %v3052 = vadd.f32 %v3048, 1e-05
        %v3053 = vadd.f32 %v3049, 1e-05
        %v3054 = vadd.f32 %v3050, 1e-05
        %v3055 = vadd.f32 %v3051, 1e-05
        %v3056 = vrsqrt.pop %v3052
        %v3057 = vmul.f32 %v3056, %v3052
        %v3058 = vmul.f32 %v3057, %v3056
        %v3059 = vmul.f32 0.5, %v3058
        %v3060 = vsub.f32 1.5, %v3059
        %v3061 = vmul.f32 %v3056, %v3060
        %vm3062 = vweird.f32 %v3052
        %vm3063 = vweird.f32 %v3056
        %vm3064 = vmor %vm3062, %vm3063
        %v3065 = vsel %vm3064, %v3056, %v3061
        %v3066 = vrsqrt.pop %v3053
        %v3067 = vmul.f32 %v3066, %v3053
        %v3068 = vmul.f32 %v3067, %v3066
        %v3069 = vmul.f32 0.5, %v3068
        %v3070 = vsub.f32 1.5, %v3069
        %v3071 = vmul.f32 %v3066, %v3070
        %vm3072 = vweird.f32 %v3053
        %vm3073 = vweird.f32 %v3066
        %vm3074 = vmor %vm3072, %vm3073
        %v3075 = vsel %vm3074, %v3066, %v3071
        %v3076 = vrsqrt.pop %v3054
        %v3077 = vmul.f32 %v3076, %v3054
        %v3078 = vmul.f32 %v3077, %v3076
        %v3079 = vmul.f32 0.5, %v3078
        %v3080 = vsub.f32 1.5, %v3079
        %v3081 = vmul.f32 %v3076, %v3080
        %vm3082 = vweird.f32 %v3054
        %vm3083 = vweird.f32 %v3076
        %vm3084 = vmor %vm3082, %vm3083
        %v3085 = vsel %vm3084, %v3076, %v3081
        %v3086 = vrsqrt.pop %v3055
        %v3087 = vmul.f32 %v3086, %v3055
        %v3088 = vmul.f32 %v3087, %v3086
        %v3089 = vmul.f32 0.5, %v3088
        %v3090 = vsub.f32 1.5, %v3089
        %v3091 = vmul.f32 %v3086, %v3090
        %vm3092 = vweird.f32 %v3055
        %vm3093 = vweird.f32 %v3086
        %vm3094 = vmor %vm3092, %vm3093
        %v3095 = vsel %vm3094, %v3086, %v3091
        %v3096 = vmul.f32 %v3028, %v3065
        %v3097 = vmul.f32 %v3029, %v3075
        %v3098 = vmul.f32 %v3030, %v3085
        %v3099 = vmul.f32 %v3031, %v3095
        %v3101 = vperm.slane %v3009, 0
        %v3103 = vmul.f32 %v3096, %v3101
        %v3104 = vmul.f32 %v3097, %v3101
        %v3105 = vmul.f32 %v3098, %v3101
        %v3106 = vmul.f32 %v3099, %v3101
        %v3108 = vperm.slane %v3011, 0
        %v3110 = vadd.f32 %v3103, %v3108
        %v3111 = vadd.f32 %v3104, %v3108
        %v3112 = vadd.f32 %v3105, %v3108
        %v3113 = vadd.f32 %v3106, %v3108
        %s3114 = scalar_lea.vmem %s11, 32
        %v3115 = vld [vmem:[%s3114] sm:$0xff]
        %v3116 = vld [vmem:[%s3114 + $0x8] sm:$0xff]
        %v3117 = vld [vmem:[%s3114 + $0x10] sm:$0xff]
        %v3118 = vld [vmem:[%s3114 + $0x18] sm:$0xff]
        %s3119 = scalar_lea.vmem %s12, 1
        %v3120 = vld [vmem:[%s3119] sm:$0x1]
        %v3122 = vperm.slane %v3120, 0
        %v3125 = vsel %vm787, %v3110, 0
        %v3128 = vsel %vm787, %v3111, 0
        %v3131 = vsel %vm787, %v3112, 0
        %v3134 = vsel %vm787, %v3113, 0
        %3136 = vmatpush.msra.mxu0 0.0
        %3137 = vmatpush.msra.mxu0 0.0
        %3138 = vmatpush.msra.mxu0 0.0
        %3139 = vmatpush.msra.mxu0 0.0
        %3140 = vmatpush.msra.mxu0 0.0
        %3141 = vmatpush.msra.mxu0 0.0
        %3142 = vmatpush.msra.mxu0 0.0
        %3143 = vmatpush.msra.mxu0 0.0
        %3144 = vmatpush.msra.mxu0 0.0
        %3145 = vmatpush.msra.mxu0 0.0
        %3146 = vmatpush.msra.mxu0 0.0
        %3147 = vmatpush.msra.mxu0 0.0
        %3148 = vmatpush.msra.mxu0 %v3118
        %3149 = vmatpush.msra.mxu0 %v3117
        %3150 = vmatpush.msra.mxu0 %v3116
        %3151 = vmatpush.msra.mxu0 %v3115
        %3152 = vmatmul.f32.gmra.mxu0 %v3125
        %v3153 = vpop.f32.mrf.mxu0
        %v3154 = vadd.f32 %v3122, %v3153
        %3155 = vmatmul.f32.gmra.mxu0 %v3128
        %v3156 = vpop.f32.mrf.mxu0
        %v3157 = vadd.f32 %v3122, %v3156
        %3158 = vmatmul.f32.gmra.mxu0 %v3131
        %v3159 = vpop.f32.mrf.mxu0
        %v3160 = vadd.f32 %v3122, %v3159
        %3161 = vmatmul.f32.gmra.mxu0 %v3134
        %v3162 = vpop.f32.mrf.mxu0
        %v3163 = vadd.f32 %v3122, %v3162
        %3164 = vdwg.mxu0
        %v3165 = vmul.f32 %v3154, 0.5
        %v3166 = vmul.f32 %v3157, 0.5
        %v3167 = vmul.f32 %v3160, 0.5
        %v3168 = vmul.f32 %v3163, 0.5
        %v3169 = vmul.f32 %v3154, 0.044715
        %v3170 = vmul.f32 %v3157, 0.044715
        %v3171 = vmul.f32 %v3160, 0.044715
        %v3172 = vmul.f32 %v3163, 0.044715
        %v3173 = vmul.f32 %v3169, %v3154
        %v3174 = vmul.f32 %v3170, %v3157
        %v3175 = vmul.f32 %v3171, %v3160
        %v3176 = vmul.f32 %v3172, %v3163
        %v3177 = vmul.f32 %v3173, %v3154
        %v3178 = vmul.f32 %v3174, %v3157
        %v3179 = vmul.f32 %v3175, %v3160
        %v3180 = vmul.f32 %v3176, %v3163
        %v3181 = vadd.f32 %v3154, %v3177
        %v3182 = vadd.f32 %v3157, %v3178
        %v3183 = vadd.f32 %v3160, %v3179
        %v3184 = vadd.f32 %v3163, %v3180
        %v3185 = vmul.f32 %v3181, 0.7978846
        %v3186 = vmul.f32 %v3182, 0.7978846
        %v3187 = vmul.f32 %v3183, 0.7978846
        %v3188 = vmul.f32 %v3184, 0.7978846
        %v3189 = vtanh.pop %v3185
        %v3190 = vtanh.pop %v3186
        %v3191 = vtanh.pop %v3187
        %v3192 = vtanh.pop %v3188
        %v3193 = vadd.f32 %v3189, 1.0
        %v3194 = vadd.f32 %v3190, 1.0
        %v3195 = vadd.f32 %v3191, 1.0
        %v3196 = vadd.f32 %v3192, 1.0
        %v3197 = vmul.f32 %v3165, %v3193
        %v3198 = vmul.f32 %v3166, %v3194
        %v3199 = vmul.f32 %v3167, %v3195
        %v3200 = vmul.f32 %v3168, %v3196
        %s3201 = scalar_lea.vmem %s13, 128
        %v3202 = vld [vmem:[%s3201] sm:$0xff]
        %v3203 = vld [vmem:[%s3201 + $0x8] sm:$0xff]
        %v3204 = vld [vmem:[%s3201 + $0x10] sm:$0xff]
        %v3205 = vld [vmem:[%s3201 + $0x18] sm:$0xff]
        %v3206 = vld [vmem:[%s3201 + $0x20] sm:$0xff]
        %v3207 = vld [vmem:[%s3201 + $0x28] sm:$0xff]
        %v3208 = vld [vmem:[%s3201 + $0x30] sm:$0xff]
        %v3209 = vld [vmem:[%s3201 + $0x38] sm:$0xff]
        %v3210 = vld [vmem:[%s3201 + $0x40] sm:$0xff]
        %v3211 = vld [vmem:[%s3201 + $0x48] sm:$0xff]
        %v3212 = vld [vmem:[%s3201 + $0x50] sm:$0xff]
        %v3213 = vld [vmem:[%s3201 + $0x58] sm:$0xff]
        %v3214 = vld [vmem:[%s3201 + $0x60] sm:$0xff]
        %v3215 = vld [vmem:[%s3201 + $0x68] sm:$0xff]
        %v3216 = vld [vmem:[%s3201 + $0x70] sm:$0xff]
        %v3217 = vld [vmem:[%s3201 + $0x78] sm:$0xff]
        %s3218 = scalar_lea.vmem %s14, 1
        %v3219 = vld [vmem:[%s3218] sm:$0x1]
        %v3221 = vperm.slane %v3219, 0
        %3223 = vmatpush.msra.mxu0 %v3217
        %3224 = vmatpush.msra.mxu0 %v3216
        %3225 = vmatpush.msra.mxu0 %v3215
        %3226 = vmatpush.msra.mxu0 %v3214
        %3227 = vmatpush.msra.mxu0 %v3213
        %3228 = vmatpush.msra.mxu0 %v3212
        %3229 = vmatpush.msra.mxu0 %v3211
        %3230 = vmatpush.msra.mxu0 %v3210
        %3231 = vmatpush.msra.mxu0 %v3209
        %3232 = vmatpush.msra.mxu0 %v3208
        %3233 = vmatpush.msra.mxu0 %v3207
        %3234 = vmatpush.msra.mxu0 %v3206
        %3235 = vmatpush.msra.mxu0 %v3205
        %3236 = vmatpush.msra.mxu0 %v3204
        %3237 = vmatpush.msra.mxu0 %v3203
        %3238 = vmatpush.msra.mxu0 %v3202
        %3239 = vmatmul.f32.gmra.mxu0 %v3197
        %v3240 = vpop.f32.mrf.mxu0
        %v3241 = vadd.f32 %v3221, %v3240
        %3242 = vmatmul.f32.gmra.mxu0 %v3198
        %v3243 = vpop.f32.mrf.mxu0
        %v3244 = vadd.f32 %v3221, %v3243
        %3245 = vmatmul.f32.gmra.mxu0 %v3199
        %v3246 = vpop.f32.mrf.mxu0
        %v3247 = vadd.f32 %v3221, %v3246
        %3248 = vmatmul.f32.gmra.mxu0 %v3200
        %v3249 = vpop.f32.mrf.mxu0
        %v3250 = vadd.f32 %v3221, %v3249
        %3251 = vdwg.mxu0
        %v3252 = vadd.f32 %v3110, %v3241
        %v3253 = vadd.f32 %v3111, %v3244
        %v3254 = vadd.f32 %v3112, %v3247
        %v3255 = vadd.f32 %v3113, %v3250
        %s3256 = scalar_lea.vmem %s15, 1
        %v3257 = vld [vmem:[%s3256] sm:$0x1]
        %s3258 = scalar_lea.vmem %s16, 1
        %v3259 = vld [vmem:[%s3258] sm:$0x1]
        %v3260 = vsel %vm787, %v3252, 0.0
        %3261 = vadd.xlane.f32.xlu0 %v3260
        %v3262 = vpop.xlane.xlu0 %3261
        %v3263 = vsel %vm787, %v3253, 0.0
        %3264 = vadd.xlane.f32.xlu0 %v3263
        %v3265 = vpop.xlane.xlu0 %3264
        %v3266 = vsel %vm787, %v3254, 0.0
        %3267 = vadd.xlane.f32.xlu0 %v3266
        %v3268 = vpop.xlane.xlu0 %3267
        %v3269 = vsel %vm787, %v3255, 0.0
        %3270 = vadd.xlane.f32.xlu0 %v3269
        %v3271 = vpop.xlane.xlu0 %3270
        %v3272 = vmul.f32 %v3262, %v1737
        %v3273 = vmul.f32 %v3265, %v1737
        %v3274 = vmul.f32 %v3268, %v1737
        %v3275 = vmul.f32 %v3271, %v1737
        %v3276 = vsub.f32 %v3252, %v3272
        %v3277 = vsub.f32 %v3253, %v3273
        %v3278 = vsub.f32 %v3254, %v3274
        %v3279 = vsub.f32 %v3255, %v3275
        %v3280 = vmul.f32 %v3276, %v3276
        %v3281 = vmul.f32 %v3277, %v3277
        %v3282 = vmul.f32 %v3278, %v3278
        %v3283 = vmul.f32 %v3279, %v3279
        %v3284 = vsel %vm787, %v3280, 0.0
        %3285 = vadd.xlane.f32.xlu0 %v3284
        %v3286 = vpop.xlane.xlu0 %3285
        %v3287 = vsel %vm787, %v3281, 0.0
        %3288 = vadd.xlane.f32.xlu0 %v3287
        %v3289 = vpop.xlane.xlu0 %3288
        %v3290 = vsel %vm787, %v3282, 0.0
        %3291 = vadd.xlane.f32.xlu0 %v3290
        %v3292 = vpop.xlane.xlu0 %3291
        %v3293 = vsel %vm787, %v3283, 0.0
        %3294 = vadd.xlane.f32.xlu0 %v3293
        %v3295 = vpop.xlane.xlu0 %3294
        %v3296 = vmul.f32 %v3286, %v1737
        %v3297 = vmul.f32 %v3289, %v1737
        %v3298 = vmul.f32 %v3292, %v1737
        %v3299 = vmul.f32 %v3295, %v1737
        %v3300 = vadd.f32 %v3296, 1e-05
        %v3301 = vadd.f32 %v3297, 1e-05
        %v3302 = vadd.f32 %v3298, 1e-05
        %v3303 = vadd.f32 %v3299, 1e-05
        %v3304 = vrsqrt.pop %v3300
        %v3305 = vmul.f32 %v3304, %v3300
        %v3306 = vmul.f32 %v3305, %v3304
        %v3307 = vmul.f32 0.5, %v3306
        %v3308 = vsub.f32 1.5, %v3307
        %v3309 = vmul.f32 %v3304, %v3308
        %vm3310 = vweird.f32 %v3300
        %vm3311 = vweird.f32 %v3304
        %vm3312 = vmor %vm3310, %vm3311
        %v3313 = vsel %vm3312, %v3304, %v3309
        %v3314 = vrsqrt.pop %v3301
        %v3315 = vmul.f32 %v3314, %v3301
        %v3316 = vmul.f32 %v3315, %v3314
        %v3317 = vmul.f32 0.5, %v3316
        %v3318 = vsub.f32 1.5, %v3317
        %v3319 = vmul.f32 %v3314, %v3318
        %vm3320 = vweird.f32 %v3301
        %vm3321 = vweird.f32 %v3314
        %vm3322 = vmor %vm3320, %vm3321
        %v3323 = vsel %vm3322, %v3314, %v3319
        %v3324 = vrsqrt.pop %v3302
        %v3325 = vmul.f32 %v3324, %v3302
        %v3326 = vmul.f32 %v3325, %v3324
        %v3327 = vmul.f32 0.5, %v3326
        %v3328 = vsub.f32 1.5, %v3327
        %v3329 = vmul.f32 %v3324, %v3328
        %vm3330 = vweird.f32 %v3302
        %vm3331 = vweird.f32 %v3324
        %vm3332 = vmor %vm3330, %vm3331
        %v3333 = vsel %vm3332, %v3324, %v3329
        %v3334 = vrsqrt.pop %v3303
        %v3335 = vmul.f32 %v3334, %v3303
        %v3336 = vmul.f32 %v3335, %v3334
        %v3337 = vmul.f32 0.5, %v3336
        %v3338 = vsub.f32 1.5, %v3337
        %v3339 = vmul.f32 %v3334, %v3338
        %vm3340 = vweird.f32 %v3303
        %vm3341 = vweird.f32 %v3334
        %vm3342 = vmor %vm3340, %vm3341
        %v3343 = vsel %vm3342, %v3334, %v3339
        %v3344 = vmul.f32 %v3276, %v3313
        %v3345 = vmul.f32 %v3277, %v3323
        %v3346 = vmul.f32 %v3278, %v3333
        %v3347 = vmul.f32 %v3279, %v3343
        %v3349 = vperm.slane %v3257, 0
        %v3351 = vmul.f32 %v3344, %v3349
        %v3352 = vmul.f32 %v3345, %v3349
        %v3353 = vmul.f32 %v3346, %v3349
        %v3354 = vmul.f32 %v3347, %v3349
        %v3356 = vperm.slane %v3259, 0
        %v3358 = vadd.f32 %v3351, %v3356
        %v3359 = vadd.f32 %v3352, %v3356
        %v3360 = vadd.f32 %v3353, %v3356
        %v3361 = vadd.f32 %v3354, %v3356
        %v3362 = vld [vmem:[%s4] sm:$0xff]
        %v3364 = vsel %vm787, %v3362, 0
        %3366 = vmatpush.msra.mxu0 0.0
        %3367 = vmatpush.msra.mxu0 0.0
        %3368 = vmatpush.msra.mxu0 0.0
        %3369 = vmatpush.msra.mxu0 0.0
        %3370 = vmatpush.msra.mxu0 0.0
        %3371 = vmatpush.msra.mxu0 0.0
        %3372 = vmatpush.msra.mxu0 0.0
        %3373 = vmatpush.msra.mxu0 0.0
        %3374 = vmatpush.msra.mxu0 0.0
        %3375 = vmatpush.msra.mxu0 0.0
        %3376 = vmatpush.msra.mxu0 0.0
        %3377 = vmatpush.msra.mxu0 0.0
        %3378 = vmatpush.msra.mxu0 %v3361
        %3379 = vmatpush.msra.mxu0 %v3360
        %3380 = vmatpush.msra.mxu0 %v3359
        %3381 = vmatpush.msra.mxu0 %v3358
        %3382 = vmatmul.f32.gmra.mxu0 %v3364
        %v3383 = vpop.f32.mrf.mxu0
        %v3384 = vadd.f32 0.0, %v3383
        %3385 = vdwg.mxu0
        %v3387 = vrot.slane %v3384, 4
        %v3389 = vld [vmem:[%s17] sm:$0xff]
        %v3390 = vld [vmem:[%s17 + $0x8] sm:$0xff]
        %v3391 = vld [vmem:[%s17 + $0x10] sm:$0xff]
        %v3392 = vld [vmem:[%s17 + $0x18] sm:$0xff]
        %v3393 = vld [vmem:[%s17 + $0x20] sm:$0xff]
        %v3394 = vld [vmem:[%s17 + $0x28] sm:$0xff]
        %v3395 = vld [vmem:[%s17 + $0x30] sm:$0xff]
        %v3396 = vld [vmem:[%s17 + $0x38] sm:$0xff]
        %v3397 = vld [vmem:[%s18] sm:$0xff]
        %v3398 = vld [vmem:[%s18 + $0x8] sm:$0xff]
        %v3399 = vld [vmem:[%s18 + $0x10] sm:$0xff]
        %v3400 = vld [vmem:[%s18 + $0x18] sm:$0xff]
        %v3401 = vld [vmem:[%s19] sm:$0x1]
        %v3402 = vperm.slane %v3384, 3
        %v3403 = vperm.slane %v3387, 3
        %v3406 = vperm.slane %v3384, 2
        %v3407 = vperm.slane %v3387, 2
        %v3410 = vperm.slane %v3384, 1
        %v3411 = vperm.slane %v3387, 1
        %v3414 = vperm.slane %v3384, 0
        %v3415 = vperm.slane %v3387, 0
        %vm3418 = vcmask 1040384
        %v3419 = vsel %vm3418, %v3402, %v3406
        %v3420 = vsel %vm3418, %v3403, %v3407
        %vm3421 = vcmask 1041408
        %v3422 = vsel %vm3421, %v3419, %v3410
        %v3423 = vsel %vm3421, %v3420, %v3411
        %vm3424 = vcmask 1042432
        %v3425 = vsel %vm3424, %v3422, %v3414
        %v3426 = vsel %vm3424, %v3423, %v3415
        %3429 = vrot.lane.b32.xlu0 %v3425, 32
        %v3430 = vpop.permute.xlu0 %3429
        %3431 = vrot.lane.b32.xlu0 %v3426, 32
        %v3432 = vpop.permute.xlu0 %3431
        %v3435 = vsel %vm787, %v3384, %v3430
        %v3436 = vsel %vm787, %v3387, %v3432
        %v3438 = vperm.slane %v3401, 0
        %3442 = vst [vmem:[#allocation1] ss:$2 sm:$0xff] %v3435
        %s3443 = scalar_lea.vmem [#allocation1], 1
        %3444 = vst [vmem:[%s3443] ss:$2 sm:$0xff] %v3436
        %v3445 = vld.sshfl [vmem:[#allocation1] sm:$0xff pattern:$0x75316420]
        %vm3446 = vcmask 523264
        %v3447 = vsel %vm3446, %v3445, 0
        %3449 = vmatpush.msra.mxu0 0.0
        %3450 = vmatpush.msra.mxu0 0.0
        %3451 = vmatpush.msra.mxu0 0.0
        %3452 = vmatpush.msra.mxu0 0.0
        %3453 = vmatpush.msra.mxu0 0.0
        %3454 = vmatpush.msra.mxu0 0.0
        %3455 = vmatpush.msra.mxu0 0.0
        %3456 = vmatpush.msra.mxu0 0.0
        %3457 = vmatpush.msra.mxu0 %v3396
        %3458 = vmatpush.msra.mxu0 %v3395
        %3459 = vmatpush.msra.mxu0 %v3394
        %3460 = vmatpush.msra.mxu0 %v3393
        %3461 = vmatpush.msra.mxu0 %v3392
        %3462 = vmatpush.msra.mxu0 %v3391
        %3463 = vmatpush.msra.mxu0 %v3390
        %3464 = vmatpush.msra.mxu0 %v3389
        %3465 = vmatmul.f32.gmra.mxu0 %v3447
        %v3466 = vpop.f32.mrf.mxu0
        %v3467 = vadd.f32 %v3438, %v3466
        %3468 = vdwg.mxu0
        %v3470 = vrot.slane %v3467, 4
        %v3473 = vsel %vm787, 0.0, 0
        %3475 = vmatpush.msra.mxu0 0.0
        %3476 = vmatpush.msra.mxu0 0.0
        %3477 = vmatpush.msra.mxu0 0.0
        %3478 = vmatpush.msra.mxu0 0.0
        %3479 = vmatpush.msra.mxu0 0.0
        %3480 = vmatpush.msra.mxu0 0.0
        %3481 = vmatpush.msra.mxu0 0.0
        %3482 = vmatpush.msra.mxu0 0.0
        %3483 = vmatpush.msra.mxu0 0.0
        %3484 = vmatpush.msra.mxu0 0.0
        %3485 = vmatpush.msra.mxu0 0.0
        %3486 = vmatpush.msra.mxu0 0.0
        %3487 = vmatpush.msra.mxu0 %v3400
        %3488 = vmatpush.msra.mxu0 %v3399
        %3489 = vmatpush.msra.mxu0 %v3398
        %3490 = vmatpush.msra.mxu0 %v3397
        %3491 = vmatmul.f32.gmra.mxu0 %v3473
        %v3492 = vpop.f32.mrf.mxu0
        %v3493 = vadd.f32 0.0, %v3492
        %3494 = vdwg.mxu0
        %v3496 = vrot.slane %v3493, 1
        %v3499 = vadd.f32 %v3467, %v3493
        %v3500 = vadd.f32 %v3470, %v3496
        %v3501 = vxor.u32 %v3499, 2147483648
        %v3502 = vxor.u32 %v3500, 2147483648
        %v3503 = vmul.f32 %v3501, 1.442695
        %v3504 = vpow.pop %v3503
        %v3505 = vmul.f32 %v3502, 1.442695
        %v3506 = vpow.pop %v3505
        %v3507 = vadd.f32 %v3504, 1.0
        %v3508 = vadd.f32 %v3506, 1.0
        %v3509 = vrcp.pop %v3507
        %v3510 = vmul.f32 %v3507, %v3509
        %v3511 = vsub.f32 1.0, %v3510
        %v3512 = vmul.f32 %v3509, %v3511
        %v3513 = vadd.f32 %v3509, %v3512
        %vm3514 = vweird.f32 %v3507
        %vm3515 = vweird.f32 %v3509
        %vm3516 = vmor %vm3514, %vm3515
        %v3517 = vsel %vm3516, %v3509, %v3513
        %v3518 = vand.u32 2147483647, %v3507
        %vm3519 = vcmp.eq.f32.partialorder %v3518, 8.507059e+37
        %v3520 = vand.u32 %v3507, 2147483648
        %v3521 = vor.u32 1.1754944e-38, %v3520
        %v3522 = vsel %vm3519, %v3521, %v3517
        %v3523 = vmul.f32 1.0, %v3522
        %v3524 = vrcp.pop %v3508
        %v3525 = vmul.f32 %v3508, %v3524
        %v3526 = vsub.f32 1.0, %v3525
        %v3527 = vmul.f32 %v3524, %v3526
        %v3528 = vadd.f32 %v3524, %v3527
        %vm3529 = vweird.f32 %v3508
        %vm3530 = vweird.f32 %v3524
        %vm3531 = vmor %vm3529, %vm3530
        %v3532 = vsel %vm3531, %v3524, %v3528
        %v3533 = vand.u32 2147483647, %v3508
        %vm3534 = vcmp.eq.f32.partialorder %v3533, 8.507059e+37
        %v3535 = vand.u32 %v3508, 2147483648
        %v3536 = vor.u32 1.1754944e-38, %v3535
        %v3537 = vsel %vm3534, %v3536, %v3532
        %v3538 = vmul.f32 1.0, %v3537
        %v3539 = vtanh.pop %v3499
        %v3540 = vtanh.pop %v3500
        %v3541 = vmul.f32 %v3523, 0.0
        %v3542 = vmul.f32 %v3538, 0.0
        %3545 = vrot.lane.b32.xlu0 %v3539, 64
        %v3546 = vpop.permute.xlu0 %3545
        %3547 = vrot.lane.b32.xlu0 %v3540, 64
        %v3548 = vpop.permute.xlu0 %3547
        %v3551 = vmul.f32 %v3523, %v3546
        %v3552 = vmul.f32 %v3538, %v3548
        %3555 = vrot.lane.b32.xlu0 %v3551, 32
        %v3556 = vpop.permute.xlu0 %3555
        %3557 = vrot.lane.b32.xlu0 %v3552, 32
        %v3558 = vpop.permute.xlu0 %3557
        %v3561 = vadd.f32 %v3541, %v3556
        %v3562 = vadd.f32 %v3542, %v3558
        %v3563 = vtanh.pop %v3561
        %v3564 = vtanh.pop %v3562
        %3567 = vrot.lane.b32.xlu0 %v3563, 64
        %v3568 = vpop.permute.xlu0 %3567
        %3569 = vrot.lane.b32.xlu0 %v3564, 64
        %v3570 = vpop.permute.xlu0 %3569
        %v3573 = vmul.f32 %v3523, %v3568
        %v3574 = vmul.f32 %v3538, %v3570
        %v3577 = vperm.slane %v3573, 0
        %v3578 = vperm.slane %v3574, 0
        %vm3579 = vcmask 1041409
        %v3580 = vsel %vm3579, %v3578, %v3577
        %3581 = vrot.lane.b32.xlu0 %v3580, 32
        %v3582 = vpop.permute.xlu0 %3581
        %v3583 = vsel %vm787, %v3582, 0
        %3585 = vmatpush.msra.mxu0 0.0
        %3586 = vmatpush.msra.mxu0 0.0
        %3587 = vmatpush.msra.mxu0 0.0
        %3588 = vmatpush.msra.mxu0 0.0
        %3589 = vmatpush.msra.mxu0 0.0
        %3590 = vmatpush.msra.mxu0 0.0
        %3591 = vmatpush.msra.mxu0 0.0
        %3592 = vmatpush.msra.mxu0 0.0
        %3593 = vmatpush.msra.mxu0 0.0
        %3594 = vmatpush.msra.mxu0 0.0
        %3595 = vmatpush.msra.mxu0 0.0
        %3596 = vmatpush.msra.mxu0 0.0
        %3597 = vmatpush.msra.mxu0 %v3400
        %3598 = vmatpush.msra.mxu0 %v3399
        %3599 = vmatpush.msra.mxu0 %v3398
        %3600 = vmatpush.msra.mxu0 %v3397
        %3601 = vmatmul.f32.gmra.mxu0 %v3583
        %v3602 = vpop.f32.mrf.mxu0
        %v3603 = vadd.f32 0.0, %v3602
        %3604 = vdwg.mxu0
        %v3606 = vrot.slane %v3603, 7
        %v3609 = vadd.f32 %v3467, %v3606
        %v3610 = vadd.f32 %v3470, %v3603
        %v3611 = vxor.u32 %v3609, 2147483648
        %v3612 = vxor.u32 %v3610, 2147483648
        %v3613 = vmul.f32 %v3611, 1.442695
        %v3614 = vpow.pop %v3613
        %v3615 = vmul.f32 %v3612, 1.442695
        %v3616 = vpow.pop %v3615
        %v3617 = vadd.f32 %v3614, 1.0
        %v3618 = vadd.f32 %v3616, 1.0
        %v3619 = vrcp.pop %v3617
        %v3620 = vmul.f32 %v3617, %v3619
        %v3621 = vsub.f32 1.0, %v3620
        %v3622 = vmul.f32 %v3619, %v3621
        %v3623 = vadd.f32 %v3619, %v3622
        %vm3624 = vweird.f32 %v3617
        %vm3625 = vweird.f32 %v3619
        %vm3626 = vmor %vm3624, %vm3625
        %v3627 = vsel %vm3626, %v3619, %v3623
        %v3628 = vand.u32 2147483647, %v3617
        %vm3629 = vcmp.eq.f32.partialorder %v3628, 8.507059e+37
        %v3630 = vand.u32 %v3617, 2147483648
        %v3631 = vor.u32 1.1754944e-38, %v3630
        %v3632 = vsel %vm3629, %v3631, %v3627
        %v3633 = vmul.f32 1.0, %v3632
        %v3634 = vrcp.pop %v3618
        %v3635 = vmul.f32 %v3618, %v3634
        %v3636 = vsub.f32 1.0, %v3635
        %v3637 = vmul.f32 %v3634, %v3636
        %v3638 = vadd.f32 %v3634, %v3637
        %vm3639 = vweird.f32 %v3618
        %vm3640 = vweird.f32 %v3634
        %vm3641 = vmor %vm3639, %vm3640
        %v3642 = vsel %vm3641, %v3634, %v3638
        %v3643 = vand.u32 2147483647, %v3618
        %vm3644 = vcmp.eq.f32.partialorder %v3643, 8.507059e+37
        %v3645 = vand.u32 %v3618, 2147483648
        %v3646 = vor.u32 1.1754944e-38, %v3645
        %v3647 = vsel %vm3644, %v3646, %v3642
        %v3648 = vmul.f32 1.0, %v3647
        %v3649 = vtanh.pop %v3609
        %v3650 = vtanh.pop %v3610
        %v3653 = vrot.slane %v3561, 7
        %v3654 = vrot.slane %v3562, 7
        %v3657 = vmul.f32 %v3633, %v3653
        %v3658 = vmul.f32 %v3648, %v3654
        %3661 = vrot.lane.b32.xlu0 %v3649, 64
        %v3662 = vpop.permute.xlu0 %3661
        %3663 = vrot.lane.b32.xlu0 %v3650, 64
        %v3664 = vpop.permute.xlu0 %3663
        %v3667 = vmul.f32 %v3633, %v3662
        %v3668 = vmul.f32 %v3648, %v3664
        %3671 = vrot.lane.b32.xlu0 %v3667, 32
        %v3672 = vpop.permute.xlu0 %3671
        %3673 = vrot.lane.b32.xlu0 %v3668, 32
        %v3674 = vpop.permute.xlu0 %3673
        %v3677 = vadd.f32 %v3657, %v3672
        %v3678 = vadd.f32 %v3658, %v3674
        %v3679 = vtanh.pop %v3677
        %v3680 = vtanh.pop %v3678
        %3683 = vrot.lane.b32.xlu0 %v3679, 64
        %v3684 = vpop.permute.xlu0 %3683
        %3685 = vrot.lane.b32.xlu0 %v3680, 64
        %v3686 = vpop.permute.xlu0 %3685
        %v3689 = vmul.f32 %v3633, %v3684
        %v3690 = vmul.f32 %v3648, %v3686
        %v3693 = vperm.slane %v3689, 1
        %v3694 = vperm.slane %v3690, 1
        %v3695 = vsel %vm3579, %v3694, %v3693
        %3696 = vrot.lane.b32.xlu0 %v3695, 32
        %v3697 = vpop.permute.xlu0 %3696
        %v3698 = vsel %vm787, %v3697, 0
        %3700 = vmatpush.msra.mxu0 0.0
        %3701 = vmatpush.msra.mxu0 0.0
        %3702 = vmatpush.msra.mxu0 0.0
        %3703 = vmatpush.msra.mxu0 0.0
        %3704 = vmatpush.msra.mxu0 0.0
        %3705 = vmatpush.msra.mxu0 0.0
        %3706 = vmatpush.msra.mxu0 0.0
        %3707 = vmatpush.msra.mxu0 0.0
        %3708 = vmatpush.msra.mxu0 0.0
        %3709 = vmatpush.msra.mxu0 0.0
        %3710 = vmatpush.msra.mxu0 0.0
        %3711 = vmatpush.msra.mxu0 0.0
        %3712 = vmatpush.msra.mxu0 %v3400
        %3713 = vmatpush.msra.mxu0 %v3399
        %3714 = vmatpush.msra.mxu0 %v3398
        %3715 = vmatpush.msra.mxu0 %v3397
        %3716 = vmatmul.f32.gmra.mxu0 %v3698
        %v3717 = vpop.f32.mrf.mxu0
        %v3718 = vadd.f32 0.0, %v3717
        %3719 = vdwg.mxu0
        %v3721 = vrot.slane %v3718, 6
        %v3722 = vrot.slane %v3718, 7
        %v3725 = vadd.f32 %v3467, %v3721
        %v3726 = vadd.f32 %v3470, %v3722
        %v3727 = vxor.u32 %v3725, 2147483648
        %v3728 = vxor.u32 %v3726, 2147483648
        %v3729 = vmul.f32 %v3727, 1.442695
        %v3730 = vpow.pop %v3729
        %v3731 = vmul.f32 %v3728, 1.442695
        %v3732 = vpow.pop %v3731
        %v3733 = vadd.f32 %v3730, 1.0
        %v3734 = vadd.f32 %v3732, 1.0
        %v3735 = vrcp.pop %v3733
        %v3736 = vmul.f32 %v3733, %v3735
        %v3737 = vsub.f32 1.0, %v3736
        %v3738 = vmul.f32 %v3735, %v3737
        %v3739 = vadd.f32 %v3735, %v3738
        %vm3740 = vweird.f32 %v3733
        %vm3741 = vweird.f32 %v3735
        %vm3742 = vmor %vm3740, %vm3741
        %v3743 = vsel %vm3742, %v3735, %v3739
        %v3744 = vand.u32 2147483647, %v3733
        %vm3745 = vcmp.eq.f32.partialorder %v3744, 8.507059e+37
        %v3746 = vand.u32 %v3733, 2147483648
        %v3747 = vor.u32 1.1754944e-38, %v3746
        %v3748 = vsel %vm3745, %v3747, %v3743
        %v3749 = vmul.f32 1.0, %v3748
        %v3750 = vrcp.pop %v3734
        %v3751 = vmul.f32 %v3734, %v3750
        %v3752 = vsub.f32 1.0, %v3751
        %v3753 = vmul.f32 %v3750, %v3752
        %v3754 = vadd.f32 %v3750, %v3753
        %vm3755 = vweird.f32 %v3734
        %vm3756 = vweird.f32 %v3750
        %vm3757 = vmor %vm3755, %vm3756
        %v3758 = vsel %vm3757, %v3750, %v3754
        %v3759 = vand.u32 2147483647, %v3734
        %vm3760 = vcmp.eq.f32.partialorder %v3759, 8.507059e+37
        %v3761 = vand.u32 %v3734, 2147483648
        %v3762 = vor.u32 1.1754944e-38, %v3761
        %v3763 = vsel %vm3760, %v3762, %v3758
        %v3764 = vmul.f32 1.0, %v3763
        %v3765 = vtanh.pop %v3725
        %v3766 = vtanh.pop %v3726
        %v3769 = vrot.slane %v3677, 7
        %v3770 = vrot.slane %v3678, 7
        %v3773 = vmul.f32 %v3749, %v3769
        %v3774 = vmul.f32 %v3764, %v3770
        %3777 = vrot.lane.b32.xlu0 %v3765, 64
        %v3778 = vpop.permute.xlu0 %3777
        %3779 = vrot.lane.b32.xlu0 %v3766, 64
        %v3780 = vpop.permute.xlu0 %3779
        %v3783 = vmul.f32 %v3749, %v3778
        %v3784 = vmul.f32 %v3764, %v3780
        %3787 = vrot.lane.b32.xlu0 %v3783, 32
        %v3788 = vpop.permute.xlu0 %3787
        %3789 = vrot.lane.b32.xlu0 %v3784, 32
        %v3790 = vpop.permute.xlu0 %3789
        %v3793 = vadd.f32 %v3773, %v3788
        %v3794 = vadd.f32 %v3774, %v3790
        %v3795 = vtanh.pop %v3793
        %v3796 = vtanh.pop %v3794
        %3799 = vrot.lane.b32.xlu0 %v3795, 64
        %v3800 = vpop.permute.xlu0 %3799
        %3801 = vrot.lane.b32.xlu0 %v3796, 64
        %v3802 = vpop.permute.xlu0 %3801
        %v3805 = vmul.f32 %v3749, %v3800
        %v3806 = vmul.f32 %v3764, %v3802
        %v3809 = vperm.slane %v3805, 2
        %v3810 = vperm.slane %v3806, 2
        %v3811 = vsel %vm3579, %v3810, %v3809
        %3812 = vrot.lane.b32.xlu0 %v3811, 32
        %v3813 = vpop.permute.xlu0 %3812
        %v3814 = vsel %vm787, %v3813, 0
        %3816 = vmatpush.msra.mxu0 0.0
        %3817 = vmatpush.msra.mxu0 0.0
        %3818 = vmatpush.msra.mxu0 0.0
        %3819 = vmatpush.msra.mxu0 0.0
        %3820 = vmatpush.msra.mxu0 0.0
        %3821 = vmatpush.msra.mxu0 0.0
        %3822 = vmatpush.msra.mxu0 0.0
        %3823 = vmatpush.msra.mxu0 0.0
        %3824 = vmatpush.msra.mxu0 0.0
        %3825 = vmatpush.msra.mxu0 0.0
        %3826 = vmatpush.msra.mxu0 0.0
        %3827 = vmatpush.msra.mxu0 0.0
        %3828 = vmatpush.msra.mxu0 %v3400
        %3829 = vmatpush.msra.mxu0 %v3399
        %3830 = vmatpush.msra.mxu0 %v3398
        %3831 = vmatpush.msra.mxu0 %v3397
        %3832 = vmatmul.f32.gmra.mxu0 %v3814
        %v3833 = vpop.f32.mrf.mxu0
        %v3834 = vadd.f32 0.0, %v3833
        %3835 = vdwg.mxu0
        %v3837 = vrot.slane %v3834, 5
        %v3838 = vrot.slane %v3834, 6
        %v3841 = vadd.f32 %v3467, %v3837
        %v3842 = vadd.f32 %v3470, %v3838
        %v3843 = vxor.u32 %v3841, 2147483648
        %v3844 = vxor.u32 %v3842, 2147483648
        %v3845 = vmul.f32 %v3843, 1.442695
        %v3846 = vpow.pop %v3845
        %v3847 = vmul.f32 %v3844, 1.442695
        %v3848 = vpow.pop %v3847
        %v3849 = vadd.f32 %v3846, 1.0
        %v3850 = vadd.f32 %v3848, 1.0
        %v3851 = vrcp.pop %v3849
        %v3852 = vmul.f32 %v3849, %v3851
        %v3853 = vsub.f32 1.0, %v3852
        %v3854 = vmul.f32 %v3851, %v3853
        %v3855 = vadd.f32 %v3851, %v3854
        %vm3856 = vweird.f32 %v3849
        %vm3857 = vweird.f32 %v3851
        %vm3858 = vmor %vm3856, %vm3857
        %v3859 = vsel %vm3858, %v3851, %v3855
        %v3860 = vand.u32 2147483647, %v3849
        %vm3861 = vcmp.eq.f32.partialorder %v3860, 8.507059e+37
        %v3862 = vand.u32 %v3849, 2147483648
        %v3863 = vor.u32 1.1754944e-38, %v3862
        %v3864 = vsel %vm3861, %v3863, %v3859
        %v3865 = vmul.f32 1.0, %v3864
        %v3866 = vrcp.pop %v3850
        %v3867 = vmul.f32 %v3850, %v3866
        %v3868 = vsub.f32 1.0, %v3867
        %v3869 = vmul.f32 %v3866, %v3868
        %v3870 = vadd.f32 %v3866, %v3869
        %vm3871 = vweird.f32 %v3850
        %vm3872 = vweird.f32 %v3866
        %vm3873 = vmor %vm3871, %vm3872
        %v3874 = vsel %vm3873, %v3866, %v3870
        %v3875 = vand.u32 2147483647, %v3850
        %vm3876 = vcmp.eq.f32.partialorder %v3875, 8.507059e+37
        %v3877 = vand.u32 %v3850, 2147483648
        %v3878 = vor.u32 1.1754944e-38, %v3877
        %v3879 = vsel %vm3876, %v3878, %v3874
        %v3880 = vmul.f32 1.0, %v3879
        %v3881 = vtanh.pop %v3841
        %v3882 = vtanh.pop %v3842
        %v3885 = vrot.slane %v3793, 7
        %v3886 = vrot.slane %v3794, 7
        %v3889 = vmul.f32 %v3865, %v3885
        %v3890 = vmul.f32 %v3880, %v3886
        %3893 = vrot.lane.b32.xlu0 %v3881, 64
        %v3894 = vpop.permute.xlu0 %3893
        %3895 = vrot.lane.b32.xlu0 %v3882, 64
        %v3896 = vpop.permute.xlu0 %3895
        %v3899 = vmul.f32 %v3865, %v3894
        %v3900 = vmul.f32 %v3880, %v3896
        %3903 = vrot.lane.b32.xlu0 %v3899, 32
        %v3904 = vpop.permute.xlu0 %3903
        %3905 = vrot.lane.b32.xlu0 %v3900, 32
        %v3906 = vpop.permute.xlu0 %3905
        %v3909 = vadd.f32 %v3889, %v3904
        %v3910 = vadd.f32 %v3890, %v3906
        %v3911 = vtanh.pop %v3909
        %v3912 = vtanh.pop %v3910
        %3915 = vrot.lane.b32.xlu0 %v3911, 64
        %v3916 = vpop.permute.xlu0 %3915
        %3917 = vrot.lane.b32.xlu0 %v3912, 64
        %v3918 = vpop.permute.xlu0 %3917
        %v3921 = vmul.f32 %v3865, %v3916
        %v3922 = vmul.f32 %v3880, %v3918
        %v3926 = vperm.slane %v3921, 3
        %v3927 = vperm.slane %v3922, 3
        %v3928 = vsel %vm3579, %v3927, %v3926
        %3929 = vrot.lane.b32.xlu0 %v3928, 32
        %v3930 = vpop.permute.xlu0 %3929
        %v3932 = vsel %vm912, %v3582, %v3930
        %vm3933 = vcmask 1042434
        %v3934 = vsel %vm3933, %v3694, %v3693
        %3935 = vrot.lane.b32.xlu0 %v3934, 32
        %v3936 = vpop.permute.xlu0 %3935
        %v3938 = vsel %vm3933, %v3810, %v3809
        %3939 = vrot.lane.b32.xlu0 %v3938, 32
        %v3940 = vpop.permute.xlu0 %3939
        %v3942 = vsel %vm912, %v3936, %v3940
        %vm3943 = vcmask 1043459
        %v3944 = vsel %vm3943, %v3810, %v3809
        %3945 = vrot.lane.b32.xlu0 %v3944, 32
        %v3946 = vpop.permute.xlu0 %3945
        %v3948 = vsel %vm3943, %v3694, %v3693
        %3949 = vrot.lane.b32.xlu0 %v3948, 32
        %v3950 = vpop.permute.xlu0 %3949
        %v3952 = vsel %vm912, %v3946, %v3950
        %vm3953 = vcmask 1044484
        %v3954 = vsel %vm3953, %v3927, %v3926
        %3955 = vrot.lane.b32.xlu0 %v3954, 32
        %v3956 = vpop.permute.xlu0 %3955
        %v3958 = vsel %vm3953, %v3578, %v3577
        %3959 = vrot.lane.b32.xlu0 %v3958, 32
        %v3960 = vpop.permute.xlu0 %3959
        %v3962 = vsel %vm912, %v3956, %v3960
        %v3964 = vrot.slane %v3932, 1
        %3967 = vst [vmem:[#allocation1] sm:$0xff] %v3942
        %s3968 = scalar_lea.vmem [#allocation1], 1
        %v3969 = vld [vmem:[%s3968] ss:$9 sm:$0xff]
        %s3970 = scalar_lea.vmem [#allocation1], 2
        %v3971 = vld [vmem:[%s3970] ss:$9 sm:$0xff]
        %3973 = vst [vmem:[#allocation1] sm:$0xff] %v3952
        %s3974 = scalar_lea.vmem [#allocation1], 2
        %v3975 = vld [vmem:[%s3974] ss:$9 sm:$0xff]
        %s3976 = scalar_lea.vmem [#allocation1], 3
        %v3977 = vld [vmem:[%s3976] ss:$9 sm:$0xff]
        %3979 = vst [vmem:[#allocation1] sm:$0xff] %v3962
        %s3980 = scalar_lea.vmem [#allocation1], 3
        %v3981 = vld [vmem:[%s3980] ss:$9 sm:$0xff]
        %s3982 = scalar_lea.vmem [#allocation1], 4
        %v3983 = vld [vmem:[%s3982] ss:$9 sm:$0xff]
        %v3984 = vperm.slane %v3969, 0
        %v3985 = vperm.slane %v3971, 0
        %v3988 = vperm.slane %v3975, 0
        %v3989 = vperm.slane %v3977, 0
        %v3992 = vperm.slane %v3981, 0
        %v3993 = vperm.slane %v3983, 0
        %v3996 = vsel %vm3418, %v3932, %v3984
        %v3997 = vsel %vm3418, %v3964, %v3985
        %v3998 = vsel %vm3421, %v3996, %v3988
        %v3999 = vsel %vm3421, %v3997, %v3989
        %v4000 = vsel %vm3424, %v3998, %v3992
        %v4001 = vsel %vm3424, %v3999, %v3993
        %s4002 = scalar_lea.vmem %s17, 64
        %v4003 = vld [vmem:[%s4002] sm:$0xff]
        %v4004 = vld [vmem:[%s4002 + $0x8] sm:$0xff]
        %v4005 = vld [vmem:[%s4002 + $0x10] sm:$0xff]
        %v4006 = vld [vmem:[%s4002 + $0x18] sm:$0xff]
        %v4007 = vld [vmem:[%s4002 + $0x20] sm:$0xff]
        %v4008 = vld [vmem:[%s4002 + $0x28] sm:$0xff]
        %v4009 = vld [vmem:[%s4002 + $0x30] sm:$0xff]
        %v4010 = vld [vmem:[%s4002 + $0x38] sm:$0xff]
        %s4011 = scalar_lea.vmem %s18, 32
        %v4012 = vld [vmem:[%s4011] sm:$0xff]
        %v4013 = vld [vmem:[%s4011 + $0x8] sm:$0xff]
        %v4014 = vld [vmem:[%s4011 + $0x10] sm:$0xff]
        %v4015 = vld [vmem:[%s4011 + $0x18] sm:$0xff]
        %s4016 = scalar_lea.vmem %s19, 1
        %v4017 = vld [vmem:[%s4016] sm:$0x1]
        %v4020 = vrot.slane %v4000, 3
        %v4021 = vrot.slane %v4001, 3
        %v4024 = vrot.slane %v4000, 1
        %v4025 = vrot.slane %v4001, 1
        %v4028 = vrot.slane %v4000, 7
        %v4029 = vrot.slane %v4001, 7
        %v4032 = vrot.slane %v4000, 5
        %v4033 = vrot.slane %v4001, 5
        %v4036 = vsel %vm3418, %v4020, %v4024
        %v4037 = vsel %vm3418, %v4021, %v4025
        %v4038 = vsel %vm3421, %v4036, %v4028
        %v4039 = vsel %vm3421, %v4037, %v4029
        %v4040 = vsel %vm3424, %v4038, %v4032
        %v4041 = vsel %vm3424, %v4039, %v4033
        %4044 = vrot.lane.b32.xlu0 %v4040, 32
        %v4045 = vpop.permute.xlu0 %4044
        %4046 = vrot.lane.b32.xlu0 %v4041, 32
        %v4047 = vpop.permute.xlu0 %4046
        %v4050 = vsel %vm787, %v4000, %v4045
        %v4051 = vsel %vm787, %v4001, %v4047
        %v4053 = vperm.slane %v4017, 0
        %4057 = vst [vmem:[#allocation1] ss:$2 sm:$0xff] %v4050
        %s4058 = scalar_lea.vmem [#allocation1], 1
        %4059 = vst [vmem:[%s4058] ss:$2 sm:$0xff] %v4051
        %v4060 = vld.sshfl [vmem:[#allocation1] sm:$0xff pattern:$0x75316420]
        %v4061 = vsel %vm3446, %v4060, 0
        %4063 = vmatpush.msra.mxu0 0.0
        %4064 = vmatpush.msra.mxu0 0.0
        %4065 = vmatpush.msra.mxu0 0.0
        %4066 = vmatpush.msra.mxu0 0.0
        %4067 = vmatpush.msra.mxu0 0.0
        %4068 = vmatpush.msra.mxu0 0.0
        %4069 = vmatpush.msra.mxu0 0.0
        %4070 = vmatpush.msra.mxu0 0.0
        %4071 = vmatpush.msra.mxu0 %v4010
        %4072 = vmatpush.msra.mxu0 %v4009
        %4073 = vmatpush.msra.mxu0 %v4008
        %4074 = vmatpush.msra.mxu0 %v4007
        %4075 = vmatpush.msra.mxu0 %v4006
        %4076 = vmatpush.msra.mxu0 %v4005
        %4077 = vmatpush.msra.mxu0 %v4004
        %4078 = vmatpush.msra.mxu0 %v4003
        %4079 = vmatmul.f32.gmra.mxu0 %v4061
        %v4080 = vpop.f32.mrf.mxu0
        %v4081 = vadd.f32 %v4053, %v4080
        %4082 = vdwg.mxu0
        %v4084 = vrot.slane %v4081, 4
        %4086 = vmatpush.msra.mxu0 0.0
        %4087 = vmatpush.msra.mxu0 0.0
        %4088 = vmatpush.msra.mxu0 0.0
        %4089 = vmatpush.msra.mxu0 0.0
        %4090 = vmatpush.msra.mxu0 0.0
        %4091 = vmatpush.msra.mxu0 0.0
        %4092 = vmatpush.msra.mxu0 0.0
        %4093 = vmatpush.msra.mxu0 0.0
        %4094 = vmatpush.msra.mxu0 0.0
        %4095 = vmatpush.msra.mxu0 0.0
        %4096 = vmatpush.msra.mxu0 0.0
        %4097 = vmatpush.msra.mxu0 0.0
        %4098 = vmatpush.msra.mxu0 %v4015
        %4099 = vmatpush.msra.mxu0 %v4014
        %4100 = vmatpush.msra.mxu0 %v4013
        %4101 = vmatpush.msra.mxu0 %v4012
        %4102 = vmatmul.f32.gmra.mxu0 %v3473
        %v4103 = vpop.f32.mrf.mxu0
        %v4104 = vadd.f32 0.0, %v4103
        %4105 = vdwg.mxu0
        %v4107 = vrot.slane %v4104, 1
        %v4110 = vadd.f32 %v4081, %v4104
        %v4111 = vadd.f32 %v4084, %v4107
        %v4112 = vxor.u32 %v4110, 2147483648
        %v4113 = vxor.u32 %v4111, 2147483648
        %v4114 = vmul.f32 %v4112, 1.442695
        %v4115 = vpow.pop %v4114
        %v4116 = vmul.f32 %v4113, 1.442695
        %v4117 = vpow.pop %v4116
        %v4118 = vadd.f32 %v4115, 1.0
        %v4119 = vadd.f32 %v4117, 1.0
        %v4120 = vrcp.pop %v4118
        %v4121 = vmul.f32 %v4118, %v4120
        %v4122 = vsub.f32 1.0, %v4121
        %v4123 = vmul.f32 %v4120, %v4122
        %v4124 = vadd.f32 %v4120, %v4123
        %vm4125 = vweird.f32 %v4118
        %vm4126 = vweird.f32 %v4120
        %vm4127 = vmor %vm4125, %vm4126
        %v4128 = vsel %vm4127, %v4120, %v4124
        %v4129 = vand.u32 2147483647, %v4118
        %vm4130 = vcmp.eq.f32.partialorder %v4129, 8.507059e+37
        %v4131 = vand.u32 %v4118, 2147483648
        %v4132 = vor.u32 1.1754944e-38, %v4131
        %v4133 = vsel %vm4130, %v4132, %v4128
        %v4134 = vmul.f32 1.0, %v4133
        %v4135 = vrcp.pop %v4119
        %v4136 = vmul.f32 %v4119, %v4135
        %v4137 = vsub.f32 1.0, %v4136
        %v4138 = vmul.f32 %v4135, %v4137
        %v4139 = vadd.f32 %v4135, %v4138
        %vm4140 = vweird.f32 %v4119
        %vm4141 = vweird.f32 %v4135
        %vm4142 = vmor %vm4140, %vm4141
        %v4143 = vsel %vm4142, %v4135, %v4139
        %v4144 = vand.u32 2147483647, %v4119
        %vm4145 = vcmp.eq.f32.partialorder %v4144, 8.507059e+37
        %v4146 = vand.u32 %v4119, 2147483648
        %v4147 = vor.u32 1.1754944e-38, %v4146
        %v4148 = vsel %vm4145, %v4147, %v4143
        %v4149 = vmul.f32 1.0, %v4148
        %v4150 = vtanh.pop %v4110
        %v4151 = vtanh.pop %v4111
        %v4152 = vmul.f32 %v4134, 0.0
        %v4153 = vmul.f32 %v4149, 0.0
        %4156 = vrot.lane.b32.xlu0 %v4150, 64
        %v4157 = vpop.permute.xlu0 %4156
        %4158 = vrot.lane.b32.xlu0 %v4151, 64
        %v4159 = vpop.permute.xlu0 %4158
        %v4162 = vmul.f32 %v4134, %v4157
        %v4163 = vmul.f32 %v4149, %v4159
        %4166 = vrot.lane.b32.xlu0 %v4162, 32
        %v4167 = vpop.permute.xlu0 %4166
        %4168 = vrot.lane.b32.xlu0 %v4163, 32
        %v4169 = vpop.permute.xlu0 %4168
        %v4172 = vadd.f32 %v4152, %v4167
        %v4173 = vadd.f32 %v4153, %v4169
        %v4174 = vtanh.pop %v4172
        %v4175 = vtanh.pop %v4173
        %4178 = vrot.lane.b32.xlu0 %v4174, 64
        %v4179 = vpop.permute.xlu0 %4178
        %4180 = vrot.lane.b32.xlu0 %v4175, 64
        %v4181 = vpop.permute.xlu0 %4180
        %v4184 = vmul.f32 %v4134, %v4179
        %v4185 = vmul.f32 %v4149, %v4181
        %v4188 = vperm.slane %v4184, 0
        %v4189 = vperm.slane %v4185, 0
        %v4190 = vsel %vm3579, %v4189, %v4188
        %4191 = vrot.lane.b32.xlu0 %v4190, 32
        %v4192 = vpop.permute.xlu0 %4191
        %v4193 = vsel %vm787, %v4192, 0
        %4195 = vmatpush.msra.mxu0 0.0
        %4196 = vmatpush.msra.mxu0 0.0
        %4197 = vmatpush.msra.mxu0 0.0
        %4198 = vmatpush.msra.mxu0 0.0
        %4199 = vmatpush.msra.mxu0 0.0
        %4200 = vmatpush.msra.mxu0 0.0
        %4201 = vmatpush.msra.mxu0 0.0
        %4202 = vmatpush.msra.mxu0 0.0
        %4203 = vmatpush.msra.mxu0 0.0
        %4204 = vmatpush.msra.mxu0 0.0
        %4205 = vmatpush.msra.mxu0 0.0
        %4206 = vmatpush.msra.mxu0 0.0
        %4207 = vmatpush.msra.mxu0 %v4015
        %4208 = vmatpush.msra.mxu0 %v4014
        %4209 = vmatpush.msra.mxu0 %v4013
        %4210 = vmatpush.msra.mxu0 %v4012
        %4211 = vmatmul.f32.gmra.mxu0 %v4193
        %v4212 = vpop.f32.mrf.mxu0
        %v4213 = vadd.f32 0.0, %v4212
        %4214 = vdwg.mxu0
        %v4216 = vrot.slane %v4213, 7
        %v4219 = vadd.f32 %v4081, %v4216
        %v4220 = vadd.f32 %v4084, %v4213
        %v4221 = vxor.u32 %v4219, 2147483648
        %v4222 = vxor.u32 %v4220, 2147483648
        %v4223 = vmul.f32 %v4221, 1.442695
        %v4224 = vpow.pop %v4223
        %v4225 = vmul.f32 %v4222, 1.442695
        %v4226 = vpow.pop %v4225
        %v4227 = vadd.f32 %v4224, 1.0
        %v4228 = vadd.f32 %v4226, 1.0
        %v4229 = vrcp.pop %v4227
        %v4230 = vmul.f32 %v4227, %v4229
        %v4231 = vsub.f32 1.0, %v4230
        %v4232 = vmul.f32 %v4229, %v4231
        %v4233 = vadd.f32 %v4229, %v4232
        %vm4234 = vweird.f32 %v4227
        %vm4235 = vweird.f32 %v4229
        %vm4236 = vmor %vm4234, %vm4235
        %v4237 = vsel %vm4236, %v4229, %v4233
        %v4238 = vand.u32 2147483647, %v4227
        %vm4239 = vcmp.eq.f32.partialorder %v4238, 8.507059e+37
        %v4240 = vand.u32 %v4227, 2147483648
        %v4241 = vor.u32 1.1754944e-38, %v4240
        %v4242 = vsel %vm4239, %v4241, %v4237
        %v4243 = vmul.f32 1.0, %v4242
        %v4244 = vrcp.pop %v4228
        %v4245 = vmul.f32 %v4228, %v4244
        %v4246 = vsub.f32 1.0, %v4245
        %v4247 = vmul.f32 %v4244, %v4246
        %v4248 = vadd.f32 %v4244, %v4247
        %vm4249 = vweird.f32 %v4228
        %vm4250 = vweird.f32 %v4244
        %vm4251 = vmor %vm4249, %vm4250
        %v4252 = vsel %vm4251, %v4244, %v4248
        %v4253 = vand.u32 2147483647, %v4228
        %vm4254 = vcmp.eq.f32.partialorder %v4253, 8.507059e+37
        %v4255 = vand.u32 %v4228, 2147483648
        %v4256 = vor.u32 1.1754944e-38, %v4255
        %v4257 = vsel %vm4254, %v4256, %v4252
        %v4258 = vmul.f32 1.0, %v4257
        %v4259 = vtanh.pop %v4219
        %v4260 = vtanh.pop %v4220
        %v4263 = vrot.slane %v4172, 7
        %v4264 = vrot.slane %v4173, 7
        %v4267 = vmul.f32 %v4243, %v4263
        %v4268 = vmul.f32 %v4258, %v4264
        %4271 = vrot.lane.b32.xlu0 %v4259, 64
        %v4272 = vpop.permute.xlu0 %4271
        %4273 = vrot.lane.b32.xlu0 %v4260, 64
        %v4274 = vpop.permute.xlu0 %4273
        %v4277 = vmul.f32 %v4243, %v4272
        %v4278 = vmul.f32 %v4258, %v4274
        %4281 = vrot.lane.b32.xlu0 %v4277, 32
        %v4282 = vpop.permute.xlu0 %4281
        %4283 = vrot.lane.b32.xlu0 %v4278, 32
        %v4284 = vpop.permute.xlu0 %4283
        %v4287 = vadd.f32 %v4267, %v4282
        %v4288 = vadd.f32 %v4268, %v4284
        %v4289 = vtanh.pop %v4287
        %v4290 = vtanh.pop %v4288
        %4293 = vrot.lane.b32.xlu0 %v4289, 64
        %v4294 = vpop.permute.xlu0 %4293
        %4295 = vrot.lane.b32.xlu0 %v4290, 64
        %v4296 = vpop.permute.xlu0 %4295
        %v4299 = vmul.f32 %v4243, %v4294
        %v4300 = vmul.f32 %v4258, %v4296
        %v4303 = vperm.slane %v4299, 1
        %v4304 = vperm.slane %v4300, 1
        %v4305 = vsel %vm3579, %v4304, %v4303
        %4306 = vrot.lane.b32.xlu0 %v4305, 32
        %v4307 = vpop.permute.xlu0 %4306
        %v4308 = vsel %vm787, %v4307, 0
        %4310 = vmatpush.msra.mxu0 0.0
        %4311 = vmatpush.msra.mxu0 0.0
        %4312 = vmatpush.msra.mxu0 0.0
        %4313 = vmatpush.msra.mxu0 0.0
        %4314 = vmatpush.msra.mxu0 0.0
        %4315 = vmatpush.msra.mxu0 0.0
        %4316 = vmatpush.msra.mxu0 0.0
        %4317 = vmatpush.msra.mxu0 0.0
        %4318 = vmatpush.msra.mxu0 0.0
        %4319 = vmatpush.msra.mxu0 0.0
        %4320 = vmatpush.msra.mxu0 0.0
        %4321 = vmatpush.msra.mxu0 0.0
        %4322 = vmatpush.msra.mxu0 %v4015
        %4323 = vmatpush.msra.mxu0 %v4014
        %4324 = vmatpush.msra.mxu0 %v4013
        %4325 = vmatpush.msra.mxu0 %v4012
        %4326 = vmatmul.f32.gmra.mxu0 %v4308
        %v4327 = vpop.f32.mrf.mxu0
        %v4328 = vadd.f32 0.0, %v4327
        %4329 = vdwg.mxu0
        %v4331 = vrot.slane %v4328, 6
        %v4332 = vrot.slane %v4328, 7
        %v4335 = vadd.f32 %v4081, %v4331
        %v4336 = vadd.f32 %v4084, %v4332
        %v4337 = vxor.u32 %v4335, 2147483648
        %v4338 = vxor.u32 %v4336, 2147483648
        %v4339 = vmul.f32 %v4337, 1.442695
        %v4340 = vpow.pop %v4339
        %v4341 = vmul.f32 %v4338, 1.442695
        %v4342 = vpow.pop %v4341
        %v4343 = vadd.f32 %v4340, 1.0
        %v4344 = vadd.f32 %v4342, 1.0
        %v4345 = vrcp.pop %v4343
        %v4346 = vmul.f32 %v4343, %v4345
        %v4347 = vsub.f32 1.0, %v4346
        %v4348 = vmul.f32 %v4345, %v4347
        %v4349 = vadd.f32 %v4345, %v4348
        %vm4350 = vweird.f32 %v4343
        %vm4351 = vweird.f32 %v4345
        %vm4352 = vmor %vm4350, %vm4351
        %v4353 = vsel %vm4352, %v4345, %v4349
        %v4354 = vand.u32 2147483647, %v4343
        %vm4355 = vcmp.eq.f32.partialorder %v4354, 8.507059e+37
        %v4356 = vand.u32 %v4343, 2147483648
        %v4357 = vor.u32 1.1754944e-38, %v4356
        %v4358 = vsel %vm4355, %v4357, %v4353
        %v4359 = vmul.f32 1.0, %v4358
        %v4360 = vrcp.pop %v4344
        %v4361 = vmul.f32 %v4344, %v4360
        %v4362 = vsub.f32 1.0, %v4361
        %v4363 = vmul.f32 %v4360, %v4362
        %v4364 = vadd.f32 %v4360, %v4363
        %vm4365 = vweird.f32 %v4344
        %vm4366 = vweird.f32 %v4360
        %vm4367 = vmor %vm4365, %vm4366
        %v4368 = vsel %vm4367, %v4360, %v4364
        %v4369 = vand.u32 2147483647, %v4344
        %vm4370 = vcmp.eq.f32.partialorder %v4369, 8.507059e+37
        %v4371 = vand.u32 %v4344, 2147483648
        %v4372 = vor.u32 1.1754944e-38, %v4371
        %v4373 = vsel %vm4370, %v4372, %v4368
        %v4374 = vmul.f32 1.0, %v4373
        %v4375 = vtanh.pop %v4335
        %v4376 = vtanh.pop %v4336
        %v4379 = vrot.slane %v4287, 7
        %v4380 = vrot.slane %v4288, 7
        %v4383 = vmul.f32 %v4359, %v4379
        %v4384 = vmul.f32 %v4374, %v4380
        %4387 = vrot.lane.b32.xlu0 %v4375, 64
        %v4388 = vpop.permute.xlu0 %4387
        %4389 = vrot.lane.b32.xlu0 %v4376, 64
        %v4390 = vpop.permute.xlu0 %4389
        %v4393 = vmul.f32 %v4359, %v4388
        %v4394 = vmul.f32 %v4374, %v4390
        %4397 = vrot.lane.b32.xlu0 %v4393, 32
        %v4398 = vpop.permute.xlu0 %4397
        %4399 = vrot.lane.b32.xlu0 %v4394, 32
        %v4400 = vpop.permute.xlu0 %4399
        %v4403 = vadd.f32 %v4383, %v4398
        %v4404 = vadd.f32 %v4384, %v4400
        %v4405 = vtanh.pop %v4403
        %v4406 = vtanh.pop %v4404
        %4409 = vrot.lane.b32.xlu0 %v4405, 64
        %v4410 = vpop.permute.xlu0 %4409
        %4411 = vrot.lane.b32.xlu0 %v4406, 64
        %v4412 = vpop.permute.xlu0 %4411
        %v4415 = vmul.f32 %v4359, %v4410
        %v4416 = vmul.f32 %v4374, %v4412
        %v4419 = vperm.slane %v4415, 2
        %v4420 = vperm.slane %v4416, 2
        %v4421 = vsel %vm3579, %v4420, %v4419
        %4422 = vrot.lane.b32.xlu0 %v4421, 32
        %v4423 = vpop.permute.xlu0 %4422
        %v4424 = vsel %vm787, %v4423, 0
        %4426 = vmatpush.msra.mxu0 0.0
        %4427 = vmatpush.msra.mxu0 0.0
        %4428 = vmatpush.msra.mxu0 0.0
        %4429 = vmatpush.msra.mxu0 0.0
        %4430 = vmatpush.msra.mxu0 0.0
        %4431 = vmatpush.msra.mxu0 0.0
        %4432 = vmatpush.msra.mxu0 0.0
        %4433 = vmatpush.msra.mxu0 0.0
        %4434 = vmatpush.msra.mxu0 0.0
        %4435 = vmatpush.msra.mxu0 0.0
        %4436 = vmatpush.msra.mxu0 0.0
        %4437 = vmatpush.msra.mxu0 0.0
        %4438 = vmatpush.msra.mxu0 %v4015
        %4439 = vmatpush.msra.mxu0 %v4014
        %4440 = vmatpush.msra.mxu0 %v4013
        %4441 = vmatpush.msra.mxu0 %v4012
        %4442 = vmatmul.f32.gmra.mxu0 %v4424
        %v4443 = vpop.f32.mrf.mxu0
        %v4444 = vadd.f32 0.0, %v4443
        %4445 = vdwg.mxu0
        %v4447 = vrot.slane %v4444, 5
        %v4448 = vrot.slane %v4444, 6
        %v4451 = vadd.f32 %v4081, %v4447
        %v4452 = vadd.f32 %v4084, %v4448
        %v4453 = vxor.u32 %v4451, 2147483648
        %v4454 = vxor.u32 %v4452, 2147483648
        %v4455 = vmul.f32 %v4453, 1.442695
        %v4456 = vpow.pop %v4455
        %v4457 = vmul.f32 %v4454, 1.442695
        %v4458 = vpow.pop %v4457
        %v4459 = vadd.f32 %v4456, 1.0
        %v4460 = vadd.f32 %v4458, 1.0
        %v4461 = vrcp.pop %v4459
        %v4462 = vmul.f32 %v4459, %v4461
        %v4463 = vsub.f32 1.0, %v4462
        %v4464 = vmul.f32 %v4461, %v4463
        %v4465 = vadd.f32 %v4461, %v4464
        %vm4466 = vweird.f32 %v4459
        %vm4467 = vweird.f32 %v4461
        %vm4468 = vmor %vm4466, %vm4467
        %v4469 = vsel %vm4468, %v4461, %v4465
        %v4470 = vand.u32 2147483647, %v4459
        %vm4471 = vcmp.eq.f32.partialorder %v4470, 8.507059e+37
        %v4472 = vand.u32 %v4459, 2147483648
        %v4473 = vor.u32 1.1754944e-38, %v4472
        %v4474 = vsel %vm4471, %v4473, %v4469
        %v4475 = vmul.f32 1.0, %v4474
        %v4476 = vrcp.pop %v4460
        %v4477 = vmul.f32 %v4460, %v4476
        %v4478 = vsub.f32 1.0, %v4477
        %v4479 = vmul.f32 %v4476, %v4478
        %v4480 = vadd.f32 %v4476, %v4479
        %vm4481 = vweird.f32 %v4460
        %vm4482 = vweird.f32 %v4476
        %vm4483 = vmor %vm4481, %vm4482
        %v4484 = vsel %vm4483, %v4476, %v4480
        %v4485 = vand.u32 2147483647, %v4460
        %vm4486 = vcmp.eq.f32.partialorder %v4485, 8.507059e+37
        %v4487 = vand.u32 %v4460, 2147483648
        %v4488 = vor.u32 1.1754944e-38, %v4487
        %v4489 = vsel %vm4486, %v4488, %v4484
        %v4490 = vmul.f32 1.0, %v4489
        %v4491 = vtanh.pop %v4451
        %v4492 = vtanh.pop %v4452
        %v4495 = vrot.slane %v4403, 7
        %v4496 = vrot.slane %v4404, 7
        %v4499 = vmul.f32 %v4475, %v4495
        %v4500 = vmul.f32 %v4490, %v4496
        %4503 = vrot.lane.b32.xlu0 %v4491, 64
        %v4504 = vpop.permute.xlu0 %4503
        %4505 = vrot.lane.b32.xlu0 %v4492, 64
        %v4506 = vpop.permute.xlu0 %4505
        %v4509 = vmul.f32 %v4475, %v4504
        %v4510 = vmul.f32 %v4490, %v4506
        %4513 = vrot.lane.b32.xlu0 %v4509, 32
        %v4514 = vpop.permute.xlu0 %4513
        %4515 = vrot.lane.b32.xlu0 %v4510, 32
        %v4516 = vpop.permute.xlu0 %4515
        %v4519 = vadd.f32 %v4499, %v4514
        %v4520 = vadd.f32 %v4500, %v4516
        %v4521 = vtanh.pop %v4519
        %v4522 = vtanh.pop %v4520
        %4525 = vrot.lane.b32.xlu0 %v4521, 64
        %v4526 = vpop.permute.xlu0 %4525
        %4527 = vrot.lane.b32.xlu0 %v4522, 64
        %v4528 = vpop.permute.xlu0 %4527
        %v4531 = vmul.f32 %v4475, %v4526
        %v4532 = vmul.f32 %v4490, %v4528
        %v4536 = vperm.slane %v4531, 3
        %v4537 = vperm.slane %v4532, 3
        %v4538 = vsel %vm3579, %v4537, %v4536
        %4539 = vrot.lane.b32.xlu0 %v4538, 32
        %v4540 = vpop.permute.xlu0 %4539
        %v4542 = vsel %vm912, %v4192, %v4540
        %v4543 = vsel %vm3933, %v4304, %v4303
        %4544 = vrot.lane.b32.xlu0 %v4543, 32
        %v4545 = vpop.permute.xlu0 %4544
        %v4547 = vsel %vm3933, %v4420, %v4419
        %4548 = vrot.lane.b32.xlu0 %v4547, 32
        %v4549 = vpop.permute.xlu0 %4548
        %v4551 = vsel %vm912, %v4545, %v4549
        %v4552 = vsel %vm3943, %v4420, %v4419
        %4553 = vrot.lane.b32.xlu0 %v4552, 32
        %v4554 = vpop.permute.xlu0 %4553
        %v4556 = vsel %vm3943, %v4304, %v4303
        %4557 = vrot.lane.b32.xlu0 %v4556, 32
        %v4558 = vpop.permute.xlu0 %4557
        %v4560 = vsel %vm912, %v4554, %v4558
        %v4561 = vsel %vm3953, %v4537, %v4536
        %4562 = vrot.lane.b32.xlu0 %v4561, 32
        %v4563 = vpop.permute.xlu0 %4562
        %v4565 = vsel %vm3953, %v4189, %v4188
        %4566 = vrot.lane.b32.xlu0 %v4565, 32
        %v4567 = vpop.permute.xlu0 %4566
        %v4569 = vsel %vm912, %v4563, %v4567
        %v4571 = vrot.slane %v4542, 1
        %4574 = vst [vmem:[#allocation1] sm:$0xff] %v4551
        %s4575 = scalar_lea.vmem [#allocation1], 1
        %v4576 = vld [vmem:[%s4575] ss:$9 sm:$0xff]
        %s4577 = scalar_lea.vmem [#allocation1], 2
        %v4578 = vld [vmem:[%s4577] ss:$9 sm:$0xff]
        %4580 = vst [vmem:[#allocation1] sm:$0xff] %v4560
        %s4581 = scalar_lea.vmem [#allocation1], 2
        %v4582 = vld [vmem:[%s4581] ss:$9 sm:$0xff]
        %s4583 = scalar_lea.vmem [#allocation1], 3
        %v4584 = vld [vmem:[%s4583] ss:$9 sm:$0xff]
        %4586 = vst [vmem:[#allocation1] sm:$0xff] %v4569
        %s4587 = scalar_lea.vmem [#allocation1], 3
        %v4588 = vld [vmem:[%s4587] ss:$9 sm:$0xff]
        %s4589 = scalar_lea.vmem [#allocation1], 4
        %v4590 = vld [vmem:[%s4589] ss:$9 sm:$0xff]
        %v4591 = vperm.slane %v4576, 0
        %v4592 = vperm.slane %v4578, 0
        %v4595 = vperm.slane %v4582, 0
        %v4596 = vperm.slane %v4584, 0
        %v4599 = vperm.slane %v4588, 0
        %v4600 = vperm.slane %v4590, 0
        %v4603 = vsel %vm3418, %v4542, %v4591
        %v4604 = vsel %vm3418, %v4571, %v4592
        %v4605 = vsel %vm3421, %v4603, %v4595
        %v4606 = vsel %vm3421, %v4604, %v4596
        %v4607 = vsel %vm3424, %v4605, %v4599
        %v4608 = vsel %vm3424, %v4606, %v4600
        %vm4609 = vcmask 257024
        %4610 = vst.msk [vmem:[%s680] sm:$0xf] %vm4609, %v4607
        %4611 = vst.msk [vmem:[%s680 + $0x4] sm:$0xf] %vm4609, %v4608
        %4614 = vrot.lane.b32.xlu0 %v3926, 112
        %v4615 = vpop.permute.xlu0 %4614
        %4616 = vrot.lane.b32.xlu0 %v3927, 112
        %v4617 = vpop.permute.xlu0 %4616
        %4622 = vrot.lane.b32.xlu0 %v4536, 112
        %v4623 = vpop.permute.xlu0 %4622
        %4624 = vrot.lane.b32.xlu0 %v4537, 112
        %v4625 = vpop.permute.xlu0 %4624
        %v4628 = vsel %vm3418, %v3926, %v4615
        %v4629 = vsel %vm3418, %v3927, %v4617
        %v4630 = vsel %vm3421, %v4628, %v4536
        %v4631 = vsel %vm3421, %v4629, %v4537
        %v4632 = vsel %vm3424, %v4630, %v4623
        %v4633 = vsel %vm3424, %v4631, %v4625
        %4636 = vrot.lane.b32.xlu0 %v4632, 32
        %v4637 = vpop.permute.xlu0 %4636
        %4638 = vrot.lane.b32.xlu0 %v4633, 32
        %v4639 = vpop.permute.xlu0 %4638
        %vm4642 = vcmask 125952
        %4643 = vst.msk [vmem:[%s707] sm:$0xf] %vm4642, %v4637
        %4644 = vst.msk [vmem:[%s707 + $0x4] sm:$0xf] %vm4642, %v4639
        %v4647 = vperm.slane %v3909, 3
        %v4648 = vperm.slane %v3910, 3
        %4651 = vrot.lane.b32.xlu0 %v4647, 112
        %v4652 = vpop.permute.xlu0 %4651
        %4653 = vrot.lane.b32.xlu0 %v4648, 112
        %v4654 = vpop.permute.xlu0 %4653
        %v4659 = vperm.slane %v4519, 3
        %v4660 = vperm.slane %v4520, 3
        %4663 = vrot.lane.b32.xlu0 %v4659, 112
        %v4664 = vpop.permute.xlu0 %4663
        %4665 = vrot.lane.b32.xlu0 %v4660, 112
        %v4666 = vpop.permute.xlu0 %4665
        %v4669 = vsel %vm3418, %v4647, %v4652
        %v4670 = vsel %vm3418, %v4648, %v4654
        %v4671 = vsel %vm3421, %v4669, %v4659
        %v4672 = vsel %vm3421, %v4670, %v4660
        %v4673 = vsel %vm3424, %v4671, %v4664
        %v4674 = vsel %vm3424, %v4672, %v4666
        %4677 = vrot.lane.b32.xlu0 %v4673, 96
        %v4678 = vpop.permute.xlu0 %4677
        %4679 = vrot.lane.b32.xlu0 %v4674, 96
        %v4680 = vpop.permute.xlu0 %4679
        %4683 = vst.msk [vmem:[%s713] sm:$0xf] %vm4642, %v4678
        %4684 = vst.msk [vmem:[%s713 + $0x4] sm:$0xf] %vm4642, %v4680
        %s4685 = sand.u32 %s470, 1
        %s4686 = scalar_lea.sflag [#allocation3], %s4685
        %s4687 = sand.u32 %s470, 1
        %s4688 = smul.addr %s4687, 8
        %s4689 = scalar_lea.vmem [#allocation2], %s4688
        %s4690 = smul.u32 2, %s37
        %p4691 = scmp.lt.s32.totalorder %s4690, 3
        %s4692 = scalar_select %p4691, %s4690, 3
        %s4693 = smul.addr %s4692, 4
        %s4694 = scalar_lea.vmem %s21, %s4693
        %s4695 = smul.u32 2, %s37
        %p4696 = scmp.lt.s32.totalorder %s4695, 3
        %s4697 = scalar_select %p4696, %s4695, 3
        %s4698 = smul.addr %s4697, 4
        %s4699 = scalar_lea.vmem %s22, %s4698
        // Predicated region
        $region101: #{vit_encoder_forward.1} parent=99 // pred_check
          %p4700 = pneg %p480
        $region102: #{vit_encoder_forward.1} parent=99 // pred_check_branch
          %4702 = sbr.rel (%p4700) target = $region104
        $region103: #{vit_encoder_forward.1} parent=99 // pred_region
          %s4703 = smul.u32 2, %s37
          %4705 = vsyncadd %s4686, 0
          %s4706 = smul.addr %s4703, 4
          %s4707 = scalar_lea.hbm %s20, %s4706
          %s4708 = sshll.u32 %s4689, 4
          %s4709 = int_to_ptr.vmem [resolvable:$true] %s4708
          %s4710 = sshll.u32 %s4707, 4
          %s4711 = int_to_ptr.hbm [resolvable:$true] %s4710
          %4716 = dma.vmem_to_hbm [thread:$0]  %s4709, 128, %s4711, %s4686, 64, 64, 4
        $region104: #{vit_encoder_forward.1} parent=99 // pred_fallthru
          _
        // Predicated region
        $region105: #{vit_encoder_forward.1} parent=99 // pred_check
          %p4717 = pneg %p506
        $region106: #{vit_encoder_forward.1} parent=99 // pred_check_branch
          %4719 = sbr.rel (%p4717) target = $region108
        $region107: #{vit_encoder_forward.1} parent=99 // pred_region
          %s4720 = smul.u32 2, %s37
        $region108: #{vit_encoder_forward.1} parent=99 // pred_fallthru
          _
        // Predicated region
        $region109: #{vit_encoder_forward.1} parent=99 // pred_check
          %p4721 = pneg %p532
        $region110: #{vit_encoder_forward.1} parent=99 // pred_check_branch
          %4723 = sbr.rel (%p4721) target = $region112
        $region111: #{vit_encoder_forward.1} parent=99 // pred_region
          %s4724 = smul.u32 2, %s37
        $region112: #{vit_encoder_forward.1} parent=99 // pred_fallthru
          _
      $region100: #{vit_encoder_forward.1} parent=5 // pred_fallthru
        _
      %p4725 = scmp.le.s32.totalorder 2, %s32
      // Predicated region
      $region113: #{vit_encoder_forward.1} parent=5 // pred_check
        %p4726 = pneg %p4725
      $region114: #{vit_encoder_forward.1} parent=5 // pred_check_branch
        %4728 = sbr.rel (%p4726) target = $region116
      $region115: #{vit_encoder_forward.1} parent=5 // pred_region
        %s4729 = ssub.s32 %s32, 2
        // Predicated region
        $region117: #{vit_encoder_forward.1} parent=115 // pred_check
          %p4730 = pneg %p486
        $region118: #{vit_encoder_forward.1} parent=115 // pred_check_branch
          %4732 = sbr.rel (%p4730) target = $region120
        $region119: #{vit_encoder_forward.1} parent=115 // pred_region
          %s4733 = sand.u32 %s471, 1
          %s4734 = scalar_lea.sflag [#allocation3], %s4733
          %s4735 = sand.u32 %s471, 1
          %s4736 = smul.addr %s4735, 8
          %s4737 = scalar_lea.vmem [#allocation2], %s4736
          %4739 = dma.done %s4734, 128
        $region120: #{vit_encoder_forward.1} parent=115 // pred_fallthru
          _
        // Predicated region
        $region121: #{vit_encoder_forward.1} parent=115 // pred_check
          %p4740 = pneg %p512
        $region122: #{vit_encoder_forward.1} parent=115 // pred_check_branch
          %4742 = sbr.rel (%p4740) target = $region124
        $region123: #{vit_encoder_forward.1} parent=115 // pred_region
          %s4743 = smul.u32 2, %s38
          %p4744 = scmp.lt.s32.totalorder %s4743, 3
          %s4745 = scalar_select %p4744, %s4743, 3
          %s4746 = smul.addr %s4745, 4
          %s4747 = scalar_lea.vmem %s21, %s4746
        $region124: #{vit_encoder_forward.1} parent=115 // pred_fallthru
          _
        // Predicated region
        $region125: #{vit_encoder_forward.1} parent=115 // pred_check
          %p4748 = pneg %p538
        $region126: #{vit_encoder_forward.1} parent=115 // pred_check_branch
          %4750 = sbr.rel (%p4748) target = $region128
        $region127: #{vit_encoder_forward.1} parent=115 // pred_region
          %s4751 = smul.u32 2, %s38
          %p4752 = scmp.lt.s32.totalorder %s4751, 3
          %s4753 = scalar_select %p4752, %s4751, 3
          %s4754 = smul.addr %s4753, 4
          %s4755 = scalar_lea.vmem %s22, %s4754
        $region128: #{vit_encoder_forward.1} parent=115 // pred_fallthru
          _
      $region116: #{vit_encoder_forward.1} parent=5 // pred_fallthru
        _
    $region6: #{vit_encoder_forward.1} parent=1 // loop_footer
      %s36 = sadd.s32 1, %s32
    $region7: #{vit_encoder_forward.1} parent=1 // loop_footer_branch
      %31 = sbr.rel target = $region3
    $region8: #{vit_encoder_forward.1} parent=1 // loop_exit
      _
    %4756 = vsyncpa [#allocation3], 1
    %s4757 = scalar_lea.sflag [#allocation3], 1
    %4758 = vsyncpa %s4757, 1

</llo_original>
